<compile_context>
chip_gen: v7x
topology: tpu7x:2x2x1
jax: 0.10.0
libtpu: 0.0.40
codegen_flags: <defaults>
</compile_context>

<pallas_src>
import jax
import jax.numpy as jnp
from jax.experimental import pallas as pl
from jax.experimental.pallas import tpu as pltpu

LN_EPS = 1e-5
_VMEM_LIMIT = 48 * 1024 * 1024   # fits v5e/v6e (128 MiB phys) and v7x (64 MiB phys)


def _gelu_tanh(x):
    # TODO(synk): nn.GELU() default is the exact erf form; Mosaic has no erf
    # lowering, so the tanh approximation is used (deviation ~1e-3; the in-script
    # reference uses the same formula so the comparison is exact).
    c0 = 0.7978845608028654  # sqrt(2/pi)
    return 0.5 * x * (1.0 + jnp.tanh(c0 * (x + 0.044715 * x * x * x)))


def _pick_tile(n, target, align=8):
    """Largest multiple of `align` that divides n and is <= target.

    Falls back to n itself (a single full tile, always a legal block) if no
    aligned divisor exists, so the second-to-last block dim is either a
    multiple of 8 or equals the full array dim."""
    if n <= target:
        return n
    t = (target // align) * align
    while t >= align:
        if n % t == 0:
            return t
        t -= align
    return n


def _pick_div(n, target):
    """Largest divisor of n that is <= target (leading, untiled grid dim)."""
    t = max(1, min(n, target))
    while n % t:
        t -= 1
    return t


# --------------------- kernel 1: fused LayerNorm + qkv Linear ----------------
def _make_ln_qkv_kernel(compute_dtype):
    def kernel(x_ref, ln_ref, wq_ref, wkv_ref, bq_ref, bkv_ref, q_ref, kv_ref):
        x = x_ref[0].astype(jnp.float32)                      # (TN, C)
        mu = jnp.mean(x, axis=-1, keepdims=True)
        xc = x - mu
        var = jnp.mean(xc * xc, axis=-1, keepdims=True)
        xn = xc * jax.lax.rsqrt(var + LN_EPS)
        xn = xn * ln_ref[0:1] + ln_ref[1:2]                   # gamma / beta (packed)
        xn = xn.astype(compute_dtype)
        yq = jnp.dot(xn, wq_ref[...],
                     preferred_element_type=jnp.float32) + bq_ref[...]
        ykv = jnp.dot(xn, wkv_ref[...],
                      preferred_element_type=jnp.float32) + bkv_ref[...]
        q_ref[0] = yq.astype(q_ref.dtype)                     # lane-dense stores
        kv_ref[0] = ykv.astype(kv_ref.dtype)
    return kernel


def ln_qkv_pallas(x, gamma, beta, w, bias, *, compute_dtype=jnp.float32,
                  token_tile=512):
    b, n, c = x.shape
    tn = _pick_tile(n, token_tile)
    ln = jnp.concatenate([gamma.reshape(1, c), beta.reshape(1, c)], axis=0)
    wq = w[:, :c].astype(compute_dtype)
    wkv = w[:, c:].astype(compute_dtype)
    bias = bias.reshape(1, 3 * c)
    bq, bkv = bias[:, :c], bias[:, c:]
    grid = (n // tn, b)                 # token axis leading (v7x 2-TC with b==1)
    return pl.pallas_call(
        _make_ln_qkv_kernel(compute_dtype),
        out_shape=(jax.ShapeDtypeStruct((b, n, c), compute_dtype),
                   jax.ShapeDtypeStruct((b, n, 2 * c), compute_dtype)),
        grid_spec=pltpu.PrefetchScalarGridSpec(
            num_scalar_prefetch=0,
            grid=grid,
            in_specs=[
                pl.BlockSpec((1, tn, c), lambda j, i: (i, j, 0)),
                pl.BlockSpec((2, c), lambda j, i: (0, 0)),
                pl.BlockSpec((c, c), lambda j, i: (0, 0)),
                pl.BlockSpec((c, 2 * c), lambda j, i: (0, 0)),
                pl.BlockSpec((1, c), lambda j, i: (0, 0)),
                pl.BlockSpec((1, 2 * c), lambda j, i: (0, 0)),
            ],
            out_specs=[pl.BlockSpec((1, tn, c), lambda j, i: (i, j, 0)),
                       pl.BlockSpec((1, tn, 2 * c), lambda j, i: (i, j, 0))],
        ),
        compiler_params=pltpu.CompilerParams(
            dimension_semantics=("parallel", "parallel"),
            vmem_limit_bytes=_VMEM_LIMIT),
    )(x, ln, wq, wkv, bq, bkv)


# ------------- kernel 2: per-window MHA, heads batched in one dot_general ----
def _make_window_attn_kernel(wb, scale, approx_recip):
    def kernel(q_ref, kv_ref, bias_ref, o_ref):
        bias = bias_ref[...]                                  # (H, nq, nk_pad) f32
        for t in range(wb):                                   # windows per grid step
            q = q_ref[t]                                      # (H, nq, d)
            k = kv_ref[0, t]                                  # (H, nk_pad, d)
            v = kv_ref[1, t]                                  # (H, nk_pad, d)
            # one batched contraction over all heads (no per-head lane slicing)
            s = jax.lax.dot_general(
                q, k, (((2,), (2,)), ((0,), (0,))),
                preferred_element_type=jnp.float32)           # (H, nq, nk_pad)
            s = s * scale + bias
            s = s - jnp.max(s, axis=-1, keepdims=True)
            p = jnp.exp(s)
            denom = jnp.sum(p, axis=-1, keepdims=True)
            p = p * pl.reciprocal(denom, approx=approx_recip)  # EUP, not VPU divide
            o = jax.lax.dot_general(
                p.astype(v.dtype), v, (((2,), (1,)), ((0,), (0,))),
                preferred_element_type=jnp.float32)           # (H, nq, d)
            o_ref[t] = o.astype(o_ref.dtype)                  # store per window
    return kernel


def window_attn_pallas(q, kv, bias, scale, *, windows_per_block=2,
                       approx_recip=True):
    bw, num_heads, nq, d = q.shape
    nk = kv.shape[3]
    wb = _pick_div(bw, windows_per_block)
    grid = (bw // wb,)
    return pl.pallas_call(
        _make_window_attn_kernel(wb, scale, approx_recip),
        out_shape=jax.ShapeDtypeStruct((bw, num_heads, nq, d), q.dtype),
        grid_spec=pltpu.PrefetchScalarGridSpec(
            num_scalar_prefetch=0,
            grid=grid,
            in_specs=[
                pl.BlockSpec((wb, num_heads, nq, d), lambda i: (i, 0, 0, 0)),
                pl.BlockSpec((2, wb, num_heads, nk, d),
                             lambda i: (0, i, 0, 0, 0)),
                pl.BlockSpec((num_heads, nq, nk), lambda i: (0, 0, 0)),
            ],
            out_specs=pl.BlockSpec((wb, num_heads, nq, d),
                                   lambda i: (i, 0, 0, 0)),
        ),
        compiler_params=pltpu.CompilerParams(
            dimension_semantics=("parallel",),
            vmem_limit_bytes=_VMEM_LIMIT),
    )(q, kv, bias)


# ------- kernel 3: fused proj + residual + LayerNorm + MLP(GELU) + residual --
def _make_proj_mlp_kernel(compute_dtype):
    def kernel(y_ref, s_ref, pw_ref, vec_ref, w1_ref, b1_ref, w2_ref, o_ref):
        # vec_ref rows: 0=proj_b, 1=norm2_gamma, 2=norm2_beta, 3=fc2_b
        y = y_ref[0].astype(compute_dtype)                    # (TN, C)
        sc = s_ref[0].astype(jnp.float32)                     # residual shortcut
        x1 = jnp.dot(y, pw_ref[...], preferred_element_type=jnp.float32)
        x1 = x1 + vec_ref[0:1] + sc                           # proj + residual (f32)
        mu = jnp.mean(x1, axis=-1, keepdims=True)
        xc = x1 - mu
        var = jnp.mean(xc * xc, axis=-1, keepdims=True)
        xn = xc * jax.lax.rsqrt(var + LN_EPS) * vec_ref[1:2] + vec_ref[2:3]
        h1 = jnp.dot(xn.astype(compute_dtype), w1_ref[...],
                     preferred_element_type=jnp.float32)
        h1 = _gelu_tanh(h1 + b1_ref[...])
        h2 = jnp.dot(h1.astype(compute_dtype), w2_ref[...],
                     preferred_element_type=jnp.float32)
        h2 = h2 + vec_ref[3:4]
        o_ref[0] = (x1 + h2).astype(o_ref.dtype)
    return kernel


def proj_mlp_pallas(y, shortcut, pw, pb, g2, b2, w1, b1, w2, b2o, *,
                    compute_dtype=jnp.float32, token_tile=512):
    b, n, c = shortcut.shape
    hid = w1.shape[1]
    tn = _pick_tile(n, token_tile)
    vec = jnp.concatenate([pb.reshape(1, c), g2.reshape(1, c),
                           b2.reshape(1, c), b2o.reshape(1, c)], axis=0)
    grid = (n // tn, b)
    return pl.pallas_call(
        _make_proj_mlp_kernel(compute_dtype),
        out_shape=jax.ShapeDtypeStruct((b, n, c), shortcut.dtype),
        grid_spec=pltpu.PrefetchScalarGridSpec(
            num_scalar_prefetch=0,
            grid=grid,
            in_specs=[
                pl.BlockSpec((1, tn, c), lambda j, i: (i, j, 0)),
                pl.BlockSpec((1, tn, c), lambda j, i: (i, j, 0)),
                pl.BlockSpec((c, c), lambda j, i: (0, 0)),
                pl.BlockSpec((4, c), lambda j, i: (0, 0)),
                pl.BlockSpec((c, hid), lambda j, i: (0, 0)),
                pl.BlockSpec((1, hid), lambda j, i: (0, 0)),
                pl.BlockSpec((hid, c), lambda j, i: (0, 0)),
            ],
            out_specs=pl.BlockSpec((1, tn, c), lambda j, i: (i, j, 0)),
        ),
        compiler_params=pltpu.CompilerParams(
            dimension_semantics=("parallel", "parallel"),
            vmem_limit_bytes=_VMEM_LIMIT),
    )(y, shortcut, pw.astype(compute_dtype), vec,
      w1.astype(compute_dtype), b1.reshape(1, hid), w2.astype(compute_dtype))


# ----------------------------- OCAB forward ----------------------------------
def ocab_forward(x, x_size, rpi, params, window_size, overlap_win_size,
                 num_heads, *, compute_dtype=jnp.float32, approx_recip=True):
    h, w = x_size
    b, n, c = x.shape
    ws, ows = window_size, overlap_win_size
    assert n == h * w and h % ws == 0 and w % ws == 0
    d = c // num_heads
    scale = d ** -0.5
    pad = (ows - ws) // 2
    nwh, nww = h // ws, w // ws
    nw = nwh * nww
    nq = ws * ws
    nk = ows * ows
    nk_pad = ((nk + 127) // 128) * 128        # lane-align the key axis

    # --- kernel 1: fused LayerNorm + qkv projection (q / kv as two outputs) ---
    q, kv = ln_qkv_pallas(x, params["norm1_g"], params["norm1_b"],
                          params["qkv_w"], params["qkv_b"],
                          compute_dtype=compute_dtype)

    # non-overlapping q windows; head split folded into the same transpose
    q6 = q.reshape(b, nwh, ws, nww, ws, num_heads, d)
    q_win = q6.transpose(0, 1, 3, 5, 2, 4, 6).reshape(b * nw, num_heads, nq, d)

    # overlapping k/v windows == nn.Unfold(ows, stride=ws, padding=pad),
    # with the head split folded into the same gather/transpose and the key
    # axis zero-padded to nk_pad lanes.
    kv6 = kv.reshape(b, h, w, 2, num_heads, d)
    kvp = jnp.pad(kv6, ((0, 0), (pad, pad), (pad, pad), (0, 0), (0, 0), (0, 0)))
    rows = (jnp.arange(nwh) * ws)[:, None] + jnp.arange(ows)[None, :]
    cols = (jnp.arange(nww) * ws)[:, None] + jnp.arange(ows)[None, :]
    g = kvp[:, rows][:, :, :, cols]           # (b, nwh, ows, nww, ows, 2, H, d)
    kvw = g.transpose(5, 0, 1, 3, 6, 2, 4, 7).reshape(2, b * nw, num_heads, nk, d)
    kvw = jnp.pad(kvw, ((0, 0), (0, 0), (0, 0), (0, nk_pad - nk), (0, 0)))

    # relative position bias (heads, nq, nk_pad); padded keys get -1e30
    bias = params["rpb_table"][rpi.reshape(-1)]
    bias = bias.reshape(nq, nk, num_heads).transpose(2, 0, 1).astype(jnp.float32)
    bias = jnp.pad(bias, ((0, 0), (0, 0), (0, nk_pad - nk)),
                   constant_values=-1e30)

    # --- kernel 2: per-window multi-head attention -----------------------------
    attn = window_attn_pallas(q_win, kvw, bias, scale,
                              approx_recip=approx_recip)      # (b*nw, H, nq, d)

    # window_reverse + head merge folded into one transpose
    y = attn.reshape(b, nwh, nww, num_heads, ws, ws, d)
    y = y.transpose(0, 1, 4, 2, 5, 3, 6).reshape(b, n, c)

    # --- kernel 3: fused proj + residual + LayerNorm + MLP + residual ---------
    out = proj_mlp_pallas(y, x, params["proj_w"], params["proj_b"],
                          params["norm2_g"], params["norm2_b"],
                          params["fc1_w"], params["fc1_b"],
                          params["fc2_w"], params["fc2_b"],
                          compute_dtype=compute_dtype)
    return out


# --------------------------- reference (plain JAX) ---------------------------
def _layer_norm_ref(x, g, b):
    mu = jnp.mean(x, axis=-1, keepdims=True)
    var = jnp.mean((x - mu) ** 2, axis=-1, keepdims=True)
    return (x - mu) * jax.lax.rsqrt(var + LN_EPS) * g + b


def _unfold_ref(x_nchw, ksize, stride, pad):
    """torch.nn.Unfold semantics: (b, C, H, W) -> (b, C*k*k, n_windows)."""
    b, ch, hh, ww = x_nchw.shape
    xp = jnp.pad(x_nchw, ((0, 0), (0, 0), (pad, pad), (pad, pad)))
    cols = []
    for i in range(0, hh + 2 * pad - ksize + 1, stride):
        for j in range(0, ww + 2 * pad - ksize + 1, stride):
            patch = xp[:, :, i:i + ksize, j:j + ksize]   # (b, C, k, k)
            cols.append(patch.reshape(b, ch * ksize * ksize))
    return jnp.stack(cols, axis=-1)


def ocab_ref(x, x_size, rpi, params, window_size, overlap_win_size, num_heads):
    h, w = x_size
    b, n, c = x.shape
    ws, ows = window_size, overlap_win_size
    d = c // num_heads
    scale = d ** -0.5
    pad = (ows - ws) // 2

    shortcut = x
    xn = _layer_norm_ref(x, params["norm1_g"], params["norm1_b"])
    xn = xn.reshape(b, h, w, c)
    qkv = xn @ params["qkv_w"] + params["qkv_b"]                    # (b,h,w,3c)
    qkv = qkv.reshape(b, h, w, 3, c).transpose(3, 0, 4, 1, 2)       # (3,b,c,h,w)
    q = jnp.transpose(qkv[0], (0, 2, 3, 1))                         # (b,h,w,c)
    kv = jnp.concatenate((qkv[1], qkv[2]), axis=1)                  # (b,2c,h,w)

    qw = q.reshape(b, h // ws, ws, w // ws, ws, c).transpose(0, 1, 3, 2, 4, 5)
    qw = qw.reshape(-1, ws * ws, c)

    kvu = _unfold_ref(kv, ows, ws, pad)                             # (b, 2c*ows*ows, nw)
    nw = kvu.shape[-1]
    kvu = kvu.reshape(b, 2, c, ows, ows, nw)
    kvu = jnp.transpose(kvu, (1, 0, 5, 3, 4, 2)).reshape(2, b * nw, ows * ows, c)
    kw_, vw_ = kvu[0], kvu[1]

    b_, nq, _ = qw.shape
    nk = kw_.shape[1]
    qh = qw.reshape(b_, nq, num_heads, d).transpose(0, 2, 1, 3) * scale
    kh = kw_.reshape(b_, nk, num_heads, d).transpose(0, 2, 1, 3)
    vh = vw_.reshape(b_, nk, num_heads, d).transpose(0, 2, 1, 3)
    attn = jnp.einsum("bhqd,bhkd->bhqk", qh, kh)
    bias = params["rpb_table"][rpi.reshape(-1)]
    bias = bias.reshape(ws * ws, ows * ows, num_heads).transpose(2, 0, 1)
    attn = jax.nn.softmax(attn + bias[None], axis=-1)
    out = jnp.einsum("bhqk,bhkd->bhqd", attn, vh)
    out = jnp.transpose(out, (0, 2, 1, 3)).reshape(b_, nq, c)

    out = out.reshape(b, h // ws, w // ws, ws, ws, c).transpose(0, 1, 3, 2, 4, 5)
    out = out.reshape(b, h * w, c)

    out = out @ params["proj_w"] + params["proj_b"] + shortcut
    x2 = _layer_norm_ref(out, params["norm2_g"], params["norm2_b"])
    m = _gelu_tanh(x2 @ params["fc1_w"] + params["fc1_b"])
    m = m @ params["fc2_w"] + params["fc2_b"]
    return out + m


def calc_rpi_oca(ws, ows):
    """Deterministic relative position index; values in [0, (ws+ows-1)^2)."""
    co = jnp.stack(jnp.meshgrid(jnp.arange(ws), jnp.arange(ws),
                                indexing="ij")).reshape(2, -1)      # (2, ws*ws)
    ce = jnp.stack(jnp.meshgrid(jnp.arange(ows), jnp.arange(ows),
                                indexing="ij")).reshape(2, -1)      # (2, ows*ows)
    rel = co[:, :, None] - ce[:, None, :] + (ows - 1)               # (2, ws*ws, ows*ows)
    return (rel[0] * (ws + ows - 1) + rel[1]).astype(jnp.int32)


if __name__ == "__main__":
    b = 2
    c = 16                 # dim
    num_heads = 2
    h = w = 8              # input resolution
    ws = 4                 # window_size
    overlap_ratio = 0.5
    ows = int(ws * overlap_ratio) + ws      # overlap_win_size = 6
    mlp_ratio = 2
    hidden = c * mlp_ratio
    n = h * w

    key = jax.random.PRNGKey(0)
    ks = jax.random.split(key, 15)
    x = jax.random.normal(ks[0], (b, n, c), jnp.float32)
    params = {
        "norm1_g": 1.0 + 0.1 * jax.random.normal(ks[1], (1, c), jnp.float32),
        "norm1_b": 0.1 * jax.random.normal(ks[2], (1, c), jnp.float32),
        "qkv_w": jax.random.normal(ks[3], (c, 3 * c), jnp.float32) / jnp.sqrt(c * 1.0),
        "qkv_b": 0.1 * jax.random.normal(ks[4], (1, 3 * c), jnp.float32),
        "rpb_table": 0.02 * jax.random.normal(
            ks[5], ((ws + ows - 1) ** 2, num_heads), jnp.float32),
        "proj_w": jax.random.normal(ks[6], (c, c), jnp.float32) / jnp.sqrt(c * 1.0),
        "proj_b": 0.1 * jax.random.normal(ks[7], (1, c), jnp.float32),
        "norm2_g": 1.0 + 0.1 * jax.random.normal(ks[8], (1, c), jnp.float32),
        "norm2_b": 0.1 * jax.random.normal(ks[9], (1, c), jnp.float32),
        "fc1_w": jax.random.normal(ks[10], (c, hidden), jnp.float32) / jnp.sqrt(c * 1.0),
        "fc1_b": 0.1 * jax.random.normal(ks[11], (1, hidden), jnp.float32),
        "fc2_w": jax.random.normal(ks[12], (hidden, c), jnp.float32) / jnp.sqrt(hidden * 1.0),
        "fc2_b": 0.1 * jax.random.normal(ks[13], (1, c), jnp.float32),
    }
    rpi = calc_rpi_oca(ws, ows)

    ref = ocab_ref(x, (h, w), rpi, params, ws, ows, num_heads)

    # Strict-math path (f32 matmul operands, exact reciprocal) -> tight check.
    fwd_exact = jax.jit(lambda xx, rr, pp: ocab_forward(
        xx, (h, w), rr, pp, ws, ows, num_heads,
        compute_dtype=jnp.float32, approx_recip=False))
    out = fwd_exact(x, rpi, params)
    jax.block_until_ready(out)
    assert out.shape == (b, n, c)
    err = float(jnp.max(jnp.abs(out - ref)))
    assert jnp.allclose(out, ref, atol=1e-4, rtol=1e-4), f"f32 max abs err {err}"

    # Performance path (bf16 MXU operands + f32 accumulate, EUP approx
    # reciprocal; LN stats / softmax / residuals stay f32) -> loose check.
    fwd_fast = jax.jit(lambda xx, rr, pp: ocab_forward(
        xx, (h, w), rr, pp, ws, ows, num_heads,
        compute_dtype=jnp.bfloat16, approx_recip=True))
    out_fast = fwd_fast(x, rpi, params)
    jax.block_until_ready(out_fast)
    err_fast = float(jnp.max(jnp.abs(out_fast - ref)))
    assert jnp.allclose(out_fast, ref, atol=1.5e-1, rtol=1.5e-1), \
        f"bf16 max abs err {err_fast}"

    print("KERNEL_OK")
</pallas_src>

<mosaic_0001>
module attributes {stable_mosaic.version = 11 : i64} {
  func.func @kernel(%arg0: i32, %arg1: i32, %arg2: memref<1x64x16xf32, #tpu.memory_space<vmem>>, %arg3: memref<2x16xf32, #tpu.memory_space<vmem>>, %arg4: memref<16x16xf32, #tpu.memory_space<vmem>>, %arg5: memref<16x32xf32, #tpu.memory_space<vmem>>, %arg6: memref<1x16xf32, #tpu.memory_space<vmem>>, %arg7: memref<1x32xf32, #tpu.memory_space<vmem>>, %arg8: memref<1x64x16xf32, #tpu.memory_space<vmem>>, %arg9: memref<1x64x32xf32, #tpu.memory_space<vmem>>) attributes {dimension_semantics = [#tpu.dimension_semantics<parallel>, #tpu.dimension_semantics<parallel>], iteration_bounds = array<i64: 1, 2>, scalar_prefetch = 0 : i64, scratch_operands = 0 : i64, tpu.core_type = #tpu.core_type<tc>, window_params = [{transform_indices = @transform_0, window_bounds = array<i64: 1, 64, 16>}, {pipeline_mode = #tpu.pipeline_mode<synchronous>, transform_indices = @transform_1, window_bounds = array<i64: 2, 16>}, {pipeline_mode = #tpu.pipeline_mode<synchronous>, transform_indices = @transform_2, window_bounds = array<i64: 16, 16>}, {pipeline_mode = #tpu.pipeline_mode<synchronous>, transform_indices = @transform_3, window_bounds = array<i64: 16, 32>}, {pipeline_mode = #tpu.pipeline_mode<synchronous>, transform_indices = @transform_4, window_bounds = array<i64: 1, 16>}, {pipeline_mode = #tpu.pipeline_mode<synchronous>, transform_indices = @transform_5, window_bounds = array<i64: 1, 32>}, {transform_indices = @transform_6, window_bounds = array<i64: 1, 64, 16>}, {transform_indices = @transform_7, window_bounds = array<i64: 1, 64, 32>}]} {
    %c0 = arith.constant 0 : index
    %c0_0 = arith.constant 0 : index
    %c0_1 = arith.constant 0 : index
    %0 = vector.load %arg2[%c0, %c0_0, %c0_1] : memref<1x64x16xf32, #tpu.memory_space<vmem>>, vector<1x64x16xf32>
    %1 = vector.shape_cast %0 : vector<1x64x16xf32> to vector<64x16xf32>
    %cst = arith.constant dense<0.000000e+00> : vector<64xf32>
    %2 = vector.multi_reduction <add>, %1, %cst [1] : vector<64x16xf32> to vector<64xf32>
    %3 = vector.shape_cast %2 : vector<64xf32> to vector<64x1xf32>
    %cst_2 = arith.constant 1.600000e+01 : f32
    %4 = vector.broadcast %cst_2 : f32 to vector<64x1xf32>
    %5 = arith.divf %3, %4 : vector<64x1xf32>
    %6 = vector.broadcast %5 : vector<64x1xf32> to vector<64x16xf32>
    %7 = arith.subf %1, %6 : vector<64x16xf32>
    %8 = arith.mulf %7, %7 : vector<64x16xf32>
    %cst_3 = arith.constant dense<0.000000e+00> : vector<64xf32>
    %9 = vector.multi_reduction <add>, %8, %cst_3 [1] : vector<64x16xf32> to vector<64xf32>
    %10 = vector.shape_cast %9 : vector<64xf32> to vector<64x1xf32>
    %cst_4 = arith.constant 1.600000e+01 : f32
    %11 = vector.broadcast %cst_4 : f32 to vector<64x1xf32>
    %12 = arith.divf %10, %11 : vector<64x1xf32>
    %cst_5 = arith.constant 9.99999974E-6 : f32
    %13 = vector.broadcast %cst_5 : f32 to vector<64x1xf32>
    %14 = arith.addf %12, %13 : vector<64x1xf32>
    %15 = math.rsqrt %14 : vector<64x1xf32>
    %16 = vector.broadcast %15 : vector<64x1xf32> to vector<64x16xf32>
    %17 = arith.mulf %7, %16 : vector<64x16xf32>
    %c0_6 = arith.constant 0 : index
    %c0_7 = arith.constant 0 : index
    %18 = vector.load %arg3[%c0_6, %c0_7] : memref<2x16xf32, #tpu.memory_space<vmem>>, vector<1x16xf32>
    %19 = vector.broadcast %18 : vector<1x16xf32> to vector<64x16xf32>
    %20 = arith.mulf %17, %19 : vector<64x16xf32>
    %c1 = arith.constant 1 : index
    %c0_8 = arith.constant 0 : index
    %21 = vector.load %arg3[%c1, %c0_8] : memref<2x16xf32, #tpu.memory_space<vmem>>, vector<1x16xf32>
    %22 = vector.broadcast %21 : vector<1x16xf32> to vector<64x16xf32>
    %23 = arith.addf %20, %22 : vector<64x16xf32>
    %c0_9 = arith.constant 0 : index
    %c0_10 = arith.constant 0 : index
    %24 = vector.load %arg4[%c0_9, %c0_10] : memref<16x16xf32, #tpu.memory_space<vmem>>, vector<16x16xf32>
    %cst_11 = arith.constant dense<0.000000e+00> : vector<64x16xf32>
    %25 = tpu.matmul %23, %24, %cst_11 {dimension_numbers = #tpu.dot_dimension_numbers<[1], [0], [0], [1], [0, 0, 1, 1], [], []>} : vector<64x16xf32>, vector<16x16xf32>, vector<64x16xf32> -> vector<64x16xf32>
    %c0_12 = arith.constant 0 : index
    %c0_13 = arith.constant 0 : index
    %26 = vector.load %arg6[%c0_12, %c0_13] : memref<1x16xf32, #tpu.memory_space<vmem>>, vector<1x16xf32>
    %27 = vector.broadcast %26 : vector<1x16xf32> to vector<64x16xf32>
    %28 = arith.addf %25, %27 : vector<64x16xf32>
    %c0_14 = arith.constant 0 : index
    %c0_15 = arith.constant 0 : index
    %29 = vector.load %arg5[%c0_14, %c0_15] : memref<16x32xf32, #tpu.memory_space<vmem>>, vector<16x32xf32>
    %cst_16 = arith.constant dense<0.000000e+00> : vector<64x32xf32>
    %30 = tpu.matmul %23, %29, %cst_16 {dimension_numbers = #tpu.dot_dimension_numbers<[1], [0], [0], [1], [0, 0, 1, 1], [], []>} : vector<64x16xf32>, vector<16x32xf32>, vector<64x32xf32> -> vector<64x32xf32>
    %c0_17 = arith.constant 0 : index
    %c0_18 = arith.constant 0 : index
    %31 = vector.load %arg7[%c0_17, %c0_18] : memref<1x32xf32, #tpu.memory_space<vmem>>, vector<1x32xf32>
    %32 = vector.broadcast %31 : vector<1x32xf32> to vector<64x32xf32>
    %33 = arith.addf %30, %32 : vector<64x32xf32>
    %c0_19 = arith.constant 0 : index
    %c0_20 = arith.constant 0 : index
    %c0_21 = arith.constant 0 : index
    %34 = vector.load %arg8[%c0_19, %c0_20, %c0_21] : memref<1x64x16xf32, #tpu.memory_space<vmem>>, vector<1x64x16xf32>
    %35 = vector.shape_cast %34 : vector<1x64x16xf32> to vector<64x16xf32>
    %36 = vector.shape_cast %28 : vector<64x16xf32> to vector<1x64x16xf32>
    tpu.vector_store %arg8[%c0_19, %c0_20, %c0_21], %36 {strides = array<i32>} : memref<1x64x16xf32, #tpu.memory_space<vmem>>, vector<1x64x16xf32>,
    %c0_22 = arith.constant 0 : index
    %c0_23 = arith.constant 0 : index
    %c0_24 = arith.constant 0 : index
    %37 = vector.load %arg9[%c0_22, %c0_23, %c0_24] : memref<1x64x32xf32, #tpu.memory_space<vmem>>, vector<1x64x32xf32>
    %38 = vector.shape_cast %37 : vector<1x64x32xf32> to vector<64x32xf32>
    %39 = vector.shape_cast %33 : vector<64x32xf32> to vector<1x64x32xf32>
    tpu.vector_store %arg9[%c0_22, %c0_23, %c0_24], %39 {strides = array<i32>} : memref<1x64x32xf32, #tpu.memory_space<vmem>>, vector<1x64x32xf32>,
    return
  }
  func.func @transform_0(%arg0: i32, %arg1: i32) -> (i32, i32, i32) {
    %c0_i32 = arith.constant 0 : i32
    %c0_i32_0 = arith.constant 0 : i32
    return %arg1, %arg0, %c0_i32 : i32, i32, i32
  }
  func.func @transform_1(%arg0: i32, %arg1: i32) -> (i32, i32) {
    %c0_i32 = arith.constant 0 : i32
    %c0_i32_0 = arith.constant 0 : i32
    %c0_i32_1 = arith.constant 0 : i32
    return %c0_i32, %c0_i32_0 : i32, i32
  }
  func.func @transform_2(%arg0: i32, %arg1: i32) -> (i32, i32) {
    %c0_i32 = arith.constant 0 : i32
    %c0_i32_0 = arith.constant 0 : i32
    %c0_i32_1 = arith.constant 0 : i32
    return %c0_i32, %c0_i32_0 : i32, i32
  }
  func.func @transform_3(%arg0: i32, %arg1: i32) -> (i32, i32) {
    %c0_i32 = arith.constant 0 : i32
    %c0_i32_0 = arith.constant 0 : i32
    %c0_i32_1 = arith.constant 0 : i32
    return %c0_i32, %c0_i32_0 : i32, i32
  }
  func.func @transform_4(%arg0: i32, %arg1: i32) -> (i32, i32) {
    %c0_i32 = arith.constant 0 : i32
    %c0_i32_0 = arith.constant 0 : i32
    %c0_i32_1 = arith.constant 0 : i32
    return %c0_i32, %c0_i32_0 : i32, i32
  }
  func.func @transform_5(%arg0: i32, %arg1: i32) -> (i32, i32) {
    %c0_i32 = arith.constant 0 : i32
    %c0_i32_0 = arith.constant 0 : i32
    %c0_i32_1 = arith.constant 0 : i32
    return %c0_i32, %c0_i32_0 : i32, i32
  }
  func.func @transform_6(%arg0: i32, %arg1: i32) -> (i32, i32, i32) {
    %c0_i32 = arith.constant 0 : i32
    %c0_i32_0 = arith.constant 0 : i32
    return %arg1, %arg0, %c0_i32 : i32, i32, i32
  }
  func.func @transform_7(%arg0: i32, %arg1: i32) -> (i32, i32, i32) {
    %c0_i32 = arith.constant 0 : i32
    %c0_i32_0 = arith.constant 0 : i32
    return %arg1, %arg0, %c0_i32 : i32, i32, i32
  }
}

module attributes {stable_mosaic.version = 11 : i64} {
  func.func @kernel(%arg0: i32, %arg1: memref<2x2x16x8xf32, #tpu.memory_space<vmem>>, %arg2: memref<2x2x2x128x8xf32, #tpu.memory_space<vmem>>, %arg3: memref<2x16x128xf32, #tpu.memory_space<vmem>>, %arg4: memref<2x2x16x8xf32, #tpu.memory_space<vmem>>) attributes {dimension_semantics = [#tpu.dimension_semantics<parallel>], iteration_bounds = array<i64: 4>, scalar_prefetch = 0 : i64, scratch_operands = 0 : i64, tpu.core_type = #tpu.core_type<tc>, window_params = [{transform_indices = @transform_0, window_bounds = array<i64: 2, 2, 16, 8>}, {transform_indices = @transform_1, window_bounds = array<i64: 2, 2, 2, 128, 8>}, {pipeline_mode = #tpu.pipeline_mode<synchronous>, transform_indices = @transform_2, window_bounds = array<i64: 2, 16, 128>}, {transform_indices = @transform_3, window_bounds = array<i64: 2, 2, 16, 8>}]} {
    %c0 = arith.constant 0 : index
    %c0_0 = arith.constant 0 : index
    %c0_1 = arith.constant 0 : index
    %0 = vector.load %arg3[%c0, %c0_0, %c0_1] : memref<2x16x128xf32, #tpu.memory_space<vmem>>, vector<2x16x128xf32>
    %c0_2 = arith.constant 0 : index
    %c0_3 = arith.constant 0 : index
    %c0_4 = arith.constant 0 : index
    %c0_5 = arith.constant 0 : index
    %1 = vector.load %arg1[%c0_2, %c0_3, %c0_4, %c0_5] : memref<2x2x16x8xf32, #tpu.memory_space<vmem>>, vector<1x2x16x8xf32>
    %2 = vector.shape_cast %1 : vector<1x2x16x8xf32> to vector<2x16x8xf32>
    %c0_6 = arith.constant 0 : index
    %c0_7 = arith.constant 0 : index
    %c0_8 = arith.constant 0 : index
    %c0_9 = arith.constant 0 : index
    %c0_10 = arith.constant 0 : index
    %3 = vector.load %arg2[%c0_6, %c0_7, %c0_8, %c0_9, %c0_10] : memref<2x2x2x128x8xf32, #tpu.memory_space<vmem>>, vector<1x1x2x128x8xf32>
    %4 = vector.shape_cast %3 : vector<1x1x2x128x8xf32> to vector<2x128x8xf32>
    %c1 = arith.constant 1 : index
    %c0_11 = arith.constant 0 : index
    %c0_12 = arith.constant 0 : index
    %c0_13 = arith.constant 0 : index
    %c0_14 = arith.constant 0 : index
    %5 = vector.load %arg2[%c1, %c0_11, %c0_12, %c0_13, %c0_14] : memref<2x2x2x128x8xf32, #tpu.memory_space<vmem>>, vector<1x1x2x128x8xf32>
    %6 = vector.shape_cast %5 : vector<1x1x2x128x8xf32> to vector<2x128x8xf32>
    %cst = arith.constant dense<0.000000e+00> : vector<2x16x128xf32>
    %7 = tpu.matmul %2, %4, %cst {dimension_numbers = #tpu.dot_dimension_numbers<[2], [2], [1], [1], [0, 0, 0, 1, 1, 1], [0], [0]>} : vector<2x16x8xf32>, vector<2x128x8xf32>, vector<2x16x128xf32> -> vector<2x16x128xf32>
    %cst_15 = arith.constant 0.353553385 : f32
    %8 = vector.broadcast %cst_15 : f32 to vector<2x16x128xf32>
    %9 = arith.mulf %7, %8 : vector<2x16x128xf32>
    %10 = arith.addf %9, %0 : vector<2x16x128xf32>
    %cst_16 = arith.constant dense<0xFF800000> : vector<2x16xf32>
    %11 = vector.multi_reduction <maximumf>, %10, %cst_16 [2] : vector<2x16x128xf32> to vector<2x16xf32>
    %12 = vector.shape_cast %11 : vector<2x16xf32> to vector<2x16x1xf32>
    %13 = vector.broadcast %12 : vector<2x16x1xf32> to vector<2x16x128xf32>
    %14 = arith.subf %10, %13 : vector<2x16x128xf32>
    %15 = math.exp %14 : vector<2x16x128xf32>
    %cst_17 = arith.constant dense<0.000000e+00> : vector<2x16xf32>
    %16 = vector.multi_reduction <add>, %15, %cst_17 [2] : vector<2x16x128xf32> to vector<2x16xf32>
    %17 = vector.shape_cast %16 : vector<2x16xf32> to vector<2x16x1xf32>
    %18 = tpu.reciprocal %17 : vector<2x16x1xf32> -> vector<2x16x1xf32>
    %19 = vector.broadcast %18 : vector<2x16x1xf32> to vector<2x16x128xf32>
    %20 = arith.mulf %15, %19 : vector<2x16x128xf32>
    %cst_18 = arith.constant dense<0.000000e+00> : vector<2x16x8xf32>
    %21 = tpu.matmul %20, %6, %cst_18 {dimension_numbers = #tpu.dot_dimension_numbers<[2], [1], [1], [2], [0, 0, 0, 1, 1, 2], [0], [0]>} : vector<2x16x128xf32>, vector<2x128x8xf32>, vector<2x16x8xf32> -> vector<2x16x8xf32>
    %c0_19 = arith.constant 0 : index
    %c0_20 = arith.constant 0 : index
    %c0_21 = arith.constant 0 : index
    %c0_22 = arith.constant 0 : index
    %22 = vector.load %arg4[%c0_19, %c0_20, %c0_21, %c0_22] : memref<2x2x16x8xf32, #tpu.memory_space<vmem>>, vector<1x2x16x8xf32>
    %23 = vector.shape_cast %22 : vector<1x2x16x8xf32> to vector<2x16x8xf32>
    %24 = vector.shape_cast %21 : vector<2x16x8xf32> to vector<1x2x16x8xf32>
    tpu.vector_store %arg4[%c0_19, %c0_20, %c0_21, %c0_22], %24 {strides = array<i32>} : memref<2x2x16x8xf32, #tpu.memory_space<vmem>>, vector<1x2x16x8xf32>,
    %c1_23 = arith.constant 1 : index
    %c0_24 = arith.constant 0 : index
    %c0_25 = arith.constant 0 : index
    %c0_26 = arith.constant 0 : index
    %25 = vector.load %arg1[%c1_23, %c0_24, %c0_25, %c0_26] : memref<2x2x16x8xf32, #tpu.memory_space<vmem>>, vector<1x2x16x8xf32>
    %26 = vector.shape_cast %25 : vector<1x2x16x8xf32> to vector<2x16x8xf32>
    %c0_27 = arith.constant 0 : index
    %c1_28 = arith.constant 1 : index
    %c0_29 = arith.constant 0 : index
    %c0_30 = arith.constant 0 : index
    %c0_31 = arith.constant 0 : index
    %27 = vector.load %arg2[%c0_27, %c1_28, %c0_29, %c0_30, %c0_31] : memref<2x2x2x128x8xf32, #tpu.memory_space<vmem>>, vector<1x1x2x128x8xf32>
    %28 = vector.shape_cast %27 : vector<1x1x2x128x8xf32> to vector<2x128x8xf32>
    %c1_32 = arith.constant 1 : index
    %c1_33 = arith.constant 1 : index
    %c0_34 = arith.constant 0 : index
    %c0_35 = arith.constant 0 : index
    %c0_36 = arith.constant 0 : index
    %29 = vector.load %arg2[%c1_32, %c1_33, %c0_34, %c0_35, %c0_36] : memref<2x2x2x128x8xf32, #tpu.memory_space<vmem>>, vector<1x1x2x128x8xf32>
    %30 = vector.shape_cast %29 : vector<1x1x2x128x8xf32> to vector<2x128x8xf32>
    %cst_37 = arith.constant dense<0.000000e+00> : vector<2x16x128xf32>
    %31 = tpu.matmul %26, %28, %cst_37 {dimension_numbers = #tpu.dot_dimension_numbers<[2], [2], [1], [1], [0, 0, 0, 1, 1, 1], [0], [0]>} : vector<2x16x8xf32>, vector<2x128x8xf32>, vector<2x16x128xf32> -> vector<2x16x128xf32>
    %cst_38 = arith.constant 0.353553385 : f32
    %32 = vector.broadcast %cst_38 : f32 to vector<2x16x128xf32>
    %33 = arith.mulf %31, %32 : vector<2x16x128xf32>
    %34 = arith.addf %33, %0 : vector<2x16x128xf32>
    %cst_39 = arith.constant dense<0xFF800000> : vector<2x16xf32>
    %35 = vector.multi_reduction <maximumf>, %34, %cst_39 [2] : vector<2x16x128xf32> to vector<2x16xf32>
    %36 = vector.shape_cast %35 : vector<2x16xf32> to vector<2x16x1xf32>
    %37 = vector.broadcast %36 : vector<2x16x1xf32> to vector<2x16x128xf32>
    %38 = arith.subf %34, %37 : vector<2x16x128xf32>
    %39 = math.exp %38 : vector<2x16x128xf32>
    %cst_40 = arith.constant dense<0.000000e+00> : vector<2x16xf32>
    %40 = vector.multi_reduction <add>, %39, %cst_40 [2] : vector<2x16x128xf32> to vector<2x16xf32>
    %41 = vector.shape_cast %40 : vector<2x16xf32> to vector<2x16x1xf32>
    %42 = tpu.reciprocal %41 : vector<2x16x1xf32> -> vector<2x16x1xf32>
    %43 = vector.broadcast %42 : vector<2x16x1xf32> to vector<2x16x128xf32>
    %44 = arith.mulf %39, %43 : vector<2x16x128xf32>
    %cst_41 = arith.constant dense<0.000000e+00> : vector<2x16x8xf32>
    %45 = tpu.matmul %44, %30, %cst_41 {dimension_numbers = #tpu.dot_dimension_numbers<[2], [1], [1], [2], [0, 0, 0, 1, 1, 2], [0], [0]>} : vector<2x16x128xf32>, vector<2x128x8xf32>, vector<2x16x8xf32> -> vector<2x16x8xf32>
    %c1_42 = arith.constant 1 : index
    %c0_43 = arith.constant 0 : index
    %c0_44 = arith.constant 0 : index
    %c0_45 = arith.constant 0 : index
    %46 = vector.load %arg4[%c1_42, %c0_43, %c0_44, %c0_45] : memref<2x2x16x8xf32, #tpu.memory_space<vmem>>, vector<1x2x16x8xf32>
    %47 = vector.shape_cast %46 : vector<1x2x16x8xf32> to vector<2x16x8xf32>
    %48 = vector.shape_cast %45 : vector<2x16x8xf32> to vector<1x2x16x8xf32>
    tpu.vector_store %arg4[%c1_42, %c0_43, %c0_44, %c0_45], %48 {strides = array<i32>} : memref<2x2x16x8xf32, #tpu.memory_space<vmem>>, vector<1x2x16x8xf32>,
    return
  }
  func.func @transform_0(%arg0: i32) -> (i32, i32, i32, i32) {
    %c0_i32 = arith.constant 0 : i32
    %c0_i32_0 = arith.constant 0 : i32
    %c0_i32_1 = arith.constant 0 : i32
    %c0_i32_2 = arith.constant 0 : i32
    return %arg0, %c0_i32, %c0_i32_0, %c0_i32_1 : i32, i32, i32, i32
  }
  func.func @transform_1(%arg0: i32) -> (i32, i32, i32, i32, i32) {
    %c0_i32 = arith.constant 0 : i32
    %c0_i32_0 = arith.constant 0 : i32
    %c0_i32_1 = arith.constant 0 : i32
    %c0_i32_2 = arith.constant 0 : i32
    %c0_i32_3 = arith.constant 0 : i32
    return %c0_i32, %arg0, %c0_i32_0, %c0_i32_1, %c0_i32_2 : i32, i32, i32, i32, i32
  }
  func.func @transform_2(%arg0: i32) -> (i32, i32, i32) {
    %c0_i32 = arith.constant 0 : i32
    %c0_i32_0 = arith.constant 0 : i32
    %c0_i32_1 = arith.constant 0 : i32
    %c0_i32_2 = arith.constant 0 : i32
    return %c0_i32, %c0_i32_0, %c0_i32_1 : i32, i32, i32
  }
  func.func @transform_3(%arg0: i32) -> (i32, i32, i32, i32) {
    %c0_i32 = arith.constant 0 : i32
    %c0_i32_0 = arith.constant 0 : i32
    %c0_i32_1 = arith.constant 0 : i32
    %c0_i32_2 = arith.constant 0 : i32
    return %arg0, %c0_i32, %c0_i32_0, %c0_i32_1 : i32, i32, i32, i32
  }
}

module attributes {stable_mosaic.version = 11 : i64} {
  func.func @kernel(%arg0: i32, %arg1: i32, %arg2: memref<1x64x16xf32, #tpu.memory_space<vmem>>, %arg3: memref<1x64x16xf32, #tpu.memory_space<vmem>>, %arg4: memref<16x16xf32, #tpu.memory_space<vmem>>, %arg5: memref<4x16xf32, #tpu.memory_space<vmem>>, %arg6: memref<16x32xf32, #tpu.memory_space<vmem>>, %arg7: memref<1x32xf32, #tpu.memory_space<vmem>>, %arg8: memref<32x16xf32, #tpu.memory_space<vmem>>, %arg9: memref<1x64x16xf32, #tpu.memory_space<vmem>>) attributes {dimension_semantics = [#tpu.dimension_semantics<parallel>, #tpu.dimension_semantics<parallel>], iteration_bounds = array<i64: 1, 2>, scalar_prefetch = 0 : i64, scratch_operands = 0 : i64, tpu.core_type = #tpu.core_type<tc>, window_params = [{transform_indices = @transform_0, window_bounds = array<i64: 1, 64, 16>}, {transform_indices = @transform_1, window_bounds = array<i64: 1, 64, 16>}, {pipeline_mode = #tpu.pipeline_mode<synchronous>, transform_indices = @transform_2, window_bounds = array<i64: 16, 16>}, {pipeline_mode = #tpu.pipeline_mode<synchronous>, transform_indices = @transform_3, window_bounds = array<i64: 4, 16>}, {pipeline_mode = #tpu.pipeline_mode<synchronous>, transform_indices = @transform_4, window_bounds = array<i64: 16, 32>}, {pipeline_mode = #tpu.pipeline_mode<synchronous>, transform_indices = @transform_5, window_bounds = array<i64: 1, 32>}, {pipeline_mode = #tpu.pipeline_mode<synchronous>, transform_indices = @transform_6, window_bounds = array<i64: 32, 16>}, {transform_indices = @transform_7, window_bounds = array<i64: 1, 64, 16>}]} {
    %c0 = arith.constant 0 : index
    %c0_0 = arith.constant 0 : index
    %c0_1 = arith.constant 0 : index
    %0 = vector.load %arg2[%c0, %c0_0, %c0_1] : memref<1x64x16xf32, #tpu.memory_space<vmem>>, vector<1x64x16xf32>
    %1 = vector.shape_cast %0 : vector<1x64x16xf32> to vector<64x16xf32>
    %c0_2 = arith.constant 0 : index
    %c0_3 = arith.constant 0 : index
    %c0_4 = arith.constant 0 : index
    %2 = vector.load %arg3[%c0_2, %c0_3, %c0_4] : memref<1x64x16xf32, #tpu.memory_space<vmem>>, vector<1x64x16xf32>
    %3 = vector.shape_cast %2 : vector<1x64x16xf32> to vector<64x16xf32>
    %c0_5 = arith.constant 0 : index
    %c0_6 = arith.constant 0 : index
    %4 = vector.load %arg4[%c0_5, %c0_6] : memref<16x16xf32, #tpu.memory_space<vmem>>, vector<16x16xf32>
    %cst = arith.constant dense<0.000000e+00> : vector<64x16xf32>
    %5 = tpu.matmul %1, %4, %cst {dimension_numbers = #tpu.dot_dimension_numbers<[1], [0], [0], [1], [0, 0, 1, 1], [], []>} : vector<64x16xf32>, vector<16x16xf32>, vector<64x16xf32> -> vector<64x16xf32>
    %c0_7 = arith.constant 0 : index
    %c0_8 = arith.constant 0 : index
    %6 = vector.load %arg5[%c0_7, %c0_8] : memref<4x16xf32, #tpu.memory_space<vmem>>, vector<1x16xf32>
    %7 = vector.broadcast %6 : vector<1x16xf32> to vector<64x16xf32>
    %8 = arith.addf %5, %7 : vector<64x16xf32>
    %9 = arith.addf %8, %3 : vector<64x16xf32>
    %cst_9 = arith.constant dense<0.000000e+00> : vector<64xf32>
    %10 = vector.multi_reduction <add>, %9, %cst_9 [1] : vector<64x16xf32> to vector<64xf32>
    %11 = vector.shape_cast %10 : vector<64xf32> to vector<64x1xf32>
    %cst_10 = arith.constant 1.600000e+01 : f32
    %12 = vector.broadcast %cst_10 : f32 to vector<64x1xf32>
    %13 = arith.divf %11, %12 : vector<64x1xf32>
    %14 = vector.broadcast %13 : vector<64x1xf32> to vector<64x16xf32>
    %15 = arith.subf %9, %14 : vector<64x16xf32>
    %16 = arith.mulf %15, %15 : vector<64x16xf32>
    %cst_11 = arith.constant dense<0.000000e+00> : vector<64xf32>
    %17 = vector.multi_reduction <add>, %16, %cst_11 [1] : vector<64x16xf32> to vector<64xf32>
    %18 = vector.shape_cast %17 : vector<64xf32> to vector<64x1xf32>
    %cst_12 = arith.constant 1.600000e+01 : f32
    %19 = vector.broadcast %cst_12 : f32 to vector<64x1xf32>
    %20 = arith.divf %18, %19 : vector<64x1xf32>
    %cst_13 = arith.constant 9.99999974E-6 : f32
    %21 = vector.broadcast %cst_13 : f32 to vector<64x1xf32>
    %22 = arith.addf %20, %21 : vector<64x1xf32>
    %23 = math.rsqrt %22 : vector<64x1xf32>
    %24 = vector.broadcast %23 : vector<64x1xf32> to vector<64x16xf32>
    %25 = arith.mulf %15, %24 : vector<64x16xf32>
    %c1 = arith.constant 1 : index
    %c0_14 = arith.constant 0 : index
    %26 = vector.load %arg5[%c1, %c0_14] : memref<4x16xf32, #tpu.memory_space<vmem>>, vector<1x16xf32>
    %27 = vector.broadcast %26 : vector<1x16xf32> to vector<64x16xf32>
    %28 = arith.mulf %25, %27 : vector<64x16xf32>
    %c2 = arith.constant 2 : index
    %c0_15 = arith.constant 0 : index
    %29 = vector.load %arg5[%c2, %c0_15] : memref<4x16xf32, #tpu.memory_space<vmem>>, vector<1x16xf32>
    %30 = vector.broadcast %29 : vector<1x16xf32> to vector<64x16xf32>
    %31 = arith.addf %28, %30 : vector<64x16xf32>
    %c0_16 = arith.constant 0 : index
    %c0_17 = arith.constant 0 : index
    %32 = vector.load %arg6[%c0_16, %c0_17] : memref<16x32xf32, #tpu.memory_space<vmem>>, vector<16x32xf32>
    %cst_18 = arith.constant dense<0.000000e+00> : vector<64x32xf32>
    %33 = tpu.matmul %31, %32, %cst_18 {dimension_numbers = #tpu.dot_dimension_numbers<[1], [0], [0], [1], [0, 0, 1, 1], [], []>} : vector<64x16xf32>, vector<16x32xf32>, vector<64x32xf32> -> vector<64x32xf32>
    %c0_19 = arith.constant 0 : index
    %c0_20 = arith.constant 0 : index
    %34 = vector.load %arg7[%c0_19, %c0_20] : memref<1x32xf32, #tpu.memory_space<vmem>>, vector<1x32xf32>
    %35 = vector.broadcast %34 : vector<1x32xf32> to vector<64x32xf32>
    %36 = arith.addf %33, %35 : vector<64x32xf32>
    %cst_21 = arith.constant 5.000000e-01 : f32
    %37 = vector.broadcast %cst_21 : f32 to vector<64x32xf32>
    %38 = arith.mulf %37, %36 : vector<64x32xf32>
    %cst_22 = arith.constant 4.471500e-02 : f32
    %39 = vector.broadcast %cst_22 : f32 to vector<64x32xf32>
    %40 = arith.mulf %39, %36 : vector<64x32xf32>
    %41 = arith.mulf %40, %36 : vector<64x32xf32>
    %42 = arith.mulf %41, %36 : vector<64x32xf32>
    %43 = arith.addf %36, %42 : vector<64x32xf32>
    %cst_23 = arith.constant 0.797884583 : f32
    %44 = vector.broadcast %cst_23 : f32 to vector<64x32xf32>
    %45 = arith.mulf %44, %43 : vector<64x32xf32>
    %46 = math.tanh %45 : vector<64x32xf32>
    %cst_24 = arith.constant 1.000000e+00 : f32
    %47 = vector.broadcast %cst_24 : f32 to vector<64x32xf32>
    %48 = arith.addf %47, %46 : vector<64x32xf32>
    %49 = arith.mulf %38, %48 : vector<64x32xf32>
    %c0_25 = arith.constant 0 : index
    %c0_26 = arith.constant 0 : index
    %50 = vector.load %arg8[%c0_25, %c0_26] : memref<32x16xf32, #tpu.memory_space<vmem>>, vector<32x16xf32>
    %cst_27 = arith.constant dense<0.000000e+00> : vector<64x16xf32>
    %51 = tpu.matmul %49, %50, %cst_27 {dimension_numbers = #tpu.dot_dimension_numbers<[1], [0], [0], [1], [0, 0, 1, 1], [], []>} : vector<64x32xf32>, vector<32x16xf32>, vector<64x16xf32> -> vector<64x16xf32>
    %c3 = arith.constant 3 : index
    %c0_28 = arith.constant 0 : index
    %52 = vector.load %arg5[%c3, %c0_28] : memref<4x16xf32, #tpu.memory_space<vmem>>, vector<1x16xf32>
    %53 = vector.broadcast %52 : vector<1x16xf32> to vector<64x16xf32>
    %54 = arith.addf %51, %53 : vector<64x16xf32>
    %55 = arith.addf %9, %54 : vector<64x16xf32>
    %c0_29 = arith.constant 0 : index
    %c0_30 = arith.constant 0 : index
    %c0_31 = arith.constant 0 : index
    %56 = vector.load %arg9[%c0_29, %c0_30, %c0_31] : memref<1x64x16xf32, #tpu.memory_space<vmem>>, vector<1x64x16xf32>
    %57 = vector.shape_cast %56 : vector<1x64x16xf32> to vector<64x16xf32>
    %58 = vector.shape_cast %55 : vector<64x16xf32> to vector<1x64x16xf32>
    tpu.vector_store %arg9[%c0_29, %c0_30, %c0_31], %58 {strides = array<i32>} : memref<1x64x16xf32, #tpu.memory_space<vmem>>, vector<1x64x16xf32>,
    return
  }
  func.func @transform_0(%arg0: i32, %arg1: i32) -> (i32, i32, i32) {
    %c0_i32 = arith.constant 0 : i32
    %c0_i32_0 = arith.constant 0 : i32
    return %arg1, %arg0, %c0_i32 : i32, i32, i32
  }
  func.func @transform_1(%arg0: i32, %arg1: i32) -> (i32, i32, i32) {
    %c0_i32 = arith.constant 0 : i32
    %c0_i32_0 = arith.constant 0 : i32
    return %arg1, %arg0, %c0_i32 : i32, i32, i32
  }
  func.func @transform_2(%arg0: i32, %arg1: i32) -> (i32, i32) {
    %c0_i32 = arith.constant 0 : i32
    %c0_i32_0 = arith.constant 0 : i32
    %c0_i32_1 = arith.constant 0 : i32
    return %c0_i32, %c0_i32_0 : i32, i32
  }
  func.func @transform_3(%arg0: i32, %arg1: i32) -> (i32, i32) {
    %c0_i32 = arith.constant 0 : i32
    %c0_i32_0 = arith.constant 0 : i32
    %c0_i32_1 = arith.constant 0 : i32
    return %c0_i32, %c0_i32_0 : i32, i32
  }
  func.func @transform_4(%arg0: i32, %arg1: i32) -> (i32, i32) {
    %c0_i32 = arith.constant 0 : i32
    %c0_i32_0 = arith.constant 0 : i32
    %c0_i32_1 = arith.constant 0 : i32
    return %c0_i32, %c0_i32_0 : i32, i32
  }
  func.func @transform_5(%arg0: i32, %arg1: i32) -> (i32, i32) {
    %c0_i32 = arith.constant 0 : i32
    %c0_i32_0 = arith.constant 0 : i32
    %c0_i32_1 = arith.constant 0 : i32
    return %c0_i32, %c0_i32_0 : i32, i32
  }
  func.func @transform_6(%arg0: i32, %arg1: i32) -> (i32, i32) {
    %c0_i32 = arith.constant 0 : i32
    %c0_i32_0 = arith.constant 0 : i32
    %c0_i32_1 = arith.constant 0 : i32
    return %c0_i32, %c0_i32_0 : i32, i32
  }
  func.func @transform_7(%arg0: i32, %arg1: i32) -> (i32, i32, i32) {
    %c0_i32 = arith.constant 0 : i32
    %c0_i32_0 = arith.constant 0 : i32
    return %arg1, %arg0, %c0_i32 : i32, i32, i32
  }
}

</mosaic_0001>

<llo_original>
// kernel: _lambda_.3
$region0: #{_lambda_.3}
  #allocation0 [shape = 'u32[]', space=smem, size = 0x4, offset = 0x4, fixed_abs, tag = 'smem constant byte address 0x4 - core index']
  #allocation1 [shape = 'u32[144,128]{1,0:T(1,128)}', space=vmem, size = 0x12000, scoped, tag = 'internal scratch']
  %s0 = inlined_call_operand.vmem [shape: f32[2,64,16], index: 0, kind: input, shape index: {}]
  %s1 = inlined_call_operand.vmem [shape: f32[2,16], index: 1, kind: input, shape index: {}]
  %s2 = inlined_call_operand.hbm [shape: f32[16,16], index: 2, kind: input, shape index: {}]
  %s3 = inlined_call_operand.vmem [shape: f32[16,32], index: 3, kind: input, shape index: {}]
  %s4 = inlined_call_operand.hbm [shape: f32[1,16], index: 4, kind: input, shape index: {}]
  %s5 = inlined_call_operand.vmem [shape: f32[1,32], index: 5, kind: input, shape index: {}]
  %s6 = inlined_call_operand.vmem [shape: f32[2,64,16], index: 6, kind: output, shape index: {0}]
  %s7 = inlined_call_operand.vmem [shape: f32[2,64,32], index: 7, kind: output, shape index: {1}]
  %8 = xla_tuple %s6, %s7
  %s9 = sld [smem:[#allocation0]]
  $region73: #{_lambda_.3} parent=0
    _
  %s11 = ssub.s32 1, %s9
  %s12 = scalar_select 0, %s11, %s9
  $region1: #{_lambda_.3} parent=0
    #allocation2 [shape = 'u8[8192]{0}', space=vmem, size = 0x2000, scoped, tag = 'input window, operand 2, single buffered']
    #allocation3 [shape = 's32[2]{0}', space=sflag, size = 0x8, scoped, tag = 'scoped memory for _lambda_.3']
    #allocation4 [shape = 'u8[512]{0}', space=vmem, size = 0x400, scoped, tag = 'input window, operand 4, single buffered']
    #allocation5 [shape = 's32[1]{0}', space=sflag, size = 0x4, scoped, tag = 'scoped memory for _lambda_.3']
    %13 = vsyncpa [#allocation3], 0
    %14 = vsyncpa [#allocation5], 0
    loop: start=0, step=1, limit=4
    $region2: #{_lambda_.3} parent=1 // loop_pre_header
      _
    $region3: #{_lambda_.3} parent=1 // loop_header
      %s16 = sphi 0, %s20
      %p17 = scmp.ge.s32.totalorder %s16, 4
      %s23 = sphi 0, %s35
      %s24 = sphi 0, %s31
      %s25 = sphi 0, %s23
      %s26 = sphi 0, %s24
      %s27 = sphi 0, %s25
      %s28 = sphi 0, %s26
      %s40 = sphi 0, %s42
      %s43 = sphi 0, %s40
      %s44 = sphi 0, %s43
      %s60 = sphi 0, %s44
      %s64 = sphi 0, %s64
      %s66 = sphi 0, %s64
      %s67 = sphi 0, %s66
      %s81 = sphi 0, %s67
      %s85 = sphi 0, %s85
      %s87 = sphi 0, %s85
      %s88 = sphi 0, %s87
      %s102 = sphi 0, %s88
      %s106 = sphi 0, %s106
      %s108 = sphi 0, %s106
      %s109 = sphi 0, %s108
      %s123 = sphi 0, %s109
      %s127 = sphi 0, %s127
      %s129 = sphi 0, %s127
      %s130 = sphi 0, %s129
      %s144 = sphi 0, %s130
      %s148 = sphi 0, %s148
      %s150 = sphi 0, %s148
      %s151 = sphi 0, %s150
      %s165 = sphi 0, %s151
      %s173 = sphi 0, %s175
      %s176 = sphi 0, %s173
      %s177 = sphi 0, %s176
      %s193 = sphi 0, %s177
      %s201 = sphi 0, %s203
      %s204 = sphi 0, %s201
      %s205 = sphi 0, %s204
      %s221 = sphi 0, %s205
    $region4: #{_lambda_.3} parent=1 // loop_header_branch
      %19 = sbr.rel (%p17) target = $region8
    $region5: #{_lambda_.3} parent=1 // loop_body
      %s21 = ssub.s32 %s16, 1
      %s22 = ssub.s32 %s16, 2
      %s29 = sadd.s32 1, %s24
      %p30 = scmp.ge.s32.totalorder %s29, 2
      %s31 = scalar_select %p30, 0, %s29
      %s32 = sadd.s32 1, %s23
      %s33 = scalar_select %p30, %s32, %s23
      %p34 = scmp.ge.s32.totalorder %s33, 1
      %s35 = scalar_select %p34, 0, %s33
      %s36 = ssub.s32 %s24, %s31
      %s37 = ssub.s32 %s23, %s35
      %s38 = sor.u32 %s36, %s37
      %p39 = scmp.eq.s32.totalorder %s38, 0
      %s41 = sadd.s32 %s40, 1
      %s42 = scalar_select %p39, %s40, %s41
      %p45 = pneg %p39
      %p46 = scmp.eq.s32.totalorder %s16, 1
      %p47 = por %p45, %p46
      %p48 = scmp.ne.s32.totalorder %s40, %s43
      %p49 = scmp.eq.s32.totalorder %s16, 0
      %p50 = por %p48, %p49
      %p51 = scmp.ne.s32.totalorder %s40, %s43
      %p52 = scmp.eq.s32.totalorder %s21, 1
      %p53 = por %p51, %p52
      %p54 = scmp.ne.s32.totalorder %s43, %s44
      %p55 = scmp.eq.s32.totalorder %s21, 0
      %p56 = por %p54, %p55
      %p57 = scmp.ne.s32.totalorder %s43, %s44
      %p58 = scmp.eq.s32.totalorder %s22, 1
      %p59 = por %p57, %p58
      %p61 = scmp.ne.s32.totalorder %s44, %s60
      %p62 = scmp.eq.s32.totalorder %s22, 0
      %p63 = por %p61, %p62
      %s65 = sadd.s32 %s64, 1
      %p68 = scmp.eq.s32.totalorder %s16, 1
      %p69 = scmp.ne.s32.totalorder %s64, %s66
      %p70 = scmp.eq.s32.totalorder %s16, 0
      %p71 = por %p69, %p70
      %p72 = scmp.ne.s32.totalorder %s64, %s66
      %p73 = scmp.eq.s32.totalorder %s21, 1
      %p74 = por %p72, %p73
      %p75 = scmp.ne.s32.totalorder %s66, %s67
      %p76 = scmp.eq.s32.totalorder %s21, 0
      %p77 = por %p75, %p76
      %p78 = scmp.ne.s32.totalorder %s66, %s67
      %p79 = scmp.eq.s32.totalorder %s22, 1
      %p80 = por %p78, %p79
      %p82 = scmp.ne.s32.totalorder %s67, %s81
      %p83 = scmp.eq.s32.totalorder %s22, 0
      %p84 = por %p82, %p83
      %s86 = sadd.s32 %s85, 1
      %p89 = scmp.eq.s32.totalorder %s16, 1
      %p90 = scmp.ne.s32.totalorder %s85, %s87
      %p91 = scmp.eq.s32.totalorder %s16, 0
      %p92 = por %p90, %p91
      %p93 = scmp.ne.s32.totalorder %s85, %s87
      %p94 = scmp.eq.s32.totalorder %s21, 1
      %p95 = por %p93, %p94
      %p96 = scmp.ne.s32.totalorder %s87, %s88
      %p97 = scmp.eq.s32.totalorder %s21, 0
      %p98 = por %p96, %p97
      %p99 = scmp.ne.s32.totalorder %s87, %s88
      %p100 = scmp.eq.s32.totalorder %s22, 1
      %p101 = por %p99, %p100
      %p103 = scmp.ne.s32.totalorder %s88, %s102
      %p104 = scmp.eq.s32.totalorder %s22, 0
      %p105 = por %p103, %p104
      %s107 = sadd.s32 %s106, 1
      %p110 = scmp.eq.s32.totalorder %s16, 1
      %p111 = scmp.ne.s32.totalorder %s106, %s108
      %p112 = scmp.eq.s32.totalorder %s16, 0
      %p113 = por %p111, %p112
      %p114 = scmp.ne.s32.totalorder %s106, %s108
      %p115 = scmp.eq.s32.totalorder %s21, 1
      %p116 = por %p114, %p115
      %p117 = scmp.ne.s32.totalorder %s108, %s109
      %p118 = scmp.eq.s32.totalorder %s21, 0
      %p119 = por %p117, %p118
      %p120 = scmp.ne.s32.totalorder %s108, %s109
      %p121 = scmp.eq.s32.totalorder %s22, 1
      %p122 = por %p120, %p121
      %p124 = scmp.ne.s32.totalorder %s109, %s123
      %p125 = scmp.eq.s32.totalorder %s22, 0
      %p126 = por %p124, %p125
      %s128 = sadd.s32 %s127, 1
      %p131 = scmp.eq.s32.totalorder %s16, 1
      %p132 = scmp.ne.s32.totalorder %s127, %s129
      %p133 = scmp.eq.s32.totalorder %s16, 0
      %p134 = por %p132, %p133
      %p135 = scmp.ne.s32.totalorder %s127, %s129
      %p136 = scmp.eq.s32.totalorder %s21, 1
      %p137 = por %p135, %p136
      %p138 = scmp.ne.s32.totalorder %s129, %s130
      %p139 = scmp.eq.s32.totalorder %s21, 0
      %p140 = por %p138, %p139
      %p141 = scmp.ne.s32.totalorder %s129, %s130
      %p142 = scmp.eq.s32.totalorder %s22, 1
      %p143 = por %p141, %p142
      %p145 = scmp.ne.s32.totalorder %s130, %s144
      %p146 = scmp.eq.s32.totalorder %s22, 0
      %p147 = por %p145, %p146
      %s149 = sadd.s32 %s148, 1
      %p152 = scmp.eq.s32.totalorder %s16, 1
      %p153 = scmp.ne.s32.totalorder %s148, %s150
      %p154 = scmp.eq.s32.totalorder %s16, 0
      %p155 = por %p153, %p154
      %p156 = scmp.ne.s32.totalorder %s148, %s150
      %p157 = scmp.eq.s32.totalorder %s21, 1
      %p158 = por %p156, %p157
      %p159 = scmp.ne.s32.totalorder %s150, %s151
      %p160 = scmp.eq.s32.totalorder %s21, 0
      %p161 = por %p159, %p160
      %p162 = scmp.ne.s32.totalorder %s150, %s151
      %p163 = scmp.eq.s32.totalorder %s22, 1
      %p164 = por %p162, %p163
      %p166 = scmp.ne.s32.totalorder %s151, %s165
      %p167 = scmp.eq.s32.totalorder %s22, 0
      %p168 = por %p166, %p167
      %s169 = ssub.s32 %s24, %s31
      %s170 = ssub.s32 %s23, %s35
      %s171 = sor.u32 %s169, %s170
      %p172 = scmp.eq.s32.totalorder %s171, 0
      %s174 = sadd.s32 %s173, 1
      %s175 = scalar_select %p172, %s173, %s174
      %p178 = pneg %p172
      %p179 = scmp.eq.s32.totalorder %s16, 1
      %p180 = por %p178, %p179
      %p181 = scmp.ne.s32.totalorder %s173, %s176
      %p182 = scmp.eq.s32.totalorder %s16, 0
      %p183 = por %p181, %p182
      %p184 = scmp.ne.s32.totalorder %s173, %s176
      %p185 = scmp.eq.s32.totalorder %s21, 1
      %p186 = por %p184, %p185
      %p187 = scmp.ne.s32.totalorder %s176, %s177
      %p188 = scmp.eq.s32.totalorder %s21, 0
      %p189 = por %p187, %p188
      %p190 = scmp.ne.s32.totalorder %s176, %s177
      %p191 = scmp.eq.s32.totalorder %s22, 1
      %p192 = por %p190, %p191
      %p194 = scmp.ne.s32.totalorder %s177, %s193
      %p195 = scmp.eq.s32.totalorder %s22, 0
      %p196 = por %p194, %p195
      %s197 = ssub.s32 %s24, %s31
      %s198 = ssub.s32 %s23, %s35
      %s199 = sor.u32 %s197, %s198
      %p200 = scmp.eq.s32.totalorder %s199, 0
      %s202 = sadd.s32 %s201, 1
      %s203 = scalar_select %p200, %s201, %s202
      %p206 = pneg %p200
      %p207 = scmp.eq.s32.totalorder %s16, 1
      %p208 = por %p206, %p207
      %p209 = scmp.ne.s32.totalorder %s201, %s204
      %p210 = scmp.eq.s32.totalorder %s16, 0
      %p211 = por %p209, %p210
      %p212 = scmp.ne.s32.totalorder %s201, %s204
      %p213 = scmp.eq.s32.totalorder %s21, 1
      %p214 = por %p212, %p213
      %p215 = scmp.ne.s32.totalorder %s204, %s205
      %p216 = scmp.eq.s32.totalorder %s21, 0
      %p217 = por %p215, %p216
      %p218 = scmp.ne.s32.totalorder %s204, %s205
      %p219 = scmp.eq.s32.totalorder %s22, 1
      %p220 = por %p218, %p219
      %p222 = scmp.ne.s32.totalorder %s205, %s221
      %p223 = scmp.eq.s32.totalorder %s22, 0
      %p224 = por %p222, %p223
      %p225 = scmp.le.s32.totalorder 1, %s16
      %p226 = scmp.lt.s32.totalorder %s16, 3
      %p227 = pnand %p225, %p226
      %p228 = pneg %p227
      // Predicated region
      $region9: #{_lambda_.3} parent=5 // pred_check
        _
      $region10: #{_lambda_.3} parent=5 // pred_check_branch
        %230 = sbr.rel (%p227) target = $region12
      $region11: #{_lambda_.3} parent=5 // pred_region
        %s231 = ssub.s32 %s16, 1
        // Predicated region
        $region13: #{_lambda_.3} parent=11 // pred_check
          %p232 = pneg %p77
        $region14: #{_lambda_.3} parent=11 // pred_check_branch
          %234 = sbr.rel (%p232) target = $region16
        $region15: #{_lambda_.3} parent=11 // pred_region
          _
        $region16: #{_lambda_.3} parent=11 // pred_fallthru
          _
        // Predicated region
        $region17: #{_lambda_.3} parent=11 // pred_check
          %p235 = pneg %p98
        $region18: #{_lambda_.3} parent=11 // pred_check_branch
          %237 = sbr.rel (%p235) target = $region20
        $region19: #{_lambda_.3} parent=11 // pred_region
          %s239 = ssub.s32 256, 256
          %240 = vsyncadd [#allocation3], %s239
          %s241 = sshll.u32 [#allocation2], 4
          %s242 = int_to_ptr.vmem [resolvable:$true] %s241
          %247 = dma.hbm_to_vmem [thread:$0]  %s2, 256, %s242, [#allocation3], 128, 128, 8
        $region20: #{_lambda_.3} parent=11 // pred_fallthru
          _
        // Predicated region
        $region21: #{_lambda_.3} parent=11 // pred_check
          %p248 = pneg %p119
        $region22: #{_lambda_.3} parent=11 // pred_check_branch
          %250 = sbr.rel (%p248) target = $region24
        $region23: #{_lambda_.3} parent=11 // pred_region
          _
        $region24: #{_lambda_.3} parent=11 // pred_fallthru
          _
        // Predicated region
        $region25: #{_lambda_.3} parent=11 // pred_check
          %p251 = pneg %p140
        $region26: #{_lambda_.3} parent=11 // pred_check_branch
          %253 = sbr.rel (%p251) target = $region28
        $region27: #{_lambda_.3} parent=11 // pred_region
          %s255 = ssub.s32 16, 16
          %256 = vsyncadd [#allocation5], %s255
          %s258 = sshll.u32 [#allocation4], 4
          %s259 = int_to_ptr.vmem [resolvable:$true] %s258
          %261 = dma.hbm_to_vmem [thread:$0]  %s4, 16, %s259, [#allocation5]
        $region28: #{_lambda_.3} parent=11 // pred_fallthru
          _
        // Predicated region
        $region29: #{_lambda_.3} parent=11 // pred_check
          %p262 = pneg %p161
        $region30: #{_lambda_.3} parent=11 // pred_check_branch
          %264 = sbr.rel (%p262) target = $region32
        $region31: #{_lambda_.3} parent=11 // pred_region
          _
        $region32: #{_lambda_.3} parent=11 // pred_fallthru
          _
      $region12: #{_lambda_.3} parent=5 // pred_fallthru
        _
      %p265 = scmp.lt.s32.totalorder %s16, 2
      // Predicated region
      $region33: #{_lambda_.3} parent=5 // pred_check
        %p266 = pneg %p265
      $region34: #{_lambda_.3} parent=5 // pred_check_branch
        %268 = sbr.rel (%p266) target = $region36
      $region35: #{_lambda_.3} parent=5 // pred_region
        // Predicated region
        $region37: #{_lambda_.3} parent=35 // pred_check
          %p269 = pneg %p50
        $region38: #{_lambda_.3} parent=35 // pred_check_branch
          %271 = sbr.rel (%p269) target = $region40
        $region39: #{_lambda_.3} parent=35 // pred_region
          %s272 = smul.u32 8, %s23
          %p273 = scmp.lt.s32.totalorder %s24, 1
          %s274 = scalar_select %p273, %s24, 1
          %p275 = scmp.lt.s32.totalorder %s272, 7
          %s276 = scalar_select %p275, %s272, 7
          %s277 = smul.addr %s274, 8
          %s278 = sadd.s32 %s276, %s277
          %s279 = smul.addr %s278, 8
          %s280 = scalar_lea.vmem %s0, %s279
          %s281 = smul.u32 8, %s23
        $region40: #{_lambda_.3} parent=35 // pred_fallthru
          _
      $region36: #{_lambda_.3} parent=5 // pred_fallthru
        _
      %p282 = scmp.le.s32.totalorder 1, %s16
      %p283 = scmp.lt.s32.totalorder %s16, 3
      %p284 = pnand %p282, %p283
      %p285 = pneg %p284
      // Predicated region
      $region41: #{_lambda_.3} parent=5 // pred_check
        _
      $region42: #{_lambda_.3} parent=5 // pred_check_branch
        %287 = sbr.rel (%p284) target = $region44
      $region43: #{_lambda_.3} parent=5 // pred_region
        %s288 = ssub.s32 %s16, 1
        // Predicated region
        $region45: #{_lambda_.3} parent=43 // pred_check
          %p289 = pneg %p98
        $region46: #{_lambda_.3} parent=43 // pred_check_branch
          %291 = sbr.rel (%p289) target = $region48
        $region47: #{_lambda_.3} parent=43 // pred_region
          %292 = dma.done [#allocation3], 256
        $region48: #{_lambda_.3} parent=43 // pred_fallthru
          _
        // Predicated region
        $region49: #{_lambda_.3} parent=43 // pred_check
          %p293 = pneg %p140
        $region50: #{_lambda_.3} parent=43 // pred_check_branch
          %295 = sbr.rel (%p293) target = $region52
        $region51: #{_lambda_.3} parent=43 // pred_region
          %296 = dma.done [#allocation5], 16
        $region52: #{_lambda_.3} parent=43 // pred_fallthru
          _
        %s297 = smul.u32 8, %s25
        %p298 = scmp.lt.s32.totalorder %s26, 1
        %s299 = scalar_select %p298, %s26, 1
        %p300 = scmp.lt.s32.totalorder %s297, 7
        %s301 = scalar_select %p300, %s297, 7
        %s302 = smul.addr %s299, 8
        %s303 = sadd.s32 %s301, %s302
        %s304 = smul.addr %s303, 8
        %s305 = scalar_lea.vmem %s0, %s304
        %p306 = pneg %p56
        %p307 = pneg %p53
        %p308 = pneg %p77
        %p309 = pneg %p74
        %p310 = pneg %p98
        %p311 = pneg %p95
        %p312 = pneg %p119
        %p313 = pneg %p116
        %p314 = pneg %p140
        %p315 = pneg %p137
        %p316 = pneg %p161
        %p317 = pneg %p158
        %p318 = pneg %p189
        %p319 = pneg %p186
        %s320 = smul.u32 8, %s25
        %p321 = scmp.lt.s32.totalorder %s26, 1
        %s322 = scalar_select %p321, %s26, 1
        %p323 = scmp.lt.s32.totalorder %s320, 7
        %s324 = scalar_select %p323, %s320, 7
        %s325 = smul.addr %s322, 8
        %s326 = sadd.s32 %s324, %s325
        %s327 = smul.addr %s326, 8
        %s328 = scalar_lea.vmem %s6, %s327
        %p329 = pneg %p217
        %p330 = pneg %p214
        %s331 = smul.u32 8, %s25
        %p332 = scmp.lt.s32.totalorder %s26, 1
        %s333 = scalar_select %p332, %s26, 1
        %p334 = scmp.lt.s32.totalorder %s331, 7
        %s335 = scalar_select %p334, %s331, 7
        %s336 = smul.addr %s333, 8
        %s337 = sadd.s32 %s335, %s336
        %s338 = smul.addr %s337, 8
        %s339 = scalar_lea.vmem %s7, %s338
        %s340 = smul.u32 8, %s25
        %p341 = scmp.lt.s32.totalorder %s26, 1
        %s342 = scalar_select %p341, %s26, 1
        %p343 = scmp.lt.s32.totalorder %s340, 7
        %s344 = scalar_select %p343, %s340, 7
        %s345 = smul.addr %s342, 8
        %s346 = sadd.s32 %s344, %s345
        %s347 = smul.addr %s346, 8
        %s348 = scalar_lea.vmem %s0, %s347
        %s349 = smul.u32 8, %s25
        %s350 = smul.u32 8, %s25
        %p351 = scmp.lt.s32.totalorder %s26, 1
        %s352 = scalar_select %p351, %s26, 1
        %p353 = scmp.lt.s32.totalorder %s350, 7
        %s354 = scalar_select %p353, %s350, 7
        %s355 = smul.addr %s352, 8
        %s356 = sadd.s32 %s354, %s355
        %s357 = smul.addr %s356, 8
        %s358 = scalar_lea.vmem %s6, %s357
        %s359 = smul.u32 8, %s25
        %s360 = smul.u32 8, %s25
        %p361 = scmp.lt.s32.totalorder %s26, 1
        %s362 = scalar_select %p361, %s26, 1
        %p363 = scmp.lt.s32.totalorder %s360, 7
        %s364 = scalar_select %p363, %s360, 7
        %s365 = smul.addr %s362, 8
        %s366 = sadd.s32 %s364, %s365
        %s367 = smul.addr %s366, 8
        %s368 = scalar_lea.vmem %s7, %s367
        %s369 = smul.u32 8, %s25
        %v370 = vld [vmem:[%s348] sm:$0xff]
        %v371 = vld [vmem:[%s348 + $0x8] sm:$0xff]
        %v372 = vld [vmem:[%s348 + $0x10] sm:$0xff]
        %v373 = vld [vmem:[%s348 + $0x18] sm:$0xff]
        %v374 = vld [vmem:[%s348 + $0x20] sm:$0xff]
        %v375 = vld [vmem:[%s348 + $0x28] sm:$0xff]
        %v376 = vld [vmem:[%s348 + $0x30] sm:$0xff]
        %v377 = vld [vmem:[%s348 + $0x38] sm:$0xff]
        %vm378 = vcmask 130048
        %v379 = vsel %vm378, %v370, 0.0
        %380 = vadd.xlane.f32.xlu0 %v379
        %v381 = vpop.xlane.xlu0 %380
        %v382 = vsel %vm378, %v371, 0.0
        %383 = vadd.xlane.f32.xlu0 %v382
        %v384 = vpop.xlane.xlu0 %383
        %v385 = vsel %vm378, %v372, 0.0
        %386 = vadd.xlane.f32.xlu0 %v385
        %v387 = vpop.xlane.xlu0 %386
        %v388 = vsel %vm378, %v373, 0.0
        %389 = vadd.xlane.f32.xlu0 %v388
        %v390 = vpop.xlane.xlu0 %389
        %v391 = vsel %vm378, %v374, 0.0
        %392 = vadd.xlane.f32.xlu0 %v391
        %v393 = vpop.xlane.xlu0 %392
        %v394 = vsel %vm378, %v375, 0.0
        %395 = vadd.xlane.f32.xlu0 %v394
        %v396 = vpop.xlane.xlu0 %395
        %v397 = vsel %vm378, %v376, 0.0
        %398 = vadd.xlane.f32.xlu0 %v397
        %v399 = vpop.xlane.xlu0 %398
        %v400 = vsel %vm378, %v377, 0.0
        %401 = vadd.xlane.f32.xlu0 %v400
        %v402 = vpop.xlane.xlu0 %401
        %v403 = vrcp.pop 16.0
        %v404 = vmul.f32 %v381, %v403
        %v405 = vmul.f32 %v384, %v403
        %v406 = vmul.f32 %v387, %v403
        %v407 = vmul.f32 %v390, %v403
        %v408 = vmul.f32 %v393, %v403
        %v409 = vmul.f32 %v396, %v403
        %v410 = vmul.f32 %v399, %v403
        %v411 = vmul.f32 %v402, %v403
        %v412 = vsub.f32 %v370, %v404
        %v413 = vsub.f32 %v371, %v405
        %v414 = vsub.f32 %v372, %v406
        %v415 = vsub.f32 %v373, %v407
        %v416 = vsub.f32 %v374, %v408
        %v417 = vsub.f32 %v375, %v409
        %v418 = vsub.f32 %v376, %v410
        %v419 = vsub.f32 %v377, %v411
        %v420 = vmul.f32 %v412, %v412
        %v421 = vmul.f32 %v413, %v413
        %v422 = vmul.f32 %v414, %v414
        %v423 = vmul.f32 %v415, %v415
        %v424 = vmul.f32 %v416, %v416
        %v425 = vmul.f32 %v417, %v417
        %v426 = vmul.f32 %v418, %v418
        %v427 = vmul.f32 %v419, %v419
        %v428 = vsel %vm378, %v420, 0.0
        %429 = vadd.xlane.f32.xlu0 %v428
        %v430 = vpop.xlane.xlu0 %429
        %v431 = vsel %vm378, %v421, 0.0
        %432 = vadd.xlane.f32.xlu0 %v431
        %v433 = vpop.xlane.xlu0 %432
        %v434 = vsel %vm378, %v422, 0.0
        %435 = vadd.xlane.f32.xlu0 %v434
        %v436 = vpop.xlane.xlu0 %435
        %v437 = vsel %vm378, %v423, 0.0
        %438 = vadd.xlane.f32.xlu0 %v437
        %v439 = vpop.xlane.xlu0 %438
        %v440 = vsel %vm378, %v424, 0.0
        %441 = vadd.xlane.f32.xlu0 %v440
        %v442 = vpop.xlane.xlu0 %441
        %v443 = vsel %vm378, %v425, 0.0
        %444 = vadd.xlane.f32.xlu0 %v443
        %v445 = vpop.xlane.xlu0 %444
        %v446 = vsel %vm378, %v426, 0.0
        %447 = vadd.xlane.f32.xlu0 %v446
        %v448 = vpop.xlane.xlu0 %447
        %v449 = vsel %vm378, %v427, 0.0
        %450 = vadd.xlane.f32.xlu0 %v449
        %v451 = vpop.xlane.xlu0 %450
        %v452 = vmul.f32 %v430, %v403
        %v453 = vmul.f32 %v433, %v403
        %v454 = vmul.f32 %v436, %v403
        %v455 = vmul.f32 %v439, %v403
        %v456 = vmul.f32 %v442, %v403
        %v457 = vmul.f32 %v445, %v403
        %v458 = vmul.f32 %v448, %v403
        %v459 = vmul.f32 %v451, %v403
        %v460 = vadd.f32 %v452, 1e-05
        %v461 = vadd.f32 %v453, 1e-05
        %v462 = vadd.f32 %v454, 1e-05
        %v463 = vadd.f32 %v455, 1e-05
        %v464 = vadd.f32 %v456, 1e-05
        %v465 = vadd.f32 %v457, 1e-05
        %v466 = vadd.f32 %v458, 1e-05
        %v467 = vadd.f32 %v459, 1e-05
        %v468 = vrsqrt.pop %v460
        %v469 = vrsqrt.pop %v461
        %v470 = vrsqrt.pop %v462
        %v471 = vrsqrt.pop %v463
        %v472 = vrsqrt.pop %v464
        %v473 = vrsqrt.pop %v465
        %v474 = vrsqrt.pop %v466
        %v475 = vrsqrt.pop %v467
        %v476 = vmul.f32 %v412, %v468
        %v477 = vmul.f32 %v413, %v469
        %v478 = vmul.f32 %v414, %v470
        %v479 = vmul.f32 %v415, %v471
        %v480 = vmul.f32 %v416, %v472
        %v481 = vmul.f32 %v417, %v473
        %v482 = vmul.f32 %v418, %v474
        %v483 = vmul.f32 %v419, %v475
        %v484 = vld [vmem:[%s1] sm:$0x1]
        %v485 = vlaneseq
        %v486 = vshrl.u32 %v485, 7
        %v487 = vsub.s32 0, %v486
        %v488 = vrot.slane %v484, %v487
        %v489 = vmul.f32 %v476, %v488
        %v490 = vmul.f32 %v477, %v488
        %v491 = vmul.f32 %v478, %v488
        %v492 = vmul.f32 %v479, %v488
        %v493 = vmul.f32 %v480, %v488
        %v494 = vmul.f32 %v481, %v488
        %v495 = vmul.f32 %v482, %v488
        %v496 = vmul.f32 %v483, %v488
        %v497 = vld [vmem:[%s1 + $0x1] sm:$0x1]
        %v498 = vlaneseq
        %v499 = vshrl.u32 %v498, 7
        %v500 = vsub.s32 0, %v499
        %v501 = vrot.slane %v497, %v500
        %v502 = vadd.f32 %v489, %v501
        %v503 = vadd.f32 %v490, %v501
        %v504 = vadd.f32 %v491, %v501
        %v505 = vadd.f32 %v492, %v501
        %v506 = vadd.f32 %v493, %v501
        %v507 = vadd.f32 %v494, %v501
        %v508 = vadd.f32 %v495, %v501
        %v509 = vadd.f32 %v496, %v501
        %v510 = vld [vmem:[#allocation2] sm:$0xff]
        %v511 = vld [vmem:[#allocation2 + $0x8] sm:$0xff]
        %v512 = vld [vmem:[#allocation4] sm:$0x1]
        %v514 = vlaneseq
        %v515 = vshrl.u32 %v514, 7
        %v516 = vsub.s32 0, %v515
        %v517 = vrot.slane %v512, %v516
        %v520 = vsel %vm378, %v502, 0
        %v523 = vsel %vm378, %v503, 0
        %v526 = vsel %vm378, %v504, 0
        %v529 = vsel %vm378, %v505, 0
        %v532 = vsel %vm378, %v506, 0
        %v535 = vsel %vm378, %v507, 0
        %v538 = vsel %vm378, %v508, 0
        %v541 = vsel %vm378, %v509, 0
        %543 = vmatprep.subr.mxu0 0.0
        %544 = vmatpush1.msra.mxu0 %v510
        %545 = vmatprep.subr.mxu0 0.0
        %546 = vmatpush1.msra.mxu0 %v511
        %547 = vmatprep.subr.mxu0 0.0
        %548 = vmatpush1.msra.mxu0 0.0
        %549 = vmatprep.subr.mxu0 0.0
        %550 = vmatpush1.msra.mxu0 0.0
        %551 = vmatprep.subr.mxu0 0.0
        %552 = vmatpush1.msra.mxu0 0.0
        %553 = vmatprep.subr.mxu0 0.0
        %554 = vmatpush1.msra.mxu0 0.0
        %555 = vmatprep.subr.mxu0 0.0
        %556 = vmatpush1.msra.mxu0 0.0
        %557 = vmatprep.subr.mxu0 0.0
        %558 = vmatpush1.msra.mxu0 0.0
        %559 = vmatprep.subr.mxu0 0.0
        %560 = vmatpush1.msra.mxu0 0.0
        %561 = vmatprep.subr.mxu0 0.0
        %562 = vmatpush1.msra.mxu0 0.0
        %563 = vmatprep.subr.mxu0 0.0
        %564 = vmatpush1.msra.mxu0 0.0
        %565 = vmatprep.subr.mxu0 0.0
        %566 = vmatpush1.msra.mxu0 0.0
        %567 = vmatprep.subr.mxu0 0.0
        %568 = vmatpush1.msra.mxu0 0.0
        %569 = vmatprep.subr.mxu0 0.0
        %570 = vmatpush1.msra.mxu0 0.0
        %571 = vmatprep.subr.mxu0 0.0
        %572 = vmatpush1.msra.mxu0 0.0
        %573 = vmatprep.subr.mxu0 0.0
        %574 = vmatpush1.msra.mxu0 0.0
        %575 = vmatprep.subr.mxu0 0.0
        %576 = vmatpush1.msra.mxu0 0.0
        %577 = vmatprep.subr.mxu0 0.0
        %578 = vmatpush1.msra.mxu0 0.0
        %579 = vmatprep.subr.mxu0 0.0
        %580 = vmatpush1.msra.mxu0 0.0
        %581 = vmatprep.subr.mxu0 0.0
        %582 = vmatpush1.msra.mxu0 0.0
        %583 = vmatprep.subr.mxu0 0.0
        %584 = vmatpush1.msra.mxu0 0.0
        %585 = vmatprep.subr.mxu0 0.0
        %586 = vmatpush1.msra.mxu0 0.0
        %587 = vmatprep.subr.mxu0 0.0
        %588 = vmatpush1.msra.mxu0 0.0
        %589 = vmatprep.subr.mxu0 0.0
        %590 = vmatpush1.msra.mxu0 0.0
        %591 = vmatprep.subr.mxu0 0.0
        %592 = vmatpush1.msra.mxu0 0.0
        %593 = vmatprep.subr.mxu0 0.0
        %594 = vmatpush1.msra.mxu0 0.0
        %595 = vmatprep.subr.mxu0 0.0
        %596 = vmatpush1.msra.mxu0 0.0
        %597 = vmatprep.subr.mxu0 0.0
        %598 = vmatpush1.msra.mxu0 0.0
        %599 = vmatprep.subr.mxu0 0.0
        %600 = vmatpush1.msra.mxu0 0.0
        %601 = vmatprep.subr.mxu0 0.0
        %602 = vmatpush1.msra.mxu0 0.0
        %603 = vmatprep.subr.mxu0 0.0
        %604 = vmatpush1.msra.mxu0 0.0
        %605 = vmatprep.subr.mxu0 0.0
        %606 = vmatpush1.msra.mxu0 0.0
        %607 = vmatprep.mubr.f32.mxu0 0.0
        %608 = vmatmul.mubr.f32.gmra.mrb[0].mxu0 %v520
        %v609 = vpop.f32.mrb[0].mxu0
        %v610 = vadd.f32 %v517, %v609
        %v611 = vpop.f32.mrb[0].mxu0
        %612 = vmatprep.mubr.f32.mxu0 0.0
        %613 = vmatmul.mubr.f32.gmra.mrb[0].mxu0 %v523
        %v614 = vpop.f32.mrb[0].mxu0
        %v615 = vadd.f32 %v517, %v614
        %v616 = vpop.f32.mrb[0].mxu0
        %617 = vmatprep.mubr.f32.mxu0 0.0
        %618 = vmatmul.mubr.f32.gmra.mrb[0].mxu0 %v526
        %v619 = vpop.f32.mrb[0].mxu0
        %v620 = vadd.f32 %v517, %v619
        %v621 = vpop.f32.mrb[0].mxu0
        %622 = vmatprep.mubr.f32.mxu0 0.0
        %623 = vmatmul.mubr.f32.gmra.mrb[0].mxu0 %v529
        %v624 = vpop.f32.mrb[0].mxu0
        %v625 = vadd.f32 %v517, %v624
        %v626 = vpop.f32.mrb[0].mxu0
        %627 = vmatprep.mubr.f32.mxu0 0.0
        %628 = vmatmul.mubr.f32.gmra.mrb[0].mxu0 %v532
        %v629 = vpop.f32.mrb[0].mxu0
        %v630 = vadd.f32 %v517, %v629
        %v631 = vpop.f32.mrb[0].mxu0
        %632 = vmatprep.mubr.f32.mxu0 0.0
        %633 = vmatmul.mubr.f32.gmra.mrb[0].mxu0 %v535
        %v634 = vpop.f32.mrb[0].mxu0
        %v635 = vadd.f32 %v517, %v634
        %v636 = vpop.f32.mrb[0].mxu0
        %637 = vmatprep.mubr.f32.mxu0 0.0
        %638 = vmatmul.mubr.f32.gmra.mrb[0].mxu0 %v538
        %v639 = vpop.f32.mrb[0].mxu0
        %v640 = vadd.f32 %v517, %v639
        %v641 = vpop.f32.mrb[0].mxu0
        %642 = vmatprep.mubr.f32.mxu0 0.0
        %643 = vmatmul.mubr.f32.gmra.mrb[0].mxu0 %v541
        %v644 = vpop.f32.mrb[0].mxu0
        %v645 = vadd.f32 %v517, %v644
        %v646 = vpop.f32.mrb[0].mxu0
        %647 = vdwg.mxu0
        %v648 = vld [vmem:[%s3] sm:$0xff]
        %v649 = vld [vmem:[%s3 + $0x8] sm:$0xff]
        %v650 = vld [vmem:[%s5] sm:$0x1]
        %v652 = vlaneseq
        %v653 = vshrl.u32 %v652, 7
        %v654 = vsub.s32 0, %v653
        %v655 = vrot.slane %v650, %v654
        %657 = vmatprep.subr.mxu0 0.0
        %658 = vmatpush1.msra.mxu0 %v648
        %659 = vmatprep.subr.mxu0 0.0
        %660 = vmatpush1.msra.mxu0 %v649
        %661 = vmatprep.subr.mxu0 0.0
        %662 = vmatpush1.msra.mxu0 0.0
        %663 = vmatprep.subr.mxu0 0.0
        %664 = vmatpush1.msra.mxu0 0.0
        %665 = vmatprep.subr.mxu0 0.0
        %666 = vmatpush1.msra.mxu0 0.0
        %667 = vmatprep.subr.mxu0 0.0
        %668 = vmatpush1.msra.mxu0 0.0
        %669 = vmatprep.subr.mxu0 0.0
        %670 = vmatpush1.msra.mxu0 0.0
        %671 = vmatprep.subr.mxu0 0.0
        %672 = vmatpush1.msra.mxu0 0.0
        %673 = vmatprep.subr.mxu0 0.0
        %674 = vmatpush1.msra.mxu0 0.0
        %675 = vmatprep.subr.mxu0 0.0
        %676 = vmatpush1.msra.mxu0 0.0
        %677 = vmatprep.subr.mxu0 0.0
        %678 = vmatpush1.msra.mxu0 0.0
        %679 = vmatprep.subr.mxu0 0.0
        %680 = vmatpush1.msra.mxu0 0.0
        %681 = vmatprep.subr.mxu0 0.0
        %682 = vmatpush1.msra.mxu0 0.0
        %683 = vmatprep.subr.mxu0 0.0
        %684 = vmatpush1.msra.mxu0 0.0
        %685 = vmatprep.subr.mxu0 0.0
        %686 = vmatpush1.msra.mxu0 0.0
        %687 = vmatprep.subr.mxu0 0.0
        %688 = vmatpush1.msra.mxu0 0.0
        %689 = vmatprep.subr.mxu0 0.0
        %690 = vmatpush1.msra.mxu0 0.0
        %691 = vmatprep.subr.mxu0 0.0
        %692 = vmatpush1.msra.mxu0 0.0
        %693 = vmatprep.subr.mxu0 0.0
        %694 = vmatpush1.msra.mxu0 0.0
        %695 = vmatprep.subr.mxu0 0.0
        %696 = vmatpush1.msra.mxu0 0.0
        %697 = vmatprep.subr.mxu0 0.0
        %698 = vmatpush1.msra.mxu0 0.0
        %699 = vmatprep.subr.mxu0 0.0
        %700 = vmatpush1.msra.mxu0 0.0
        %701 = vmatprep.subr.mxu0 0.0
        %702 = vmatpush1.msra.mxu0 0.0
        %703 = vmatprep.subr.mxu0 0.0
        %704 = vmatpush1.msra.mxu0 0.0
        %705 = vmatprep.subr.mxu0 0.0
        %706 = vmatpush1.msra.mxu0 0.0
        %707 = vmatprep.subr.mxu0 0.0
        %708 = vmatpush1.msra.mxu0 0.0
        %709 = vmatprep.subr.mxu0 0.0
        %710 = vmatpush1.msra.mxu0 0.0
        %711 = vmatprep.subr.mxu0 0.0
        %712 = vmatpush1.msra.mxu0 0.0
        %713 = vmatprep.subr.mxu0 0.0
        %714 = vmatpush1.msra.mxu0 0.0
        %715 = vmatprep.subr.mxu0 0.0
        %716 = vmatpush1.msra.mxu0 0.0
        %717 = vmatprep.subr.mxu0 0.0
        %718 = vmatpush1.msra.mxu0 0.0
        %719 = vmatprep.subr.mxu0 0.0
        %720 = vmatpush1.msra.mxu0 0.0
        %721 = vmatprep.mubr.f32.mxu0 0.0
        %722 = vmatmul.mubr.f32.gmra.mrb[0].mxu0 %v520
        %v723 = vpop.f32.mrb[0].mxu0
        %v724 = vadd.f32 %v655, %v723
        %v725 = vpop.f32.mrb[0].mxu0
        %726 = vmatprep.mubr.f32.mxu0 0.0
        %727 = vmatmul.mubr.f32.gmra.mrb[0].mxu0 %v523
        %v728 = vpop.f32.mrb[0].mxu0
        %v729 = vadd.f32 %v655, %v728
        %v730 = vpop.f32.mrb[0].mxu0
        %731 = vmatprep.mubr.f32.mxu0 0.0
        %732 = vmatmul.mubr.f32.gmra.mrb[0].mxu0 %v526
        %v733 = vpop.f32.mrb[0].mxu0
        %v734 = vadd.f32 %v655, %v733
        %v735 = vpop.f32.mrb[0].mxu0
        %736 = vmatprep.mubr.f32.mxu0 0.0
        %737 = vmatmul.mubr.f32.gmra.mrb[0].mxu0 %v529
        %v738 = vpop.f32.mrb[0].mxu0
        %v739 = vadd.f32 %v655, %v738
        %v740 = vpop.f32.mrb[0].mxu0
        %741 = vmatprep.mubr.f32.mxu0 0.0
        %742 = vmatmul.mubr.f32.gmra.mrb[0].mxu0 %v532
        %v743 = vpop.f32.mrb[0].mxu0
        %v744 = vadd.f32 %v655, %v743
        %v745 = vpop.f32.mrb[0].mxu0
        %746 = vmatprep.mubr.f32.mxu0 0.0
        %747 = vmatmul.mubr.f32.gmra.mrb[0].mxu0 %v535
        %v748 = vpop.f32.mrb[0].mxu0
        %v749 = vadd.f32 %v655, %v748
        %v750 = vpop.f32.mrb[0].mxu0
        %751 = vmatprep.mubr.f32.mxu0 0.0
        %752 = vmatmul.mubr.f32.gmra.mrb[0].mxu0 %v538
        %v753 = vpop.f32.mrb[0].mxu0
        %v754 = vadd.f32 %v655, %v753
        %v755 = vpop.f32.mrb[0].mxu0
        %756 = vmatprep.mubr.f32.mxu0 0.0
        %757 = vmatmul.mubr.f32.gmra.mrb[0].mxu0 %v541
        %v758 = vpop.f32.mrb[0].mxu0
        %v759 = vadd.f32 %v655, %v758
        %v760 = vpop.f32.mrb[0].mxu0
        %761 = vdwg.mxu0
        %762 = vst.msk [vmem:[%s358] sm:$0xff] %vm378, %v610
        %763 = vst.msk [vmem:[%s358 + $0x8] sm:$0xff] %vm378, %v615
        %764 = vst.msk [vmem:[%s358 + $0x10] sm:$0xff] %vm378, %v620
        %765 = vst.msk [vmem:[%s358 + $0x18] sm:$0xff] %vm378, %v625
        %766 = vst.msk [vmem:[%s358 + $0x20] sm:$0xff] %vm378, %v630
        %767 = vst.msk [vmem:[%s358 + $0x28] sm:$0xff] %vm378, %v635
        %768 = vst.msk [vmem:[%s358 + $0x30] sm:$0xff] %vm378, %v640
        %769 = vst.msk [vmem:[%s358 + $0x38] sm:$0xff] %vm378, %v645
        %vm770 = vcmask 261120
        %771 = vst.msk [vmem:[%s368] sm:$0xff] %vm770, %v724
        %772 = vst.msk [vmem:[%s368 + $0x8] sm:$0xff] %vm770, %v729
        %773 = vst.msk [vmem:[%s368 + $0x10] sm:$0xff] %vm770, %v734
        %774 = vst.msk [vmem:[%s368 + $0x18] sm:$0xff] %vm770, %v739
        %775 = vst.msk [vmem:[%s368 + $0x20] sm:$0xff] %vm770, %v744
        %776 = vst.msk [vmem:[%s368 + $0x28] sm:$0xff] %vm770, %v749
        %777 = vst.msk [vmem:[%s368 + $0x30] sm:$0xff] %vm770, %v754
        %778 = vst.msk [vmem:[%s368 + $0x38] sm:$0xff] %vm770, %v759
        %s779 = smul.u32 8, %s25
        %p780 = scmp.lt.s32.totalorder %s26, 1
        %s781 = scalar_select %p780, %s26, 1
        %p782 = scmp.lt.s32.totalorder %s779, 7
        %s783 = scalar_select %p782, %s779, 7
        %s784 = smul.addr %s781, 8
        %s785 = sadd.s32 %s783, %s784
        %s786 = smul.addr %s785, 8
        %s787 = scalar_lea.vmem %s6, %s786
        %s788 = smul.u32 8, %s25
        %p789 = scmp.lt.s32.totalorder %s26, 1
        %s790 = scalar_select %p789, %s26, 1
        %p791 = scmp.lt.s32.totalorder %s788, 7
        %s792 = scalar_select %p791, %s788, 7
        %s793 = smul.addr %s790, 8
        %s794 = sadd.s32 %s792, %s793
        %s795 = smul.addr %s794, 8
        %s796 = scalar_lea.vmem %s7, %s795
        // Predicated region
        $region53: #{_lambda_.3} parent=43 // pred_check
          %p797 = pneg %p186
        $region54: #{_lambda_.3} parent=43 // pred_check_branch
          %799 = sbr.rel (%p797) target = $region56
        $region55: #{_lambda_.3} parent=43 // pred_region
          %s800 = smul.u32 8, %s25
        $region56: #{_lambda_.3} parent=43 // pred_fallthru
          _
        // Predicated region
        $region57: #{_lambda_.3} parent=43 // pred_check
          %p801 = pneg %p214
        $region58: #{_lambda_.3} parent=43 // pred_check_branch
          %803 = sbr.rel (%p801) target = $region60
        $region59: #{_lambda_.3} parent=43 // pred_region
          %s804 = smul.u32 8, %s25
        $region60: #{_lambda_.3} parent=43 // pred_fallthru
          _
      $region44: #{_lambda_.3} parent=5 // pred_fallthru
        _
      %p805 = scmp.le.s32.totalorder 2, %s16
      // Predicated region
      $region61: #{_lambda_.3} parent=5 // pred_check
        %p806 = pneg %p805
      $region62: #{_lambda_.3} parent=5 // pred_check_branch
        %808 = sbr.rel (%p806) target = $region64
      $region63: #{_lambda_.3} parent=5 // pred_region
        %s809 = ssub.s32 %s16, 2
        // Predicated region
        $region65: #{_lambda_.3} parent=63 // pred_check
          %p810 = pneg %p192
        $region66: #{_lambda_.3} parent=63 // pred_check_branch
          %812 = sbr.rel (%p810) target = $region68
        $region67: #{_lambda_.3} parent=63 // pred_region
          %s813 = smul.u32 8, %s27
          %p814 = scmp.lt.s32.totalorder %s28, 1
          %s815 = scalar_select %p814, %s28, 1
          %p816 = scmp.lt.s32.totalorder %s813, 7
          %s817 = scalar_select %p816, %s813, 7
          %s818 = smul.addr %s815, 8
          %s819 = sadd.s32 %s817, %s818
          %s820 = smul.addr %s819, 8
          %s821 = scalar_lea.vmem %s6, %s820
        $region68: #{_lambda_.3} parent=63 // pred_fallthru
          _
        // Predicated region
        $region69: #{_lambda_.3} parent=63 // pred_check
          %p822 = pneg %p220
        $region70: #{_lambda_.3} parent=63 // pred_check_branch
          %824 = sbr.rel (%p822) target = $region72
        $region71: #{_lambda_.3} parent=63 // pred_region
          %s825 = smul.u32 8, %s27
          %p826 = scmp.lt.s32.totalorder %s28, 1
          %s827 = scalar_select %p826, %s28, 1
          %p828 = scmp.lt.s32.totalorder %s825, 7
          %s829 = scalar_select %p828, %s825, 7
          %s830 = smul.addr %s827, 8
          %s831 = sadd.s32 %s829, %s830
          %s832 = smul.addr %s831, 8
          %s833 = scalar_lea.vmem %s7, %s832
        $region72: #{_lambda_.3} parent=63 // pred_fallthru
          _
      $region64: #{_lambda_.3} parent=5 // pred_fallthru
        _
    $region6: #{_lambda_.3} parent=1 // loop_footer
      %s20 = sadd.s32 1, %s16
    $region7: #{_lambda_.3} parent=1 // loop_footer_branch
      %15 = sbr.rel target = $region3
    $region8: #{_lambda_.3} parent=1 // loop_exit
      _
    %834 = vsyncpa [#allocation3], 1
    %s835 = scalar_lea.sflag [#allocation3], 1
    %836 = vsyncpa %s835, 1
    %837 = vsyncpa [#allocation5], 1

// kernel: _lambda_.5
$region0: #{_lambda_.5}
  #allocation0 [shape = 'u32[]', space=smem, size = 0x4, offset = 0x4, fixed_abs, tag = 'smem constant byte address 0x4 - core index']
  #allocation1 [shape = 'u32[144,128]{1,0:T(1,128)}', space=vmem, size = 0x12000, scoped, tag = 'internal scratch']
  %s0 = inlined_call_operand.vmem [shape: f32[2,64,16], index: 0, kind: input, shape index: {}]
  %s1 = inlined_call_operand.vmem [shape: f32[2,64,16], index: 1, kind: input, shape index: {}]
  %s2 = inlined_call_operand.vmem [shape: f32[16,16], index: 2, kind: input, shape index: {}]
  %s3 = inlined_call_operand.vmem [shape: f32[4,16], index: 3, kind: input, shape index: {}]
  %s4 = inlined_call_operand.vmem [shape: f32[16,32], index: 4, kind: input, shape index: {}]
  %s5 = inlined_call_operand.vmem [shape: f32[1,32], index: 5, kind: input, shape index: {}]
  %s6 = inlined_call_operand.vmem [shape: f32[32,16], index: 6, kind: input, shape index: {}]
  %s7 = inlined_call_operand.vmem [shape: f32[2,64,16], index: 7, kind: output, shape index: {}]
  %s8 = sld [smem:[#allocation0]]
  $region61: #{_lambda_.5} parent=0
    _
  %s10 = ssub.s32 1, %s8
  %s11 = scalar_select 0, %s10, %s8
  loop: start=0, step=1, limit=4
  $region2: #{_lambda_.5} parent=0 // loop_pre_header
    _
  $region3: #{_lambda_.5} parent=0 // loop_header
    %s13 = sphi 0, %s17
    %p14 = scmp.ge.s32.totalorder %s13, 4
    %s20 = sphi 0, %s32
    %s21 = sphi 0, %s28
    %s22 = sphi 0, %s20
    %s23 = sphi 0, %s21
    %s24 = sphi 0, %s22
    %s25 = sphi 0, %s23
    %s37 = sphi 0, %s39
    %s40 = sphi 0, %s37
    %s41 = sphi 0, %s40
    %s57 = sphi 0, %s41
    %s65 = sphi 0, %s67
    %s68 = sphi 0, %s65
    %s69 = sphi 0, %s68
    %s85 = sphi 0, %s69
    %s89 = sphi 0, %s89
    %s91 = sphi 0, %s89
    %s92 = sphi 0, %s91
    %s106 = sphi 0, %s92
    %s110 = sphi 0, %s110
    %s112 = sphi 0, %s110
    %s113 = sphi 0, %s112
    %s127 = sphi 0, %s113
    %s131 = sphi 0, %s131
    %s133 = sphi 0, %s131
    %s134 = sphi 0, %s133
    %s148 = sphi 0, %s134
    %s152 = sphi 0, %s152
    %s154 = sphi 0, %s152
    %s155 = sphi 0, %s154
    %s169 = sphi 0, %s155
    %s173 = sphi 0, %s173
    %s175 = sphi 0, %s173
    %s176 = sphi 0, %s175
    %s190 = sphi 0, %s176
    %s198 = sphi 0, %s200
    %s201 = sphi 0, %s198
    %s202 = sphi 0, %s201
    %s218 = sphi 0, %s202
  $region4: #{_lambda_.5} parent=0 // loop_header_branch
    %16 = sbr.rel (%p14) target = $region8
  $region5: #{_lambda_.5} parent=0 // loop_body
    %s18 = ssub.s32 %s13, 1
    %s19 = ssub.s32 %s13, 2
    %s26 = sadd.s32 1, %s21
    %p27 = scmp.ge.s32.totalorder %s26, 2
    %s28 = scalar_select %p27, 0, %s26
    %s29 = sadd.s32 1, %s20
    %s30 = scalar_select %p27, %s29, %s20
    %p31 = scmp.ge.s32.totalorder %s30, 1
    %s32 = scalar_select %p31, 0, %s30
    %s33 = ssub.s32 %s21, %s28
    %s34 = ssub.s32 %s20, %s32
    %s35 = sor.u32 %s33, %s34
    %p36 = scmp.eq.s32.totalorder %s35, 0
    %s38 = sadd.s32 %s37, 1
    %s39 = scalar_select %p36, %s37, %s38
    %p42 = pneg %p36
    %p43 = scmp.eq.s32.totalorder %s13, 1
    %p44 = por %p42, %p43
    %p45 = scmp.ne.s32.totalorder %s37, %s40
    %p46 = scmp.eq.s32.totalorder %s13, 0
    %p47 = por %p45, %p46
    %p48 = scmp.ne.s32.totalorder %s37, %s40
    %p49 = scmp.eq.s32.totalorder %s18, 1
    %p50 = por %p48, %p49
    %p51 = scmp.ne.s32.totalorder %s40, %s41
    %p52 = scmp.eq.s32.totalorder %s18, 0
    %p53 = por %p51, %p52
    %p54 = scmp.ne.s32.totalorder %s40, %s41
    %p55 = scmp.eq.s32.totalorder %s19, 1
    %p56 = por %p54, %p55
    %p58 = scmp.ne.s32.totalorder %s41, %s57
    %p59 = scmp.eq.s32.totalorder %s19, 0
    %p60 = por %p58, %p59
    %s61 = ssub.s32 %s21, %s28
    %s62 = ssub.s32 %s20, %s32
    %s63 = sor.u32 %s61, %s62
    %p64 = scmp.eq.s32.totalorder %s63, 0
    %s66 = sadd.s32 %s65, 1
    %s67 = scalar_select %p64, %s65, %s66
    %p70 = pneg %p64
    %p71 = scmp.eq.s32.totalorder %s13, 1
    %p72 = por %p70, %p71
    %p73 = scmp.ne.s32.totalorder %s65, %s68
    %p74 = scmp.eq.s32.totalorder %s13, 0
    %p75 = por %p73, %p74
    %p76 = scmp.ne.s32.totalorder %s65, %s68
    %p77 = scmp.eq.s32.totalorder %s18, 1
    %p78 = por %p76, %p77
    %p79 = scmp.ne.s32.totalorder %s68, %s69
    %p80 = scmp.eq.s32.totalorder %s18, 0
    %p81 = por %p79, %p80
    %p82 = scmp.ne.s32.totalorder %s68, %s69
    %p83 = scmp.eq.s32.totalorder %s19, 1
    %p84 = por %p82, %p83
    %p86 = scmp.ne.s32.totalorder %s69, %s85
    %p87 = scmp.eq.s32.totalorder %s19, 0
    %p88 = por %p86, %p87
    %s90 = sadd.s32 %s89, 1
    %p93 = scmp.eq.s32.totalorder %s13, 1
    %p94 = scmp.ne.s32.totalorder %s89, %s91
    %p95 = scmp.eq.s32.totalorder %s13, 0
    %p96 = por %p94, %p95
    %p97 = scmp.ne.s32.totalorder %s89, %s91
    %p98 = scmp.eq.s32.totalorder %s18, 1
    %p99 = por %p97, %p98
    %p100 = scmp.ne.s32.totalorder %s91, %s92
    %p101 = scmp.eq.s32.totalorder %s18, 0
    %p102 = por %p100, %p101
    %p103 = scmp.ne.s32.totalorder %s91, %s92
    %p104 = scmp.eq.s32.totalorder %s19, 1
    %p105 = por %p103, %p104
    %p107 = scmp.ne.s32.totalorder %s92, %s106
    %p108 = scmp.eq.s32.totalorder %s19, 0
    %p109 = por %p107, %p108
    %s111 = sadd.s32 %s110, 1
    %p114 = scmp.eq.s32.totalorder %s13, 1
    %p115 = scmp.ne.s32.totalorder %s110, %s112
    %p116 = scmp.eq.s32.totalorder %s13, 0
    %p117 = por %p115, %p116
    %p118 = scmp.ne.s32.totalorder %s110, %s112
    %p119 = scmp.eq.s32.totalorder %s18, 1
    %p120 = por %p118, %p119
    %p121 = scmp.ne.s32.totalorder %s112, %s113
    %p122 = scmp.eq.s32.totalorder %s18, 0
    %p123 = por %p121, %p122
    %p124 = scmp.ne.s32.totalorder %s112, %s113
    %p125 = scmp.eq.s32.totalorder %s19, 1
    %p126 = por %p124, %p125
    %p128 = scmp.ne.s32.totalorder %s113, %s127
    %p129 = scmp.eq.s32.totalorder %s19, 0
    %p130 = por %p128, %p129
    %s132 = sadd.s32 %s131, 1
    %p135 = scmp.eq.s32.totalorder %s13, 1
    %p136 = scmp.ne.s32.totalorder %s131, %s133
    %p137 = scmp.eq.s32.totalorder %s13, 0
    %p138 = por %p136, %p137
    %p139 = scmp.ne.s32.totalorder %s131, %s133
    %p140 = scmp.eq.s32.totalorder %s18, 1
    %p141 = por %p139, %p140
    %p142 = scmp.ne.s32.totalorder %s133, %s134
    %p143 = scmp.eq.s32.totalorder %s18, 0
    %p144 = por %p142, %p143
    %p145 = scmp.ne.s32.totalorder %s133, %s134
    %p146 = scmp.eq.s32.totalorder %s19, 1
    %p147 = por %p145, %p146
    %p149 = scmp.ne.s32.totalorder %s134, %s148
    %p150 = scmp.eq.s32.totalorder %s19, 0
    %p151 = por %p149, %p150
    %s153 = sadd.s32 %s152, 1
    %p156 = scmp.eq.s32.totalorder %s13, 1
    %p157 = scmp.ne.s32.totalorder %s152, %s154
    %p158 = scmp.eq.s32.totalorder %s13, 0
    %p159 = por %p157, %p158
    %p160 = scmp.ne.s32.totalorder %s152, %s154
    %p161 = scmp.eq.s32.totalorder %s18, 1
    %p162 = por %p160, %p161
    %p163 = scmp.ne.s32.totalorder %s154, %s155
    %p164 = scmp.eq.s32.totalorder %s18, 0
    %p165 = por %p163, %p164
    %p166 = scmp.ne.s32.totalorder %s154, %s155
    %p167 = scmp.eq.s32.totalorder %s19, 1
    %p168 = por %p166, %p167
    %p170 = scmp.ne.s32.totalorder %s155, %s169
    %p171 = scmp.eq.s32.totalorder %s19, 0
    %p172 = por %p170, %p171
    %s174 = sadd.s32 %s173, 1
    %p177 = scmp.eq.s32.totalorder %s13, 1
    %p178 = scmp.ne.s32.totalorder %s173, %s175
    %p179 = scmp.eq.s32.totalorder %s13, 0
    %p180 = por %p178, %p179
    %p181 = scmp.ne.s32.totalorder %s173, %s175
    %p182 = scmp.eq.s32.totalorder %s18, 1
    %p183 = por %p181, %p182
    %p184 = scmp.ne.s32.totalorder %s175, %s176
    %p185 = scmp.eq.s32.totalorder %s18, 0
    %p186 = por %p184, %p185
    %p187 = scmp.ne.s32.totalorder %s175, %s176
    %p188 = scmp.eq.s32.totalorder %s19, 1
    %p189 = por %p187, %p188
    %p191 = scmp.ne.s32.totalorder %s176, %s190
    %p192 = scmp.eq.s32.totalorder %s19, 0
    %p193 = por %p191, %p192
    %s194 = ssub.s32 %s21, %s28
    %s195 = ssub.s32 %s20, %s32
    %s196 = sor.u32 %s194, %s195
    %p197 = scmp.eq.s32.totalorder %s196, 0
    %s199 = sadd.s32 %s198, 1
    %s200 = scalar_select %p197, %s198, %s199
    %p203 = pneg %p197
    %p204 = scmp.eq.s32.totalorder %s13, 1
    %p205 = por %p203, %p204
    %p206 = scmp.ne.s32.totalorder %s198, %s201
    %p207 = scmp.eq.s32.totalorder %s13, 0
    %p208 = por %p206, %p207
    %p209 = scmp.ne.s32.totalorder %s198, %s201
    %p210 = scmp.eq.s32.totalorder %s18, 1
    %p211 = por %p209, %p210
    %p212 = scmp.ne.s32.totalorder %s201, %s202
    %p213 = scmp.eq.s32.totalorder %s18, 0
    %p214 = por %p212, %p213
    %p215 = scmp.ne.s32.totalorder %s201, %s202
    %p216 = scmp.eq.s32.totalorder %s19, 1
    %p217 = por %p215, %p216
    %p219 = scmp.ne.s32.totalorder %s202, %s218
    %p220 = scmp.eq.s32.totalorder %s19, 0
    %p221 = por %p219, %p220
    %p222 = scmp.le.s32.totalorder 1, %s13
    %p223 = scmp.lt.s32.totalorder %s13, 3
    %p224 = pnand %p222, %p223
    %p225 = pneg %p224
    // Predicated region
    $region9: #{_lambda_.5} parent=5 // pred_check
      _
    $region10: #{_lambda_.5} parent=5 // pred_check_branch
      %227 = sbr.rel (%p224) target = $region12
    $region11: #{_lambda_.5} parent=5 // pred_region
      %s228 = ssub.s32 %s13, 1
      // Predicated region
      $region13: #{_lambda_.5} parent=11 // pred_check
        %p229 = pneg %p102
      $region14: #{_lambda_.5} parent=11 // pred_check_branch
        %231 = sbr.rel (%p229) target = $region16
      $region15: #{_lambda_.5} parent=11 // pred_region
        _
      $region16: #{_lambda_.5} parent=11 // pred_fallthru
        _
      // Predicated region
      $region17: #{_lambda_.5} parent=11 // pred_check
        %p232 = pneg %p123
      $region18: #{_lambda_.5} parent=11 // pred_check_branch
        %234 = sbr.rel (%p232) target = $region20
      $region19: #{_lambda_.5} parent=11 // pred_region
        _
      $region20: #{_lambda_.5} parent=11 // pred_fallthru
        _
      // Predicated region
      $region21: #{_lambda_.5} parent=11 // pred_check
        %p235 = pneg %p144
      $region22: #{_lambda_.5} parent=11 // pred_check_branch
        %237 = sbr.rel (%p235) target = $region24
      $region23: #{_lambda_.5} parent=11 // pred_region
        _
      $region24: #{_lambda_.5} parent=11 // pred_fallthru
        _
      // Predicated region
      $region25: #{_lambda_.5} parent=11 // pred_check
        %p238 = pneg %p165
      $region26: #{_lambda_.5} parent=11 // pred_check_branch
        %240 = sbr.rel (%p238) target = $region28
      $region27: #{_lambda_.5} parent=11 // pred_region
        _
      $region28: #{_lambda_.5} parent=11 // pred_fallthru
        _
      // Predicated region
      $region29: #{_lambda_.5} parent=11 // pred_check
        %p241 = pneg %p186
      $region30: #{_lambda_.5} parent=11 // pred_check_branch
        %243 = sbr.rel (%p241) target = $region32
      $region31: #{_lambda_.5} parent=11 // pred_region
        _
      $region32: #{_lambda_.5} parent=11 // pred_fallthru
        _
    $region12: #{_lambda_.5} parent=5 // pred_fallthru
      _
    %p244 = scmp.lt.s32.totalorder %s13, 2
    // Predicated region
    $region33: #{_lambda_.5} parent=5 // pred_check
      %p245 = pneg %p244
    $region34: #{_lambda_.5} parent=5 // pred_check_branch
      %247 = sbr.rel (%p245) target = $region36
    $region35: #{_lambda_.5} parent=5 // pred_region
      // Predicated region
      $region37: #{_lambda_.5} parent=35 // pred_check
        %p248 = pneg %p47
      $region38: #{_lambda_.5} parent=35 // pred_check_branch
        %250 = sbr.rel (%p248) target = $region40
      $region39: #{_lambda_.5} parent=35 // pred_region
        %s251 = smul.u32 8, %s20
        %p252 = scmp.lt.s32.totalorder %s21, 1
        %s253 = scalar_select %p252, %s21, 1
        %p254 = scmp.lt.s32.totalorder %s251, 7
        %s255 = scalar_select %p254, %s251, 7
        %s256 = smul.addr %s253, 8
        %s257 = sadd.s32 %s255, %s256
        %s258 = smul.addr %s257, 8
        %s259 = scalar_lea.vmem %s0, %s258
        %s260 = smul.u32 8, %s20
      $region40: #{_lambda_.5} parent=35 // pred_fallthru
        _
      // Predicated region
      $region41: #{_lambda_.5} parent=35 // pred_check
        %p261 = pneg %p75
      $region42: #{_lambda_.5} parent=35 // pred_check_branch
        %263 = sbr.rel (%p261) target = $region44
      $region43: #{_lambda_.5} parent=35 // pred_region
        %s264 = smul.u32 8, %s20
        %p265 = scmp.lt.s32.totalorder %s21, 1
        %s266 = scalar_select %p265, %s21, 1
        %p267 = scmp.lt.s32.totalorder %s264, 7
        %s268 = scalar_select %p267, %s264, 7
        %s269 = smul.addr %s266, 8
        %s270 = sadd.s32 %s268, %s269
        %s271 = smul.addr %s270, 8
        %s272 = scalar_lea.vmem %s1, %s271
        %s273 = smul.u32 8, %s20
      $region44: #{_lambda_.5} parent=35 // pred_fallthru
        _
    $region36: #{_lambda_.5} parent=5 // pred_fallthru
      _
    %p274 = scmp.le.s32.totalorder 1, %s13
    %p275 = scmp.lt.s32.totalorder %s13, 3
    %p276 = pnand %p274, %p275
    %p277 = pneg %p276
    // Predicated region
    $region45: #{_lambda_.5} parent=5 // pred_check
      _
    $region46: #{_lambda_.5} parent=5 // pred_check_branch
      %279 = sbr.rel (%p276) target = $region48
    $region47: #{_lambda_.5} parent=5 // pred_region
      %s280 = ssub.s32 %s13, 1
      %s281 = smul.u32 8, %s22
      %p282 = scmp.lt.s32.totalorder %s23, 1
      %s283 = scalar_select %p282, %s23, 1
      %p284 = scmp.lt.s32.totalorder %s281, 7
      %s285 = scalar_select %p284, %s281, 7
      %s286 = smul.addr %s283, 8
      %s287 = sadd.s32 %s285, %s286
      %s288 = smul.addr %s287, 8
      %s289 = scalar_lea.vmem %s0, %s288
      %p290 = pneg %p53
      %p291 = pneg %p50
      %s292 = smul.u32 8, %s22
      %p293 = scmp.lt.s32.totalorder %s23, 1
      %s294 = scalar_select %p293, %s23, 1
      %p295 = scmp.lt.s32.totalorder %s292, 7
      %s296 = scalar_select %p295, %s292, 7
      %s297 = smul.addr %s294, 8
      %s298 = sadd.s32 %s296, %s297
      %s299 = smul.addr %s298, 8
      %s300 = scalar_lea.vmem %s1, %s299
      %p301 = pneg %p81
      %p302 = pneg %p78
      %p303 = pneg %p102
      %p304 = pneg %p99
      %p305 = pneg %p123
      %p306 = pneg %p120
      %p307 = pneg %p144
      %p308 = pneg %p141
      %p309 = pneg %p165
      %p310 = pneg %p162
      %p311 = pneg %p186
      %p312 = pneg %p183
      %p313 = pneg %p214
      %p314 = pneg %p211
      %s315 = smul.u32 8, %s22
      %p316 = scmp.lt.s32.totalorder %s23, 1
      %s317 = scalar_select %p316, %s23, 1
      %p318 = scmp.lt.s32.totalorder %s315, 7
      %s319 = scalar_select %p318, %s315, 7
      %s320 = smul.addr %s317, 8
      %s321 = sadd.s32 %s319, %s320
      %s322 = smul.addr %s321, 8
      %s323 = scalar_lea.vmem %s7, %s322
      %s324 = smul.u32 8, %s22
      %p325 = scmp.lt.s32.totalorder %s23, 1
      %s326 = scalar_select %p325, %s23, 1
      %p327 = scmp.lt.s32.totalorder %s324, 7
      %s328 = scalar_select %p327, %s324, 7
      %s329 = smul.addr %s326, 8
      %s330 = sadd.s32 %s328, %s329
      %s331 = smul.addr %s330, 8
      %s332 = scalar_lea.vmem %s0, %s331
      %s333 = smul.u32 8, %s22
      %s334 = smul.u32 8, %s22
      %p335 = scmp.lt.s32.totalorder %s23, 1
      %s336 = scalar_select %p335, %s23, 1
      %p337 = scmp.lt.s32.totalorder %s334, 7
      %s338 = scalar_select %p337, %s334, 7
      %s339 = smul.addr %s336, 8
      %s340 = sadd.s32 %s338, %s339
      %s341 = smul.addr %s340, 8
      %s342 = scalar_lea.vmem %s1, %s341
      %s343 = smul.u32 8, %s22
      %s344 = smul.u32 8, %s22
      %p345 = scmp.lt.s32.totalorder %s23, 1
      %s346 = scalar_select %p345, %s23, 1
      %p347 = scmp.lt.s32.totalorder %s344, 7
      %s348 = scalar_select %p347, %s344, 7
      %s349 = smul.addr %s346, 8
      %s350 = sadd.s32 %s348, %s349
      %s351 = smul.addr %s350, 8
      %s352 = scalar_lea.vmem %s7, %s351
      %s353 = smul.u32 8, %s22
      %v354 = vld [vmem:[%s332] sm:$0xff]
      %v355 = vld [vmem:[%s332 + $0x8] sm:$0xff]
      %v356 = vld [vmem:[%s332 + $0x10] sm:$0xff]
      %v357 = vld [vmem:[%s332 + $0x18] sm:$0xff]
      %v358 = vld [vmem:[%s332 + $0x20] sm:$0xff]
      %v359 = vld [vmem:[%s332 + $0x28] sm:$0xff]
      %v360 = vld [vmem:[%s332 + $0x30] sm:$0xff]
      %v361 = vld [vmem:[%s332 + $0x38] sm:$0xff]
      %v362 = vld [vmem:[%s342] sm:$0xff]
      %v363 = vld [vmem:[%s342 + $0x8] sm:$0xff]
      %v364 = vld [vmem:[%s342 + $0x10] sm:$0xff]
      %v365 = vld [vmem:[%s342 + $0x18] sm:$0xff]
      %v366 = vld [vmem:[%s342 + $0x20] sm:$0xff]
      %v367 = vld [vmem:[%s342 + $0x28] sm:$0xff]
      %v368 = vld [vmem:[%s342 + $0x30] sm:$0xff]
      %v369 = vld [vmem:[%s342 + $0x38] sm:$0xff]
      %v370 = vld [vmem:[%s2] sm:$0xff]
      %v371 = vld [vmem:[%s2 + $0x8] sm:$0xff]
      %v372 = vld [vmem:[%s3] sm:$0x1]
      %v373 = vlaneseq
      %v374 = vshrl.u32 %v373, 7
      %v375 = vsub.s32 0, %v374
      %v376 = vrot.slane %v372, %v375
      %vm377 = vcmask 130048
      %v379 = vsel %vm377, %v354, 0
      %v382 = vsel %vm377, %v355, 0
      %v385 = vsel %vm377, %v356, 0
      %v388 = vsel %vm377, %v357, 0
      %v391 = vsel %vm377, %v358, 0
      %v394 = vsel %vm377, %v359, 0
      %v397 = vsel %vm377, %v360, 0
      %v400 = vsel %vm377, %v361, 0
      %402 = vmatprep.subr.mxu0 0.0
      %403 = vmatpush1.msra.mxu0 %v370
      %404 = vmatprep.subr.mxu0 0.0
      %405 = vmatpush1.msra.mxu0 %v371
      %406 = vmatprep.subr.mxu0 0.0
      %407 = vmatpush1.msra.mxu0 0.0
      %408 = vmatprep.subr.mxu0 0.0
      %409 = vmatpush1.msra.mxu0 0.0
      %410 = vmatprep.subr.mxu0 0.0
      %411 = vmatpush1.msra.mxu0 0.0
      %412 = vmatprep.subr.mxu0 0.0
      %413 = vmatpush1.msra.mxu0 0.0
      %414 = vmatprep.subr.mxu0 0.0
      %415 = vmatpush1.msra.mxu0 0.0
      %416 = vmatprep.subr.mxu0 0.0
      %417 = vmatpush1.msra.mxu0 0.0
      %418 = vmatprep.subr.mxu0 0.0
      %419 = vmatpush1.msra.mxu0 0.0
      %420 = vmatprep.subr.mxu0 0.0
      %421 = vmatpush1.msra.mxu0 0.0
      %422 = vmatprep.subr.mxu0 0.0
      %423 = vmatpush1.msra.mxu0 0.0
      %424 = vmatprep.subr.mxu0 0.0
      %425 = vmatpush1.msra.mxu0 0.0
      %426 = vmatprep.subr.mxu0 0.0
      %427 = vmatpush1.msra.mxu0 0.0
      %428 = vmatprep.subr.mxu0 0.0
      %429 = vmatpush1.msra.mxu0 0.0
      %430 = vmatprep.subr.mxu0 0.0
      %431 = vmatpush1.msra.mxu0 0.0
      %432 = vmatprep.subr.mxu0 0.0
      %433 = vmatpush1.msra.mxu0 0.0
      %434 = vmatprep.subr.mxu0 0.0
      %435 = vmatpush1.msra.mxu0 0.0
      %436 = vmatprep.subr.mxu0 0.0
      %437 = vmatpush1.msra.mxu0 0.0
      %438 = vmatprep.subr.mxu0 0.0
      %439 = vmatpush1.msra.mxu0 0.0
      %440 = vmatprep.subr.mxu0 0.0
      %441 = vmatpush1.msra.mxu0 0.0
      %442 = vmatprep.subr.mxu0 0.0
      %443 = vmatpush1.msra.mxu0 0.0
      %444 = vmatprep.subr.mxu0 0.0
      %445 = vmatpush1.msra.mxu0 0.0
      %446 = vmatprep.subr.mxu0 0.0
      %447 = vmatpush1.msra.mxu0 0.0
      %448 = vmatprep.subr.mxu0 0.0
      %449 = vmatpush1.msra.mxu0 0.0
      %450 = vmatprep.subr.mxu0 0.0
      %451 = vmatpush1.msra.mxu0 0.0
      %452 = vmatprep.subr.mxu0 0.0
      %453 = vmatpush1.msra.mxu0 0.0
      %454 = vmatprep.subr.mxu0 0.0
      %455 = vmatpush1.msra.mxu0 0.0
      %456 = vmatprep.subr.mxu0 0.0
      %457 = vmatpush1.msra.mxu0 0.0
      %458 = vmatprep.subr.mxu0 0.0
      %459 = vmatpush1.msra.mxu0 0.0
      %460 = vmatprep.subr.mxu0 0.0
      %461 = vmatpush1.msra.mxu0 0.0
      %462 = vmatprep.subr.mxu0 0.0
      %463 = vmatpush1.msra.mxu0 0.0
      %464 = vmatprep.subr.mxu0 0.0
      %465 = vmatpush1.msra.mxu0 0.0
      %466 = vmatprep.mubr.f32.mxu0 0.0
      %467 = vmatmul.mubr.f32.gmra.mrb[0].mxu0 %v379
      %v468 = vpop.f32.mrb[0].mxu0
      %v469 = vadd.f32 %v376, %v468
      %v470 = vpop.f32.mrb[0].mxu0
      %471 = vmatprep.mubr.f32.mxu0 0.0
      %472 = vmatmul.mubr.f32.gmra.mrb[0].mxu0 %v382
      %v473 = vpop.f32.mrb[0].mxu0
      %v474 = vadd.f32 %v376, %v473
      %v475 = vpop.f32.mrb[0].mxu0
      %476 = vmatprep.mubr.f32.mxu0 0.0
      %477 = vmatmul.mubr.f32.gmra.mrb[0].mxu0 %v385
      %v478 = vpop.f32.mrb[0].mxu0
      %v479 = vadd.f32 %v376, %v478
      %v480 = vpop.f32.mrb[0].mxu0
      %481 = vmatprep.mubr.f32.mxu0 0.0
      %482 = vmatmul.mubr.f32.gmra.mrb[0].mxu0 %v388
      %v483 = vpop.f32.mrb[0].mxu0
      %v484 = vadd.f32 %v376, %v483
      %v485 = vpop.f32.mrb[0].mxu0
      %486 = vmatprep.mubr.f32.mxu0 0.0
      %487 = vmatmul.mubr.f32.gmra.mrb[0].mxu0 %v391
      %v488 = vpop.f32.mrb[0].mxu0
      %v489 = vadd.f32 %v376, %v488
      %v490 = vpop.f32.mrb[0].mxu0
      %491 = vmatprep.mubr.f32.mxu0 0.0
      %492 = vmatmul.mubr.f32.gmra.mrb[0].mxu0 %v394
      %v493 = vpop.f32.mrb[0].mxu0
      %v494 = vadd.f32 %v376, %v493
      %v495 = vpop.f32.mrb[0].mxu0
      %496 = vmatprep.mubr.f32.mxu0 0.0
      %497 = vmatmul.mubr.f32.gmra.mrb[0].mxu0 %v397
      %v498 = vpop.f32.mrb[0].mxu0
      %v499 = vadd.f32 %v376, %v498
      %v500 = vpop.f32.mrb[0].mxu0
      %501 = vmatprep.mubr.f32.mxu0 0.0
      %502 = vmatmul.mubr.f32.gmra.mrb[0].mxu0 %v400
      %v503 = vpop.f32.mrb[0].mxu0
      %v504 = vadd.f32 %v376, %v503
      %v505 = vpop.f32.mrb[0].mxu0
      %506 = vdwg.mxu0
      %v507 = vadd.f32 %v469, %v362
      %v508 = vadd.f32 %v474, %v363
      %v509 = vadd.f32 %v479, %v364
      %v510 = vadd.f32 %v484, %v365
      %v511 = vadd.f32 %v489, %v366
      %v512 = vadd.f32 %v494, %v367
      %v513 = vadd.f32 %v499, %v368
      %v514 = vadd.f32 %v504, %v369
      %v515 = vsel %vm377, %v507, 0.0
      %516 = vadd.xlane.f32.xlu0 %v515
      %v517 = vpop.xlane.xlu0 %516
      %v518 = vsel %vm377, %v508, 0.0
      %519 = vadd.xlane.f32.xlu0 %v518
      %v520 = vpop.xlane.xlu0 %519
      %v521 = vsel %vm377, %v509, 0.0
      %522 = vadd.xlane.f32.xlu0 %v521
      %v523 = vpop.xlane.xlu0 %522
      %v524 = vsel %vm377, %v510, 0.0
      %525 = vadd.xlane.f32.xlu0 %v524
      %v526 = vpop.xlane.xlu0 %525
      %v527 = vsel %vm377, %v511, 0.0
      %528 = vadd.xlane.f32.xlu0 %v527
      %v529 = vpop.xlane.xlu0 %528
      %v530 = vsel %vm377, %v512, 0.0
      %531 = vadd.xlane.f32.xlu0 %v530
      %v532 = vpop.xlane.xlu0 %531
      %v533 = vsel %vm377, %v513, 0.0
      %534 = vadd.xlane.f32.xlu0 %v533
      %v535 = vpop.xlane.xlu0 %534
      %v536 = vsel %vm377, %v514, 0.0
      %537 = vadd.xlane.f32.xlu0 %v536
      %v538 = vpop.xlane.xlu0 %537
      %v539 = vrcp.pop 16.0
      %v540 = vmul.f32 %v517, %v539
      %v541 = vmul.f32 %v520, %v539
      %v542 = vmul.f32 %v523, %v539
      %v543 = vmul.f32 %v526, %v539
      %v544 = vmul.f32 %v529, %v539
      %v545 = vmul.f32 %v532, %v539
      %v546 = vmul.f32 %v535, %v539
      %v547 = vmul.f32 %v538, %v539
      %v548 = vsub.f32 %v507, %v540
      %v549 = vsub.f32 %v508, %v541
      %v550 = vsub.f32 %v509, %v542
      %v551 = vsub.f32 %v510, %v543
      %v552 = vsub.f32 %v511, %v544
      %v553 = vsub.f32 %v512, %v545
      %v554 = vsub.f32 %v513, %v546
      %v555 = vsub.f32 %v514, %v547
      %v556 = vmul.f32 %v548, %v548
      %v557 = vmul.f32 %v549, %v549
      %v558 = vmul.f32 %v550, %v550
      %v559 = vmul.f32 %v551, %v551
      %v560 = vmul.f32 %v552, %v552
      %v561 = vmul.f32 %v553, %v553
      %v562 = vmul.f32 %v554, %v554
      %v563 = vmul.f32 %v555, %v555
      %v564 = vsel %vm377, %v556, 0.0
      %565 = vadd.xlane.f32.xlu0 %v564
      %v566 = vpop.xlane.xlu0 %565
      %v567 = vsel %vm377, %v557, 0.0
      %568 = vadd.xlane.f32.xlu0 %v567
      %v569 = vpop.xlane.xlu0 %568
      %v570 = vsel %vm377, %v558, 0.0
      %571 = vadd.xlane.f32.xlu0 %v570
      %v572 = vpop.xlane.xlu0 %571
      %v573 = vsel %vm377, %v559, 0.0
      %574 = vadd.xlane.f32.xlu0 %v573
      %v575 = vpop.xlane.xlu0 %574
      %v576 = vsel %vm377, %v560, 0.0
      %577 = vadd.xlane.f32.xlu0 %v576
      %v578 = vpop.xlane.xlu0 %577
      %v579 = vsel %vm377, %v561, 0.0
      %580 = vadd.xlane.f32.xlu0 %v579
      %v581 = vpop.xlane.xlu0 %580
      %v582 = vsel %vm377, %v562, 0.0
      %583 = vadd.xlane.f32.xlu0 %v582
      %v584 = vpop.xlane.xlu0 %583
      %v585 = vsel %vm377, %v563, 0.0
      %586 = vadd.xlane.f32.xlu0 %v585
      %v587 = vpop.xlane.xlu0 %586
      %v588 = vmul.f32 %v566, %v539
      %v589 = vmul.f32 %v569, %v539
      %v590 = vmul.f32 %v572, %v539
      %v591 = vmul.f32 %v575, %v539
      %v592 = vmul.f32 %v578, %v539
      %v593 = vmul.f32 %v581, %v539
      %v594 = vmul.f32 %v584, %v539
      %v595 = vmul.f32 %v587, %v539
      %v596 = vadd.f32 %v588, 1e-05
      %v597 = vadd.f32 %v589, 1e-05
      %v598 = vadd.f32 %v590, 1e-05
      %v599 = vadd.f32 %v591, 1e-05
      %v600 = vadd.f32 %v592, 1e-05
      %v601 = vadd.f32 %v593, 1e-05
      %v602 = vadd.f32 %v594, 1e-05
      %v603 = vadd.f32 %v595, 1e-05
      %v604 = vrsqrt.pop %v596
      %v605 = vrsqrt.pop %v597
      %v606 = vrsqrt.pop %v598
      %v607 = vrsqrt.pop %v599
      %v608 = vrsqrt.pop %v600
      %v609 = vrsqrt.pop %v601
      %v610 = vrsqrt.pop %v602
      %v611 = vrsqrt.pop %v603
      %v612 = vmul.f32 %v548, %v604
      %v613 = vmul.f32 %v549, %v605
      %v614 = vmul.f32 %v550, %v606
      %v615 = vmul.f32 %v551, %v607
      %v616 = vmul.f32 %v552, %v608
      %v617 = vmul.f32 %v553, %v609
      %v618 = vmul.f32 %v554, %v610
      %v619 = vmul.f32 %v555, %v611
      %v620 = vld [vmem:[%s3 + $0x1] sm:$0x1]
      %v621 = vlaneseq
      %v622 = vshrl.u32 %v621, 7
      %v623 = vsub.s32 0, %v622
      %v624 = vrot.slane %v620, %v623
      %v625 = vmul.f32 %v612, %v624
      %v626 = vmul.f32 %v613, %v624
      %v627 = vmul.f32 %v614, %v624
      %v628 = vmul.f32 %v615, %v624
      %v629 = vmul.f32 %v616, %v624
      %v630 = vmul.f32 %v617, %v624
      %v631 = vmul.f32 %v618, %v624
      %v632 = vmul.f32 %v619, %v624
      %v633 = vld [vmem:[%s3 + $0x2] sm:$0x1]
      %v634 = vlaneseq
      %v635 = vshrl.u32 %v634, 7
      %v636 = vsub.s32 0, %v635
      %v637 = vrot.slane %v633, %v636
      %v638 = vadd.f32 %v625, %v637
      %v639 = vadd.f32 %v626, %v637
      %v640 = vadd.f32 %v627, %v637
      %v641 = vadd.f32 %v628, %v637
      %v642 = vadd.f32 %v629, %v637
      %v643 = vadd.f32 %v630, %v637
      %v644 = vadd.f32 %v631, %v637
      %v645 = vadd.f32 %v632, %v637
      %v646 = vld [vmem:[%s4] sm:$0xff]
      %v647 = vld [vmem:[%s4 + $0x8] sm:$0xff]
      %v648 = vld [vmem:[%s5] sm:$0x1]
      %v650 = vlaneseq
      %v651 = vshrl.u32 %v650, 7
      %v652 = vsub.s32 0, %v651
      %v653 = vrot.slane %v648, %v652
      %v656 = vsel %vm377, %v638, 0
      %v659 = vsel %vm377, %v639, 0
      %v662 = vsel %vm377, %v640, 0
      %v665 = vsel %vm377, %v641, 0
      %v668 = vsel %vm377, %v642, 0
      %v671 = vsel %vm377, %v643, 0
      %v674 = vsel %vm377, %v644, 0
      %v677 = vsel %vm377, %v645, 0
      %679 = vmatprep.subr.mxu0 0.0
      %680 = vmatpush1.msra.mxu0 %v646
      %681 = vmatprep.subr.mxu0 0.0
      %682 = vmatpush1.msra.mxu0 %v647
      %683 = vmatprep.subr.mxu0 0.0
      %684 = vmatpush1.msra.mxu0 0.0
      %685 = vmatprep.subr.mxu0 0.0
      %686 = vmatpush1.msra.mxu0 0.0
      %687 = vmatprep.subr.mxu0 0.0
      %688 = vmatpush1.msra.mxu0 0.0
      %689 = vmatprep.subr.mxu0 0.0
      %690 = vmatpush1.msra.mxu0 0.0
      %691 = vmatprep.subr.mxu0 0.0
      %692 = vmatpush1.msra.mxu0 0.0
      %693 = vmatprep.subr.mxu0 0.0
      %694 = vmatpush1.msra.mxu0 0.0
      %695 = vmatprep.subr.mxu0 0.0
      %696 = vmatpush1.msra.mxu0 0.0
      %697 = vmatprep.subr.mxu0 0.0
      %698 = vmatpush1.msra.mxu0 0.0
      %699 = vmatprep.subr.mxu0 0.0
      %700 = vmatpush1.msra.mxu0 0.0
      %701 = vmatprep.subr.mxu0 0.0
      %702 = vmatpush1.msra.mxu0 0.0
      %703 = vmatprep.subr.mxu0 0.0
      %704 = vmatpush1.msra.mxu0 0.0
      %705 = vmatprep.subr.mxu0 0.0
      %706 = vmatpush1.msra.mxu0 0.0
      %707 = vmatprep.subr.mxu0 0.0
      %708 = vmatpush1.msra.mxu0 0.0
      %709 = vmatprep.subr.mxu0 0.0
      %710 = vmatpush1.msra.mxu0 0.0
      %711 = vmatprep.subr.mxu0 0.0
      %712 = vmatpush1.msra.mxu0 0.0
      %713 = vmatprep.subr.mxu0 0.0
      %714 = vmatpush1.msra.mxu0 0.0
      %715 = vmatprep.subr.mxu0 0.0
      %716 = vmatpush1.msra.mxu0 0.0
      %717 = vmatprep.subr.mxu0 0.0
      %718 = vmatpush1.msra.mxu0 0.0
      %719 = vmatprep.subr.mxu0 0.0
      %720 = vmatpush1.msra.mxu0 0.0
      %721 = vmatprep.subr.mxu0 0.0
      %722 = vmatpush1.msra.mxu0 0.0
      %723 = vmatprep.subr.mxu0 0.0
      %724 = vmatpush1.msra.mxu0 0.0
      %725 = vmatprep.subr.mxu0 0.0
      %726 = vmatpush1.msra.mxu0 0.0
      %727 = vmatprep.subr.mxu0 0.0
      %728 = vmatpush1.msra.mxu0 0.0
      %729 = vmatprep.subr.mxu0 0.0
      %730 = vmatpush1.msra.mxu0 0.0
      %731 = vmatprep.subr.mxu0 0.0
      %732 = vmatpush1.msra.mxu0 0.0
      %733 = vmatprep.subr.mxu0 0.0
      %734 = vmatpush1.msra.mxu0 0.0
      %735 = vmatprep.subr.mxu0 0.0
      %736 = vmatpush1.msra.mxu0 0.0
      %737 = vmatprep.subr.mxu0 0.0
      %738 = vmatpush1.msra.mxu0 0.0
      %739 = vmatprep.subr.mxu0 0.0
      %740 = vmatpush1.msra.mxu0 0.0
      %741 = vmatprep.subr.mxu0 0.0
      %742 = vmatpush1.msra.mxu0 0.0
      %743 = vmatprep.mubr.f32.mxu0 0.0
      %744 = vmatmul.mubr.f32.gmra.mrb[0].mxu0 %v656
      %v745 = vpop.f32.mrb[0].mxu0
      %v746 = vadd.f32 %v653, %v745
      %v747 = vpop.f32.mrb[0].mxu0
      %748 = vmatprep.mubr.f32.mxu0 0.0
      %749 = vmatmul.mubr.f32.gmra.mrb[0].mxu0 %v659
      %v750 = vpop.f32.mrb[0].mxu0
      %v751 = vadd.f32 %v653, %v750
      %v752 = vpop.f32.mrb[0].mxu0
      %753 = vmatprep.mubr.f32.mxu0 0.0
      %754 = vmatmul.mubr.f32.gmra.mrb[0].mxu0 %v662
      %v755 = vpop.f32.mrb[0].mxu0
      %v756 = vadd.f32 %v653, %v755
      %v757 = vpop.f32.mrb[0].mxu0
      %758 = vmatprep.mubr.f32.mxu0 0.0
      %759 = vmatmul.mubr.f32.gmra.mrb[0].mxu0 %v665
      %v760 = vpop.f32.mrb[0].mxu0
      %v761 = vadd.f32 %v653, %v760
      %v762 = vpop.f32.mrb[0].mxu0
      %763 = vmatprep.mubr.f32.mxu0 0.0
      %764 = vmatmul.mubr.f32.gmra.mrb[0].mxu0 %v668
      %v765 = vpop.f32.mrb[0].mxu0
      %v766 = vadd.f32 %v653, %v765
      %v767 = vpop.f32.mrb[0].mxu0
      %768 = vmatprep.mubr.f32.mxu0 0.0
      %769 = vmatmul.mubr.f32.gmra.mrb[0].mxu0 %v671
      %v770 = vpop.f32.mrb[0].mxu0
      %v771 = vadd.f32 %v653, %v770
      %v772 = vpop.f32.mrb[0].mxu0
      %773 = vmatprep.mubr.f32.mxu0 0.0
      %774 = vmatmul.mubr.f32.gmra.mrb[0].mxu0 %v674
      %v775 = vpop.f32.mrb[0].mxu0
      %v776 = vadd.f32 %v653, %v775
      %v777 = vpop.f32.mrb[0].mxu0
      %778 = vmatprep.mubr.f32.mxu0 0.0
      %779 = vmatmul.mubr.f32.gmra.mrb[0].mxu0 %v677
      %v780 = vpop.f32.mrb[0].mxu0
      %v781 = vadd.f32 %v653, %v780
      %v782 = vpop.f32.mrb[0].mxu0
      %783 = vdwg.mxu0
      %v784 = vmul.f32 %v746, 0.5
      %v785 = vmul.f32 %v751, 0.5
      %v786 = vmul.f32 %v756, 0.5
      %v787 = vmul.f32 %v761, 0.5
      %v788 = vmul.f32 %v766, 0.5
      %v789 = vmul.f32 %v771, 0.5
      %v790 = vmul.f32 %v776, 0.5
      %v791 = vmul.f32 %v781, 0.5
      %v792 = vmul.f32 %v746, 0.044715
      %v793 = vmul.f32 %v751, 0.044715
      %v794 = vmul.f32 %v756, 0.044715
      %v795 = vmul.f32 %v761, 0.044715
      %v796 = vmul.f32 %v766, 0.044715
      %v797 = vmul.f32 %v771, 0.044715
      %v798 = vmul.f32 %v776, 0.044715
      %v799 = vmul.f32 %v781, 0.044715
      %v800 = vmul.f32 %v792, %v746
      %v801 = vmul.f32 %v793, %v751
      %v802 = vmul.f32 %v794, %v756
      %v803 = vmul.f32 %v795, %v761
      %v804 = vmul.f32 %v796, %v766
      %v805 = vmul.f32 %v797, %v771
      %v806 = vmul.f32 %v798, %v776
      %v807 = vmul.f32 %v799, %v781
      %v808 = vmul.f32 %v800, %v746
      %v809 = vmul.f32 %v801, %v751
      %v810 = vmul.f32 %v802, %v756
      %v811 = vmul.f32 %v803, %v761
      %v812 = vmul.f32 %v804, %v766
      %v813 = vmul.f32 %v805, %v771
      %v814 = vmul.f32 %v806, %v776
      %v815 = vmul.f32 %v807, %v781
      %v816 = vadd.f32 %v746, %v808
      %v817 = vadd.f32 %v751, %v809
      %v818 = vadd.f32 %v756, %v810
      %v819 = vadd.f32 %v761, %v811
      %v820 = vadd.f32 %v766, %v812
      %v821 = vadd.f32 %v771, %v813
      %v822 = vadd.f32 %v776, %v814
      %v823 = vadd.f32 %v781, %v815
      %v824 = vmul.f32 %v816, 0.7978846
      %v825 = vmul.f32 %v817, 0.7978846
      %v826 = vmul.f32 %v818, 0.7978846
      %v827 = vmul.f32 %v819, 0.7978846
      %v828 = vmul.f32 %v820, 0.7978846
      %v829 = vmul.f32 %v821, 0.7978846
      %v830 = vmul.f32 %v822, 0.7978846
      %v831 = vmul.f32 %v823, 0.7978846
      %v832 = vtanh.pop %v824
      %v833 = vtanh.pop %v825
      %v834 = vtanh.pop %v826
      %v835 = vtanh.pop %v827
      %v836 = vtanh.pop %v828
      %v837 = vtanh.pop %v829
      %v838 = vtanh.pop %v830
      %v839 = vtanh.pop %v831
      %v840 = vadd.f32 %v832, 1.0
      %v841 = vadd.f32 %v833, 1.0
      %v842 = vadd.f32 %v834, 1.0
      %v843 = vadd.f32 %v835, 1.0
      %v844 = vadd.f32 %v836, 1.0
      %v845 = vadd.f32 %v837, 1.0
      %v846 = vadd.f32 %v838, 1.0
      %v847 = vadd.f32 %v839, 1.0
      %v848 = vmul.f32 %v784, %v840
      %v849 = vmul.f32 %v785, %v841
      %v850 = vmul.f32 %v786, %v842
      %v851 = vmul.f32 %v787, %v843
      %v852 = vmul.f32 %v788, %v844
      %v853 = vmul.f32 %v789, %v845
      %v854 = vmul.f32 %v790, %v846
      %v855 = vmul.f32 %v791, %v847
      %v856 = vld [vmem:[%s6] sm:$0xff]
      %v857 = vld [vmem:[%s6 + $0x8] sm:$0xff]
      %v858 = vld [vmem:[%s6 + $0x10] sm:$0xff]
      %v859 = vld [vmem:[%s6 + $0x18] sm:$0xff]
      %v860 = vld [vmem:[%s3 + $0x3] sm:$0x1]
      %v861 = vlaneseq
      %v862 = vshrl.u32 %v861, 7
      %v863 = vsub.s32 0, %v862
      %v864 = vrot.slane %v860, %v863
      %vm865 = vcmask 261120
      %v867 = vsel %vm865, %v848, 0
      %v870 = vsel %vm865, %v849, 0
      %v873 = vsel %vm865, %v850, 0
      %v876 = vsel %vm865, %v851, 0
      %v879 = vsel %vm865, %v852, 0
      %v882 = vsel %vm865, %v853, 0
      %v885 = vsel %vm865, %v854, 0
      %v888 = vsel %vm865, %v855, 0
      %890 = vmatprep.subr.mxu0 0.0
      %891 = vmatpush1.msra.mxu0 %v856
      %892 = vmatprep.subr.mxu0 0.0
      %893 = vmatpush1.msra.mxu0 %v857
      %894 = vmatprep.subr.mxu0 0.0
      %895 = vmatpush1.msra.mxu0 %v858
      %896 = vmatprep.subr.mxu0 0.0
      %897 = vmatpush1.msra.mxu0 %v859
      %898 = vmatprep.subr.mxu0 0.0
      %899 = vmatpush1.msra.mxu0 0.0
      %900 = vmatprep.subr.mxu0 0.0
      %901 = vmatpush1.msra.mxu0 0.0
      %902 = vmatprep.subr.mxu0 0.0
      %903 = vmatpush1.msra.mxu0 0.0
      %904 = vmatprep.subr.mxu0 0.0
      %905 = vmatpush1.msra.mxu0 0.0
      %906 = vmatprep.subr.mxu0 0.0
      %907 = vmatpush1.msra.mxu0 0.0
      %908 = vmatprep.subr.mxu0 0.0
      %909 = vmatpush1.msra.mxu0 0.0
      %910 = vmatprep.subr.mxu0 0.0
      %911 = vmatpush1.msra.mxu0 0.0
      %912 = vmatprep.subr.mxu0 0.0
      %913 = vmatpush1.msra.mxu0 0.0
      %914 = vmatprep.subr.mxu0 0.0
      %915 = vmatpush1.msra.mxu0 0.0
      %916 = vmatprep.subr.mxu0 0.0
      %917 = vmatpush1.msra.mxu0 0.0
      %918 = vmatprep.subr.mxu0 0.0
      %919 = vmatpush1.msra.mxu0 0.0
      %920 = vmatprep.subr.mxu0 0.0
      %921 = vmatpush1.msra.mxu0 0.0
      %922 = vmatprep.subr.mxu0 0.0
      %923 = vmatpush1.msra.mxu0 0.0
      %924 = vmatprep.subr.mxu0 0.0
      %925 = vmatpush1.msra.mxu0 0.0
      %926 = vmatprep.subr.mxu0 0.0
      %927 = vmatpush1.msra.mxu0 0.0
      %928 = vmatprep.subr.mxu0 0.0
      %929 = vmatpush1.msra.mxu0 0.0
      %930 = vmatprep.subr.mxu0 0.0
      %931 = vmatpush1.msra.mxu0 0.0
      %932 = vmatprep.subr.mxu0 0.0
      %933 = vmatpush1.msra.mxu0 0.0
      %934 = vmatprep.subr.mxu0 0.0
      %935 = vmatpush1.msra.mxu0 0.0
      %936 = vmatprep.subr.mxu0 0.0
      %937 = vmatpush1.msra.mxu0 0.0
      %938 = vmatprep.subr.mxu0 0.0
      %939 = vmatpush1.msra.mxu0 0.0
      %940 = vmatprep.subr.mxu0 0.0
      %941 = vmatpush1.msra.mxu0 0.0
      %942 = vmatprep.subr.mxu0 0.0
      %943 = vmatpush1.msra.mxu0 0.0
      %944 = vmatprep.subr.mxu0 0.0
      %945 = vmatpush1.msra.mxu0 0.0
      %946 = vmatprep.subr.mxu0 0.0
      %947 = vmatpush1.msra.mxu0 0.0
      %948 = vmatprep.subr.mxu0 0.0
      %949 = vmatpush1.msra.mxu0 0.0
      %950 = vmatprep.subr.mxu0 0.0
      %951 = vmatpush1.msra.mxu0 0.0
      %952 = vmatprep.subr.mxu0 0.0
      %953 = vmatpush1.msra.mxu0 0.0
      %954 = vmatprep.mubr.f32.mxu0 0.0
      %955 = vmatmul.mubr.f32.gmra.mrb[0].mxu0 %v867
      %v956 = vpop.f32.mrb[0].mxu0
      %v957 = vadd.f32 %v864, %v956
      %v958 = vpop.f32.mrb[0].mxu0
      %959 = vmatprep.mubr.f32.mxu0 0.0
      %960 = vmatmul.mubr.f32.gmra.mrb[0].mxu0 %v870
      %v961 = vpop.f32.mrb[0].mxu0
      %v962 = vadd.f32 %v864, %v961
      %v963 = vpop.f32.mrb[0].mxu0
      %964 = vmatprep.mubr.f32.mxu0 0.0
      %965 = vmatmul.mubr.f32.gmra.mrb[0].mxu0 %v873
      %v966 = vpop.f32.mrb[0].mxu0
      %v967 = vadd.f32 %v864, %v966
      %v968 = vpop.f32.mrb[0].mxu0
      %969 = vmatprep.mubr.f32.mxu0 0.0
      %970 = vmatmul.mubr.f32.gmra.mrb[0].mxu0 %v876
      %v971 = vpop.f32.mrb[0].mxu0
      %v972 = vadd.f32 %v864, %v971
      %v973 = vpop.f32.mrb[0].mxu0
      %974 = vmatprep.mubr.f32.mxu0 0.0
      %975 = vmatmul.mubr.f32.gmra.mrb[0].mxu0 %v879
      %v976 = vpop.f32.mrb[0].mxu0
      %v977 = vadd.f32 %v864, %v976
      %v978 = vpop.f32.mrb[0].mxu0
      %979 = vmatprep.mubr.f32.mxu0 0.0
      %980 = vmatmul.mubr.f32.gmra.mrb[0].mxu0 %v882
      %v981 = vpop.f32.mrb[0].mxu0
      %v982 = vadd.f32 %v864, %v981
      %v983 = vpop.f32.mrb[0].mxu0
      %984 = vmatprep.mubr.f32.mxu0 0.0
      %985 = vmatmul.mubr.f32.gmra.mrb[0].mxu0 %v885
      %v986 = vpop.f32.mrb[0].mxu0
      %v987 = vadd.f32 %v864, %v986
      %v988 = vpop.f32.mrb[0].mxu0
      %989 = vmatprep.mubr.f32.mxu0 0.0
      %990 = vmatmul.mubr.f32.gmra.mrb[0].mxu0 %v888
      %v991 = vpop.f32.mrb[0].mxu0
      %v992 = vadd.f32 %v864, %v991
      %v993 = vpop.f32.mrb[0].mxu0
      %994 = vdwg.mxu0
      %v995 = vadd.f32 %v507, %v957
      %v996 = vadd.f32 %v508, %v962
      %v997 = vadd.f32 %v509, %v967
      %v998 = vadd.f32 %v510, %v972
      %v999 = vadd.f32 %v511, %v977
      %v1000 = vadd.f32 %v512, %v982
      %v1001 = vadd.f32 %v513, %v987
      %v1002 = vadd.f32 %v514, %v992
      %1003 = vst.msk [vmem:[%s352] sm:$0xff] %vm377, %v995
      %1004 = vst.msk [vmem:[%s352 + $0x8] sm:$0xff] %vm377, %v996
      %1005 = vst.msk [vmem:[%s352 + $0x10] sm:$0xff] %vm377, %v997
      %1006 = vst.msk [vmem:[%s352 + $0x18] sm:$0xff] %vm377, %v998
      %1007 = vst.msk [vmem:[%s352 + $0x20] sm:$0xff] %vm377, %v999
      %1008 = vst.msk [vmem:[%s352 + $0x28] sm:$0xff] %vm377, %v1000
      %1009 = vst.msk [vmem:[%s352 + $0x30] sm:$0xff] %vm377, %v1001
      %1010 = vst.msk [vmem:[%s352 + $0x38] sm:$0xff] %vm377, %v1002
      %s1011 = smul.u32 8, %s22
      %p1012 = scmp.lt.s32.totalorder %s23, 1
      %s1013 = scalar_select %p1012, %s23, 1
      %p1014 = scmp.lt.s32.totalorder %s1011, 7
      %s1015 = scalar_select %p1014, %s1011, 7
      %s1016 = smul.addr %s1013, 8
      %s1017 = sadd.s32 %s1015, %s1016
      %s1018 = smul.addr %s1017, 8
      %s1019 = scalar_lea.vmem %s7, %s1018
      // Predicated region
      $region49: #{_lambda_.5} parent=47 // pred_check
        %p1020 = pneg %p211
      $region50: #{_lambda_.5} parent=47 // pred_check_branch
        %1022 = sbr.rel (%p1020) target = $region52
      $region51: #{_lambda_.5} parent=47 // pred_region
        %s1023 = smul.u32 8, %s22
      $region52: #{_lambda_.5} parent=47 // pred_fallthru
        _
    $region48: #{_lambda_.5} parent=5 // pred_fallthru
      _
    %p1024 = scmp.le.s32.totalorder 2, %s13
    // Predicated region
    $region53: #{_lambda_.5} parent=5 // pred_check
      %p1025 = pneg %p1024
    $region54: #{_lambda_.5} parent=5 // pred_check_branch
      %1027 = sbr.rel (%p1025) target = $region56
    $region55: #{_lambda_.5} parent=5 // pred_region
      %s1028 = ssub.s32 %s13, 2
      // Predicated region
      $region57: #{_lambda_.5} parent=55 // pred_check
        %p1029 = pneg %p217
      $region58: #{_lambda_.5} parent=55 // pred_check_branch
        %1031 = sbr.rel (%p1029) target = $region60
      $region59: #{_lambda_.5} parent=55 // pred_region
        %s1032 = smul.u32 8, %s24
        %p1033 = scmp.lt.s32.totalorder %s25, 1
        %s1034 = scalar_select %p1033, %s25, 1
        %p1035 = scmp.lt.s32.totalorder %s1032, 7
        %s1036 = scalar_select %p1035, %s1032, 7
        %s1037 = smul.addr %s1034, 8
        %s1038 = sadd.s32 %s1036, %s1037
        %s1039 = smul.addr %s1038, 8
        %s1040 = scalar_lea.vmem %s7, %s1039
      $region60: #{_lambda_.5} parent=55 // pred_fallthru
        _
    $region56: #{_lambda_.5} parent=5 // pred_fallthru
      _
  $region6: #{_lambda_.5} parent=0 // loop_footer
    %s17 = sadd.s32 1, %s13
  $region7: #{_lambda_.5} parent=0 // loop_footer_branch
    %12 = sbr.rel target = $region3
  $region8: #{_lambda_.5} parent=0 // loop_exit
    _

// kernel: _lambda_.4
$region0: #{_lambda_.4}
  #allocation0 [shape = 'u32[]', space=smem, size = 0x4, offset = 0x4, fixed_abs, tag = 'smem constant byte address 0x4 - core index']
  #allocation1 [shape = 'u32[144,128]{1,0:T(1,128)}', space=vmem, size = 0x12000, scoped, tag = 'internal scratch']
  %s0 = inlined_call_operand.vmem [shape: f32[8,2,16,8], index: 0, kind: input, shape index: {}]
  %s1 = inlined_call_operand.vmem [shape: f32[2,8,2,128,8], index: 1, kind: input, shape index: {}]
  %s2 = inlined_call_operand.vmem [shape: f32[2,16,128], index: 2, kind: input, shape index: {}]
  %s3 = inlined_call_operand.vmem [shape: f32[8,2,16,8], index: 3, kind: output, shape index: {}]
  %s4 = sld [smem:[#allocation0]]
  $region83: #{_lambda_.4} parent=0
    _
  %s6 = ssub.s32 1, %s4
  %s7 = scalar_select 0, %s6, %s4
  $region1: #{_lambda_.4} parent=0
    #allocation2 [shape = 'u8[1048576]{0}', space=vmem, size = 0x100000, scoped, tag = 'input window, operand 1']
    loop: start=0, step=1, limit=6
    $region2: #{_lambda_.4} parent=1 // loop_pre_header
      _
    $region3: #{_lambda_.4} parent=1 // loop_header
      %s9 = sphi 0, %s13
      %p10 = scmp.ge.s32.totalorder %s9, 6
      %s19 = sphi 0, %s21
      %s22 = sphi 0, %s19
      %s23 = sphi 0, %s22
      %s39 = sphi 0, %s23
      %s45 = sphi 0, %s47
      %s48 = sphi 0, %s45
      %s49 = sphi 0, %s48
      %s65 = sphi 0, %s49
      %s69 = sphi 0, %s69
      %s71 = sphi 0, %s69
      %s72 = sphi 0, %s71
      %s86 = sphi 0, %s72
      %s92 = sphi 0, %s94
      %s95 = sphi 0, %s92
      %s96 = sphi 0, %s95
      %s112 = sphi 0, %s96
    $region4: #{_lambda_.4} parent=1 // loop_header_branch
      %12 = sbr.rel (%p10) target = $region8
    $region5: #{_lambda_.4} parent=1 // loop_body
      %s14 = ssub.s32 %s9, 1
      %s15 = ssub.s32 %s9, 2
      %s16 = sadd.s32 %s9, 1
      %s17 = ssub.s32 %s9, %s16
      %p18 = scmp.eq.s32.totalorder %s17, 0
      %s20 = sadd.s32 %s19, 1
      %s21 = scalar_select %p18, %s19, %s20
      %p24 = pneg %p18
      %p25 = scmp.eq.s32.totalorder %s9, 3
      %p26 = por %p24, %p25
      %p27 = scmp.ne.s32.totalorder %s19, %s22
      %p28 = scmp.eq.s32.totalorder %s9, 0
      %p29 = por %p27, %p28
      %p30 = scmp.ne.s32.totalorder %s19, %s22
      %p31 = scmp.eq.s32.totalorder %s14, 3
      %p32 = por %p30, %p31
      %p33 = scmp.ne.s32.totalorder %s22, %s23
      %p34 = scmp.eq.s32.totalorder %s14, 0
      %p35 = por %p33, %p34
      %p36 = scmp.ne.s32.totalorder %s22, %s23
      %p37 = scmp.eq.s32.totalorder %s15, 3
      %p38 = por %p36, %p37
      %p40 = scmp.ne.s32.totalorder %s23, %s39
      %p41 = scmp.eq.s32.totalorder %s15, 0
      %p42 = por %p40, %p41
      %s43 = ssub.s32 %s9, %s16
      %p44 = scmp.eq.s32.totalorder %s43, 0
      %s46 = sadd.s32 %s45, 1
      %s47 = scalar_select %p44, %s45, %s46
      %p50 = pneg %p44
      %p51 = scmp.eq.s32.totalorder %s9, 3
      %p52 = por %p50, %p51
      %p53 = scmp.ne.s32.totalorder %s45, %s48
      %p54 = scmp.eq.s32.totalorder %s9, 0
      %p55 = por %p53, %p54
      %p56 = scmp.ne.s32.totalorder %s45, %s48
      %p57 = scmp.eq.s32.totalorder %s14, 3
      %p58 = por %p56, %p57
      %p59 = scmp.ne.s32.totalorder %s48, %s49
      %p60 = scmp.eq.s32.totalorder %s14, 0
      %p61 = por %p59, %p60
      %p62 = scmp.ne.s32.totalorder %s48, %s49
      %p63 = scmp.eq.s32.totalorder %s15, 3
      %p64 = por %p62, %p63
      %p66 = scmp.ne.s32.totalorder %s49, %s65
      %p67 = scmp.eq.s32.totalorder %s15, 0
      %p68 = por %p66, %p67
      %s70 = sadd.s32 %s69, 1
      %p73 = scmp.eq.s32.totalorder %s9, 3
      %p74 = scmp.ne.s32.totalorder %s69, %s71
      %p75 = scmp.eq.s32.totalorder %s9, 0
      %p76 = por %p74, %p75
      %p77 = scmp.ne.s32.totalorder %s69, %s71
      %p78 = scmp.eq.s32.totalorder %s14, 3
      %p79 = por %p77, %p78
      %p80 = scmp.ne.s32.totalorder %s71, %s72
      %p81 = scmp.eq.s32.totalorder %s14, 0
      %p82 = por %p80, %p81
      %p83 = scmp.ne.s32.totalorder %s71, %s72
      %p84 = scmp.eq.s32.totalorder %s15, 3
      %p85 = por %p83, %p84
      %p87 = scmp.ne.s32.totalorder %s72, %s86
      %p88 = scmp.eq.s32.totalorder %s15, 0
      %p89 = por %p87, %p88
      %s90 = ssub.s32 %s9, %s16
      %p91 = scmp.eq.s32.totalorder %s90, 0
      %s93 = sadd.s32 %s92, 1
      %s94 = scalar_select %p91, %s92, %s93
      %p97 = pneg %p91
      %p98 = scmp.eq.s32.totalorder %s9, 3
      %p99 = por %p97, %p98
      %p100 = scmp.ne.s32.totalorder %s92, %s95
      %p101 = scmp.eq.s32.totalorder %s9, 0
      %p102 = por %p100, %p101
      %p103 = scmp.ne.s32.totalorder %s92, %s95
      %p104 = scmp.eq.s32.totalorder %s14, 3
      %p105 = por %p103, %p104
      %p106 = scmp.ne.s32.totalorder %s95, %s96
      %p107 = scmp.eq.s32.totalorder %s14, 0
      %p108 = por %p106, %p107
      %p109 = scmp.ne.s32.totalorder %s95, %s96
      %p110 = scmp.eq.s32.totalorder %s15, 3
      %p111 = por %p109, %p110
      %p113 = scmp.ne.s32.totalorder %s96, %s112
      %p114 = scmp.eq.s32.totalorder %s15, 0
      %p115 = por %p113, %p114
      %p116 = scmp.le.s32.totalorder 1, %s9
      %p117 = scmp.lt.s32.totalorder %s9, 5
      %p118 = pnand %p116, %p117
      %p119 = pneg %p118
      // Predicated region
      $region9: #{_lambda_.4} parent=5 // pred_check
        _
      $region10: #{_lambda_.4} parent=5 // pred_check_branch
        %121 = sbr.rel (%p118) target = $region12
      $region11: #{_lambda_.4} parent=5 // pred_region
        %s122 = ssub.s32 %s9, 1
        // Predicated region
        $region13: #{_lambda_.4} parent=11 // pred_check
          %p123 = pneg %p82
        $region14: #{_lambda_.4} parent=11 // pred_check_branch
          %125 = sbr.rel (%p123) target = $region16
        $region15: #{_lambda_.4} parent=11 // pred_region
          _
        $region16: #{_lambda_.4} parent=11 // pred_fallthru
          _
      $region12: #{_lambda_.4} parent=5 // pred_fallthru
        _
      %p126 = scmp.lt.s32.totalorder %s9, 4
      // Predicated region
      $region17: #{_lambda_.4} parent=5 // pred_check
        %p127 = pneg %p126
      $region18: #{_lambda_.4} parent=5 // pred_check_branch
        %129 = sbr.rel (%p127) target = $region20
      $region19: #{_lambda_.4} parent=5 // pred_region
        // Predicated region
        $region21: #{_lambda_.4} parent=19 // pred_check
          %p130 = pneg %p29
        $region22: #{_lambda_.4} parent=19 // pred_check_branch
          %132 = sbr.rel (%p130) target = $region24
        $region23: #{_lambda_.4} parent=19 // pred_region
          %s133 = smul.u32 2, %s9
          %p134 = scmp.lt.s32.totalorder %s133, 7
          %s135 = scalar_select %p134, %s133, 7
          %s136 = smul.addr %s135, 4
          %s137 = smul.addr %s136, 8
          %s138 = scalar_lea.vmem %s0, %s137
          %s139 = smul.u32 2, %s9
        $region24: #{_lambda_.4} parent=19 // pred_fallthru
          _
        // Predicated region
        $region25: #{_lambda_.4} parent=19 // pred_check
          %p140 = pneg %p55
        $region26: #{_lambda_.4} parent=19 // pred_check_branch
          %142 = sbr.rel (%p140) target = $region28
        $region27: #{_lambda_.4} parent=19 // pred_region
          %s143 = sand.u32 %s45, 1
          %s144 = sand.u32 %s45, 1
          %s145 = smul.addr %s144, 1024
          %s146 = scalar_lea.vmem [#allocation2], %s145
          %s147 = smul.u32 2, %s9
          %s148 = smul.addr %s147, 32
          %s149 = smul.addr %s148, 8
          %s150 = scalar_lea.vmem %s1, %s149
          // Predicated region
          $region29: #{_lambda_.4} parent=27 // pred_check
            _
          $region30: #{_lambda_.4} parent=27 // pred_check_branch
            %152 = sbr.rel (0) target = $region32
          $region31: #{_lambda_.4} parent=27 // pred_region
            // Predicated region
            $region33: #{_lambda_.4} parent=31 // pred_check
              _
            $region34: #{_lambda_.4} parent=31 // pred_check_branch
              %154 = sbr.rel (0) target = $region36
            $region35: #{_lambda_.4} parent=31 // pred_region
              // Predicated region
              $region48: #{_lambda_.4} parent=35 // pred_check
                _
              $region49: #{_lambda_.4} parent=35 // pred_check_branch
                %423 = sbr.rel (0) target = $region51
              $region50: #{_lambda_.4} parent=35 // pred_region
                loop: start=0, step=1, limit=1
                $region52: #{_lambda_.4} parent=50 // loop_pre_header
                  _
                $region53: #{_lambda_.4} parent=50 // loop_header
                  %s425 = sphi 0, %s429
                  %p426 = scmp.ge.s32.totalorder %s425, 1
                  %s430 = sphi %s150, %s150
                  %s431 = sphi %s146, %s146
                $region54: #{_lambda_.4} parent=50 // loop_header_branch
                  %428 = sbr.rel (%p426) target = $region58
                $region55: #{_lambda_.4} parent=50 // loop_body
                  %v432 = vld [vmem:[%s430] sm:$0xff]
                  %433 = vst [vmem:[%s431] sm:$0xff] %v432
                  %v434 = vld [vmem:[%s430 + $0x8] sm:$0xff]
                  %435 = vst [vmem:[%s431 + $0x8] sm:$0xff] %v434
                  %v436 = vld [vmem:[%s430 + $0x10] sm:$0xff]
                  %437 = vst [vmem:[%s431 + $0x10] sm:$0xff] %v436
                  %v438 = vld [vmem:[%s430 + $0x18] sm:$0xff]
                  %439 = vst [vmem:[%s431 + $0x18] sm:$0xff] %v438
                  %v440 = vld [vmem:[%s430 + $0x20] sm:$0xff]
                  %441 = vst [vmem:[%s431 + $0x20] sm:$0xff] %v440
                  %v442 = vld [vmem:[%s430 + $0x28] sm:$0xff]
                  %443 = vst [vmem:[%s431 + $0x28] sm:$0xff] %v442
                  %v444 = vld [vmem:[%s430 + $0x30] sm:$0xff]
                  %445 = vst [vmem:[%s431 + $0x30] sm:$0xff] %v444
                  %v446 = vld [vmem:[%s430 + $0x38] sm:$0xff]
                  %447 = vst [vmem:[%s431 + $0x38] sm:$0xff] %v446
                  %v448 = vld [vmem:[%s430 + $0x40] sm:$0xff]
                  %449 = vst [vmem:[%s431 + $0x40] sm:$0xff] %v448
                  %v450 = vld [vmem:[%s430 + $0x48] sm:$0xff]
                  %451 = vst [vmem:[%s431 + $0x48] sm:$0xff] %v450
                  %v452 = vld [vmem:[%s430 + $0x50] sm:$0xff]
                  %453 = vst [vmem:[%s431 + $0x50] sm:$0xff] %v452
                  %v454 = vld [vmem:[%s430 + $0x58] sm:$0xff]
                  %455 = vst [vmem:[%s431 + $0x58] sm:$0xff] %v454
                  %v456 = vld [vmem:[%s430 + $0x60] sm:$0xff]
                  %457 = vst [vmem:[%s431 + $0x60] sm:$0xff] %v456
                  %v458 = vld [vmem:[%s430 + $0x68] sm:$0xff]
                  %459 = vst [vmem:[%s431 + $0x68] sm:$0xff] %v458
                  %v460 = vld [vmem:[%s430 + $0x70] sm:$0xff]
                  %461 = vst [vmem:[%s431 + $0x70] sm:$0xff] %v460
                  %v462 = vld [vmem:[%s430 + $0x78] sm:$0xff]
                  %463 = vst [vmem:[%s431 + $0x78] sm:$0xff] %v462
                  %v464 = vld [vmem:[%s430 + $0x80] sm:$0xff]
                  %465 = vst [vmem:[%s431 + $0x80] sm:$0xff] %v464
                  %v466 = vld [vmem:[%s430 + $0x88] sm:$0xff]
                  %467 = vst [vmem:[%s431 + $0x88] sm:$0xff] %v466
                  %v468 = vld [vmem:[%s430 + $0x90] sm:$0xff]
                  %469 = vst [vmem:[%s431 + $0x90] sm:$0xff] %v468
                  %v470 = vld [vmem:[%s430 + $0x98] sm:$0xff]
                  %471 = vst [vmem:[%s431 + $0x98] sm:$0xff] %v470
                  %v472 = vld [vmem:[%s430 + $0xa0] sm:$0xff]
                  %473 = vst [vmem:[%s431 + $0xa0] sm:$0xff] %v472
                  %v474 = vld [vmem:[%s430 + $0xa8] sm:$0xff]
                  %475 = vst [vmem:[%s431 + $0xa8] sm:$0xff] %v474
                  %v476 = vld [vmem:[%s430 + $0xb0] sm:$0xff]
                  %477 = vst [vmem:[%s431 + $0xb0] sm:$0xff] %v476
                  %v478 = vld [vmem:[%s430 + $0xb8] sm:$0xff]
                  %479 = vst [vmem:[%s431 + $0xb8] sm:$0xff] %v478
                  %v480 = vld [vmem:[%s430 + $0xc0] sm:$0xff]
                  %481 = vst [vmem:[%s431 + $0xc0] sm:$0xff] %v480
                  %v482 = vld [vmem:[%s430 + $0xc8] sm:$0xff]
                  %483 = vst [vmem:[%s431 + $0xc8] sm:$0xff] %v482
                  %v484 = vld [vmem:[%s430 + $0xd0] sm:$0xff]
                  %485 = vst [vmem:[%s431 + $0xd0] sm:$0xff] %v484
                  %v486 = vld [vmem:[%s430 + $0xd8] sm:$0xff]
                  %487 = vst [vmem:[%s431 + $0xd8] sm:$0xff] %v486
                  %v488 = vld [vmem:[%s430 + $0xe0] sm:$0xff]
                  %489 = vst [vmem:[%s431 + $0xe0] sm:$0xff] %v488
                  %v490 = vld [vmem:[%s430 + $0xe8] sm:$0xff]
                  %491 = vst [vmem:[%s431 + $0xe8] sm:$0xff] %v490
                  %v492 = vld [vmem:[%s430 + $0xf0] sm:$0xff]
                  %493 = vst [vmem:[%s431 + $0xf0] sm:$0xff] %v492
                  %v494 = vld [vmem:[%s430 + $0xf8] sm:$0xff]
                  %495 = vst [vmem:[%s431 + $0xf8] sm:$0xff] %v494
                  %v496 = vld [vmem:[%s430 + $0x100] sm:$0xff]
                  %497 = vst [vmem:[%s431 + $0x100] sm:$0xff] %v496
                  %v498 = vld [vmem:[%s430 + $0x108] sm:$0xff]
                  %499 = vst [vmem:[%s431 + $0x108] sm:$0xff] %v498
                  %v500 = vld [vmem:[%s430 + $0x110] sm:$0xff]
                  %501 = vst [vmem:[%s431 + $0x110] sm:$0xff] %v500
                  %v502 = vld [vmem:[%s430 + $0x118] sm:$0xff]
                  %503 = vst [vmem:[%s431 + $0x118] sm:$0xff] %v502
                  %v504 = vld [vmem:[%s430 + $0x120] sm:$0xff]
                  %505 = vst [vmem:[%s431 + $0x120] sm:$0xff] %v504
                  %v506 = vld [vmem:[%s430 + $0x128] sm:$0xff]
                  %507 = vst [vmem:[%s431 + $0x128] sm:$0xff] %v506
                  %v508 = vld [vmem:[%s430 + $0x130] sm:$0xff]
                  %509 = vst [vmem:[%s431 + $0x130] sm:$0xff] %v508
                  %v510 = vld [vmem:[%s430 + $0x138] sm:$0xff]
                  %511 = vst [vmem:[%s431 + $0x138] sm:$0xff] %v510
                  %v512 = vld [vmem:[%s430 + $0x140] sm:$0xff]
                  %513 = vst [vmem:[%s431 + $0x140] sm:$0xff] %v512
                  %v514 = vld [vmem:[%s430 + $0x148] sm:$0xff]
                  %515 = vst [vmem:[%s431 + $0x148] sm:$0xff] %v514
                  %v516 = vld [vmem:[%s430 + $0x150] sm:$0xff]
                  %517 = vst [vmem:[%s431 + $0x150] sm:$0xff] %v516
                  %v518 = vld [vmem:[%s430 + $0x158] sm:$0xff]
                  %519 = vst [vmem:[%s431 + $0x158] sm:$0xff] %v518
                  %v520 = vld [vmem:[%s430 + $0x160] sm:$0xff]
                  %521 = vst [vmem:[%s431 + $0x160] sm:$0xff] %v520
                  %v522 = vld [vmem:[%s430 + $0x168] sm:$0xff]
                  %523 = vst [vmem:[%s431 + $0x168] sm:$0xff] %v522
                  %v524 = vld [vmem:[%s430 + $0x170] sm:$0xff]
                  %525 = vst [vmem:[%s431 + $0x170] sm:$0xff] %v524
                  %v526 = vld [vmem:[%s430 + $0x178] sm:$0xff]
                  %527 = vst [vmem:[%s431 + $0x178] sm:$0xff] %v526
                  %v528 = vld [vmem:[%s430 + $0x180] sm:$0xff]
                  %529 = vst [vmem:[%s431 + $0x180] sm:$0xff] %v528
                  %v530 = vld [vmem:[%s430 + $0x188] sm:$0xff]
                  %531 = vst [vmem:[%s431 + $0x188] sm:$0xff] %v530
                  %v532 = vld [vmem:[%s430 + $0x190] sm:$0xff]
                  %533 = vst [vmem:[%s431 + $0x190] sm:$0xff] %v532
                  %v534 = vld [vmem:[%s430 + $0x198] sm:$0xff]
                  %535 = vst [vmem:[%s431 + $0x198] sm:$0xff] %v534
                  %v536 = vld [vmem:[%s430 + $0x1a0] sm:$0xff]
                  %537 = vst [vmem:[%s431 + $0x1a0] sm:$0xff] %v536
                  %v538 = vld [vmem:[%s430 + $0x1a8] sm:$0xff]
                  %539 = vst [vmem:[%s431 + $0x1a8] sm:$0xff] %v538
                  %v540 = vld [vmem:[%s430 + $0x1b0] sm:$0xff]
                  %541 = vst [vmem:[%s431 + $0x1b0] sm:$0xff] %v540
                  %v542 = vld [vmem:[%s430 + $0x1b8] sm:$0xff]
                  %543 = vst [vmem:[%s431 + $0x1b8] sm:$0xff] %v542
                  %v544 = vld [vmem:[%s430 + $0x1c0] sm:$0xff]
                  %545 = vst [vmem:[%s431 + $0x1c0] sm:$0xff] %v544
                  %v546 = vld [vmem:[%s430 + $0x1c8] sm:$0xff]
                  %547 = vst [vmem:[%s431 + $0x1c8] sm:$0xff] %v546
                  %v548 = vld [vmem:[%s430 + $0x1d0] sm:$0xff]
                  %549 = vst [vmem:[%s431 + $0x1d0] sm:$0xff] %v548
                  %v550 = vld [vmem:[%s430 + $0x1d8] sm:$0xff]
                  %551 = vst [vmem:[%s431 + $0x1d8] sm:$0xff] %v550
                  %v552 = vld [vmem:[%s430 + $0x1e0] sm:$0xff]
                  %553 = vst [vmem:[%s431 + $0x1e0] sm:$0xff] %v552
                  %v554 = vld [vmem:[%s430 + $0x1e8] sm:$0xff]
                  %555 = vst [vmem:[%s431 + $0x1e8] sm:$0xff] %v554
                  %v556 = vld [vmem:[%s430 + $0x1f0] sm:$0xff]
                  %557 = vst [vmem:[%s431 + $0x1f0] sm:$0xff] %v556
                  %v558 = vld [vmem:[%s430 + $0x1f8] sm:$0xff]
                  %559 = vst [vmem:[%s431 + $0x1f8] sm:$0xff] %v558
                  %v560 = vld [vmem:[%s430 + $0x800] sm:$0xff]
                  %561 = vst [vmem:[%s431 + $0x200] sm:$0xff] %v560
                  %v562 = vld [vmem:[%s430 + $0x808] sm:$0xff]
                  %563 = vst [vmem:[%s431 + $0x208] sm:$0xff] %v562
                  %v564 = vld [vmem:[%s430 + $0x810] sm:$0xff]
                  %565 = vst [vmem:[%s431 + $0x210] sm:$0xff] %v564
                  %v566 = vld [vmem:[%s430 + $0x818] sm:$0xff]
                  %567 = vst [vmem:[%s431 + $0x218] sm:$0xff] %v566
                  %v568 = vld [vmem:[%s430 + $0x820] sm:$0xff]
                  %569 = vst [vmem:[%s431 + $0x220] sm:$0xff] %v568
                  %v570 = vld [vmem:[%s430 + $0x828] sm:$0xff]
                  %571 = vst [vmem:[%s431 + $0x228] sm:$0xff] %v570
                  %v572 = vld [vmem:[%s430 + $0x830] sm:$0xff]
                  %573 = vst [vmem:[%s431 + $0x230] sm:$0xff] %v572
                  %v574 = vld [vmem:[%s430 + $0x838] sm:$0xff]
                  %575 = vst [vmem:[%s431 + $0x238] sm:$0xff] %v574
                  %v576 = vld [vmem:[%s430 + $0x840] sm:$0xff]
                  %577 = vst [vmem:[%s431 + $0x240] sm:$0xff] %v576
                  %v578 = vld [vmem:[%s430 + $0x848] sm:$0xff]
                  %579 = vst [vmem:[%s431 + $0x248] sm:$0xff] %v578
                  %v580 = vld [vmem:[%s430 + $0x850] sm:$0xff]
                  %581 = vst [vmem:[%s431 + $0x250] sm:$0xff] %v580
                  %v582 = vld [vmem:[%s430 + $0x858] sm:$0xff]
                  %583 = vst [vmem:[%s431 + $0x258] sm:$0xff] %v582
                  %v584 = vld [vmem:[%s430 + $0x860] sm:$0xff]
                  %585 = vst [vmem:[%s431 + $0x260] sm:$0xff] %v584
                  %v586 = vld [vmem:[%s430 + $0x868] sm:$0xff]
                  %587 = vst [vmem:[%s431 + $0x268] sm:$0xff] %v586
                  %v588 = vld [vmem:[%s430 + $0x870] sm:$0xff]
                  %589 = vst [vmem:[%s431 + $0x270] sm:$0xff] %v588
                  %v590 = vld [vmem:[%s430 + $0x878] sm:$0xff]
                  %591 = vst [vmem:[%s431 + $0x278] sm:$0xff] %v590
                  %v592 = vld [vmem:[%s430 + $0x880] sm:$0xff]
                  %593 = vst [vmem:[%s431 + $0x280] sm:$0xff] %v592
                  %v594 = vld [vmem:[%s430 + $0x888] sm:$0xff]
                  %595 = vst [vmem:[%s431 + $0x288] sm:$0xff] %v594
                  %v596 = vld [vmem:[%s430 + $0x890] sm:$0xff]
                  %597 = vst [vmem:[%s431 + $0x290] sm:$0xff] %v596
                  %v598 = vld [vmem:[%s430 + $0x898] sm:$0xff]
                  %599 = vst [vmem:[%s431 + $0x298] sm:$0xff] %v598
                  %v600 = vld [vmem:[%s430 + $0x8a0] sm:$0xff]
                  %601 = vst [vmem:[%s431 + $0x2a0] sm:$0xff] %v600
                  %v602 = vld [vmem:[%s430 + $0x8a8] sm:$0xff]
                  %603 = vst [vmem:[%s431 + $0x2a8] sm:$0xff] %v602
                  %v604 = vld [vmem:[%s430 + $0x8b0] sm:$0xff]
                  %605 = vst [vmem:[%s431 + $0x2b0] sm:$0xff] %v604
                  %v606 = vld [vmem:[%s430 + $0x8b8] sm:$0xff]
                  %607 = vst [vmem:[%s431 + $0x2b8] sm:$0xff] %v606
                  %v608 = vld [vmem:[%s430 + $0x8c0] sm:$0xff]
                  %609 = vst [vmem:[%s431 + $0x2c0] sm:$0xff] %v608
                  %v610 = vld [vmem:[%s430 + $0x8c8] sm:$0xff]
                  %611 = vst [vmem:[%s431 + $0x2c8] sm:$0xff] %v610
                  %v612 = vld [vmem:[%s430 + $0x8d0] sm:$0xff]
                  %613 = vst [vmem:[%s431 + $0x2d0] sm:$0xff] %v612
                  %v614 = vld [vmem:[%s430 + $0x8d8] sm:$0xff]
                  %615 = vst [vmem:[%s431 + $0x2d8] sm:$0xff] %v614
                  %v616 = vld [vmem:[%s430 + $0x8e0] sm:$0xff]
                  %617 = vst [vmem:[%s431 + $0x2e0] sm:$0xff] %v616
                  %v618 = vld [vmem:[%s430 + $0x8e8] sm:$0xff]
                  %619 = vst [vmem:[%s431 + $0x2e8] sm:$0xff] %v618
                  %v620 = vld [vmem:[%s430 + $0x8f0] sm:$0xff]
                  %621 = vst [vmem:[%s431 + $0x2f0] sm:$0xff] %v620
                  %v622 = vld [vmem:[%s430 + $0x8f8] sm:$0xff]
                  %623 = vst [vmem:[%s431 + $0x2f8] sm:$0xff] %v622
                  %v624 = vld [vmem:[%s430 + $0x900] sm:$0xff]
                  %625 = vst [vmem:[%s431 + $0x300] sm:$0xff] %v624
                  %v626 = vld [vmem:[%s430 + $0x908] sm:$0xff]
                  %627 = vst [vmem:[%s431 + $0x308] sm:$0xff] %v626
                  %v628 = vld [vmem:[%s430 + $0x910] sm:$0xff]
                  %629 = vst [vmem:[%s431 + $0x310] sm:$0xff] %v628
                  %v630 = vld [vmem:[%s430 + $0x918] sm:$0xff]
                  %631 = vst [vmem:[%s431 + $0x318] sm:$0xff] %v630
                  %v632 = vld [vmem:[%s430 + $0x920] sm:$0xff]
                  %633 = vst [vmem:[%s431 + $0x320] sm:$0xff] %v632
                  %v634 = vld [vmem:[%s430 + $0x928] sm:$0xff]
                  %635 = vst [vmem:[%s431 + $0x328] sm:$0xff] %v634
                  %v636 = vld [vmem:[%s430 + $0x930] sm:$0xff]
                  %637 = vst [vmem:[%s431 + $0x330] sm:$0xff] %v636
                  %v638 = vld [vmem:[%s430 + $0x938] sm:$0xff]
                  %639 = vst [vmem:[%s431 + $0x338] sm:$0xff] %v638
                  %v640 = vld [vmem:[%s430 + $0x940] sm:$0xff]
                  %641 = vst [vmem:[%s431 + $0x340] sm:$0xff] %v640
                  %v642 = vld [vmem:[%s430 + $0x948] sm:$0xff]
                  %643 = vst [vmem:[%s431 + $0x348] sm:$0xff] %v642
                  %v644 = vld [vmem:[%s430 + $0x950] sm:$0xff]
                  %645 = vst [vmem:[%s431 + $0x350] sm:$0xff] %v644
                  %v646 = vld [vmem:[%s430 + $0x958] sm:$0xff]
                  %647 = vst [vmem:[%s431 + $0x358] sm:$0xff] %v646
                  %v648 = vld [vmem:[%s430 + $0x960] sm:$0xff]
                  %649 = vst [vmem:[%s431 + $0x360] sm:$0xff] %v648
                  %v650 = vld [vmem:[%s430 + $0x968] sm:$0xff]
                  %651 = vst [vmem:[%s431 + $0x368] sm:$0xff] %v650
                  %v652 = vld [vmem:[%s430 + $0x970] sm:$0xff]
                  %653 = vst [vmem:[%s431 + $0x370] sm:$0xff] %v652
                  %v654 = vld [vmem:[%s430 + $0x978] sm:$0xff]
                  %655 = vst [vmem:[%s431 + $0x378] sm:$0xff] %v654
                  %v656 = vld [vmem:[%s430 + $0x980] sm:$0xff]
                  %657 = vst [vmem:[%s431 + $0x380] sm:$0xff] %v656
                  %v658 = vld [vmem:[%s430 + $0x988] sm:$0xff]
                  %659 = vst [vmem:[%s431 + $0x388] sm:$0xff] %v658
                  %v660 = vld [vmem:[%s430 + $0x990] sm:$0xff]
                  %661 = vst [vmem:[%s431 + $0x390] sm:$0xff] %v660
                  %v662 = vld [vmem:[%s430 + $0x998] sm:$0xff]
                  %663 = vst [vmem:[%s431 + $0x398] sm:$0xff] %v662
                  %v664 = vld [vmem:[%s430 + $0x9a0] sm:$0xff]
                  %665 = vst [vmem:[%s431 + $0x3a0] sm:$0xff] %v664
                  %v666 = vld [vmem:[%s430 + $0x9a8] sm:$0xff]
                  %667 = vst [vmem:[%s431 + $0x3a8] sm:$0xff] %v666
                  %v668 = vld [vmem:[%s430 + $0x9b0] sm:$0xff]
                  %669 = vst [vmem:[%s431 + $0x3b0] sm:$0xff] %v668
                  %v670 = vld [vmem:[%s430 + $0x9b8] sm:$0xff]
                  %671 = vst [vmem:[%s431 + $0x3b8] sm:$0xff] %v670
                  %v672 = vld [vmem:[%s430 + $0x9c0] sm:$0xff]
                  %673 = vst [vmem:[%s431 + $0x3c0] sm:$0xff] %v672
                  %v674 = vld [vmem:[%s430 + $0x9c8] sm:$0xff]
                  %675 = vst [vmem:[%s431 + $0x3c8] sm:$0xff] %v674
                  %v676 = vld [vmem:[%s430 + $0x9d0] sm:$0xff]
                  %677 = vst [vmem:[%s431 + $0x3d0] sm:$0xff] %v676
                  %v678 = vld [vmem:[%s430 + $0x9d8] sm:$0xff]
                  %679 = vst [vmem:[%s431 + $0x3d8] sm:$0xff] %v678
                  %v680 = vld [vmem:[%s430 + $0x9e0] sm:$0xff]
                  %681 = vst [vmem:[%s431 + $0x3e0] sm:$0xff] %v680
                  %v682 = vld [vmem:[%s430 + $0x9e8] sm:$0xff]
                  %683 = vst [vmem:[%s431 + $0x3e8] sm:$0xff] %v682
                  %v684 = vld [vmem:[%s430 + $0x9f0] sm:$0xff]
                  %685 = vst [vmem:[%s431 + $0x3f0] sm:$0xff] %v684
                  %v686 = vld [vmem:[%s430 + $0x9f8] sm:$0xff]
                  %687 = vst [vmem:[%s431 + $0x3f8] sm:$0xff] %v686
                $region56: #{_lambda_.4} parent=50 // loop_footer
                  %s429 = sadd.s32 1, %s425
                $region57: #{_lambda_.4} parent=50 // loop_footer_branch
                  %424 = sbr.rel target = $region53
                $region58: #{_lambda_.4} parent=50 // loop_exit
                  _
              $region51: #{_lambda_.4} parent=35 // pred_fallthru
                _
              // Predicated region
              $region59: #{_lambda_.4} parent=35 // pred_check
                _
              $region60: #{_lambda_.4} parent=35 // pred_check_branch
                %689 = sbr.rel target = $region62
              $region61: #{_lambda_.4} parent=35 // pred_region
                _
              $region62: #{_lambda_.4} parent=35 // pred_fallthru
                _
            $region36: #{_lambda_.4} parent=31 // pred_fallthru
              _
            // Predicated region
            $region37: #{_lambda_.4} parent=31 // pred_check
              _
            $region38: #{_lambda_.4} parent=31 // pred_check_branch
              %156 = sbr.rel target = $region40
            $region39: #{_lambda_.4} parent=31 // pred_region
              loop: start=0, step=1, limit=1
              $region41: #{_lambda_.4} parent=39 // loop_pre_header
                _
              $region42: #{_lambda_.4} parent=39 // loop_header
                %s159 = sphi 0, %s163
                %p160 = scmp.ge.s32.totalorder %s159, 1
                %s164 = sphi %s150, %s150
                %s165 = sphi %s146, %s146
              $region43: #{_lambda_.4} parent=39 // loop_header_branch
                %162 = sbr.rel (%p160) target = $region47
              $region44: #{_lambda_.4} parent=39 // loop_body
                %v166 = vld [vmem:[%s164] sm:$0xff]
                %167 = vst [vmem:[%s165] sm:$0xff] %v166
                %v168 = vld [vmem:[%s164 + $0x8] sm:$0xff]
                %169 = vst [vmem:[%s165 + $0x8] sm:$0xff] %v168
                %v170 = vld [vmem:[%s164 + $0x10] sm:$0xff]
                %171 = vst [vmem:[%s165 + $0x10] sm:$0xff] %v170
                %v172 = vld [vmem:[%s164 + $0x18] sm:$0xff]
                %173 = vst [vmem:[%s165 + $0x18] sm:$0xff] %v172
                %v174 = vld [vmem:[%s164 + $0x20] sm:$0xff]
                %175 = vst [vmem:[%s165 + $0x20] sm:$0xff] %v174
                %v176 = vld [vmem:[%s164 + $0x28] sm:$0xff]
                %177 = vst [vmem:[%s165 + $0x28] sm:$0xff] %v176
                %v178 = vld [vmem:[%s164 + $0x30] sm:$0xff]
                %179 = vst [vmem:[%s165 + $0x30] sm:$0xff] %v178
                %v180 = vld [vmem:[%s164 + $0x38] sm:$0xff]
                %181 = vst [vmem:[%s165 + $0x38] sm:$0xff] %v180
                %v182 = vld [vmem:[%s164 + $0x40] sm:$0xff]
                %183 = vst [vmem:[%s165 + $0x40] sm:$0xff] %v182
                %v184 = vld [vmem:[%s164 + $0x48] sm:$0xff]
                %185 = vst [vmem:[%s165 + $0x48] sm:$0xff] %v184
                %v186 = vld [vmem:[%s164 + $0x50] sm:$0xff]
                %187 = vst [vmem:[%s165 + $0x50] sm:$0xff] %v186
                %v188 = vld [vmem:[%s164 + $0x58] sm:$0xff]
                %189 = vst [vmem:[%s165 + $0x58] sm:$0xff] %v188
                %v190 = vld [vmem:[%s164 + $0x60] sm:$0xff]
                %191 = vst [vmem:[%s165 + $0x60] sm:$0xff] %v190
                %v192 = vld [vmem:[%s164 + $0x68] sm:$0xff]
                %193 = vst [vmem:[%s165 + $0x68] sm:$0xff] %v192
                %v194 = vld [vmem:[%s164 + $0x70] sm:$0xff]
                %195 = vst [vmem:[%s165 + $0x70] sm:$0xff] %v194
                %v196 = vld [vmem:[%s164 + $0x78] sm:$0xff]
                %197 = vst [vmem:[%s165 + $0x78] sm:$0xff] %v196
                %v198 = vld [vmem:[%s164 + $0x80] sm:$0xff]
                %199 = vst [vmem:[%s165 + $0x80] sm:$0xff] %v198
                %v200 = vld [vmem:[%s164 + $0x88] sm:$0xff]
                %201 = vst [vmem:[%s165 + $0x88] sm:$0xff] %v200
                %v202 = vld [vmem:[%s164 + $0x90] sm:$0xff]
                %203 = vst [vmem:[%s165 + $0x90] sm:$0xff] %v202
                %v204 = vld [vmem:[%s164 + $0x98] sm:$0xff]
                %205 = vst [vmem:[%s165 + $0x98] sm:$0xff] %v204
                %v206 = vld [vmem:[%s164 + $0xa0] sm:$0xff]
                %207 = vst [vmem:[%s165 + $0xa0] sm:$0xff] %v206
                %v208 = vld [vmem:[%s164 + $0xa8] sm:$0xff]
                %209 = vst [vmem:[%s165 + $0xa8] sm:$0xff] %v208
                %v210 = vld [vmem:[%s164 + $0xb0] sm:$0xff]
                %211 = vst [vmem:[%s165 + $0xb0] sm:$0xff] %v210
                %v212 = vld [vmem:[%s164 + $0xb8] sm:$0xff]
                %213 = vst [vmem:[%s165 + $0xb8] sm:$0xff] %v212
                %v214 = vld [vmem:[%s164 + $0xc0] sm:$0xff]
                %215 = vst [vmem:[%s165 + $0xc0] sm:$0xff] %v214
                %v216 = vld [vmem:[%s164 + $0xc8] sm:$0xff]
                %217 = vst [vmem:[%s165 + $0xc8] sm:$0xff] %v216
                %v218 = vld [vmem:[%s164 + $0xd0] sm:$0xff]
                %219 = vst [vmem:[%s165 + $0xd0] sm:$0xff] %v218
                %v220 = vld [vmem:[%s164 + $0xd8] sm:$0xff]
                %221 = vst [vmem:[%s165 + $0xd8] sm:$0xff] %v220
                %v222 = vld [vmem:[%s164 + $0xe0] sm:$0xff]
                %223 = vst [vmem:[%s165 + $0xe0] sm:$0xff] %v222
                %v224 = vld [vmem:[%s164 + $0xe8] sm:$0xff]
                %225 = vst [vmem:[%s165 + $0xe8] sm:$0xff] %v224
                %v226 = vld [vmem:[%s164 + $0xf0] sm:$0xff]
                %227 = vst [vmem:[%s165 + $0xf0] sm:$0xff] %v226
                %v228 = vld [vmem:[%s164 + $0xf8] sm:$0xff]
                %229 = vst [vmem:[%s165 + $0xf8] sm:$0xff] %v228
                %v230 = vld [vmem:[%s164 + $0x100] sm:$0xff]
                %231 = vst [vmem:[%s165 + $0x100] sm:$0xff] %v230
                %v232 = vld [vmem:[%s164 + $0x108] sm:$0xff]
                %233 = vst [vmem:[%s165 + $0x108] sm:$0xff] %v232
                %v234 = vld [vmem:[%s164 + $0x110] sm:$0xff]
                %235 = vst [vmem:[%s165 + $0x110] sm:$0xff] %v234
                %v236 = vld [vmem:[%s164 + $0x118] sm:$0xff]
                %237 = vst [vmem:[%s165 + $0x118] sm:$0xff] %v236
                %v238 = vld [vmem:[%s164 + $0x120] sm:$0xff]
                %239 = vst [vmem:[%s165 + $0x120] sm:$0xff] %v238
                %v240 = vld [vmem:[%s164 + $0x128] sm:$0xff]
                %241 = vst [vmem:[%s165 + $0x128] sm:$0xff] %v240
                %v242 = vld [vmem:[%s164 + $0x130] sm:$0xff]
                %243 = vst [vmem:[%s165 + $0x130] sm:$0xff] %v242
                %v244 = vld [vmem:[%s164 + $0x138] sm:$0xff]
                %245 = vst [vmem:[%s165 + $0x138] sm:$0xff] %v244
                %v246 = vld [vmem:[%s164 + $0x140] sm:$0xff]
                %247 = vst [vmem:[%s165 + $0x140] sm:$0xff] %v246
                %v248 = vld [vmem:[%s164 + $0x148] sm:$0xff]
                %249 = vst [vmem:[%s165 + $0x148] sm:$0xff] %v248
                %v250 = vld [vmem:[%s164 + $0x150] sm:$0xff]
                %251 = vst [vmem:[%s165 + $0x150] sm:$0xff] %v250
                %v252 = vld [vmem:[%s164 + $0x158] sm:$0xff]
                %253 = vst [vmem:[%s165 + $0x158] sm:$0xff] %v252
                %v254 = vld [vmem:[%s164 + $0x160] sm:$0xff]
                %255 = vst [vmem:[%s165 + $0x160] sm:$0xff] %v254
                %v256 = vld [vmem:[%s164 + $0x168] sm:$0xff]
                %257 = vst [vmem:[%s165 + $0x168] sm:$0xff] %v256
                %v258 = vld [vmem:[%s164 + $0x170] sm:$0xff]
                %259 = vst [vmem:[%s165 + $0x170] sm:$0xff] %v258
                %v260 = vld [vmem:[%s164 + $0x178] sm:$0xff]
                %261 = vst [vmem:[%s165 + $0x178] sm:$0xff] %v260
                %v262 = vld [vmem:[%s164 + $0x180] sm:$0xff]
                %263 = vst [vmem:[%s165 + $0x180] sm:$0xff] %v262
                %v264 = vld [vmem:[%s164 + $0x188] sm:$0xff]
                %265 = vst [vmem:[%s165 + $0x188] sm:$0xff] %v264
                %v266 = vld [vmem:[%s164 + $0x190] sm:$0xff]
                %267 = vst [vmem:[%s165 + $0x190] sm:$0xff] %v266
                %v268 = vld [vmem:[%s164 + $0x198] sm:$0xff]
                %269 = vst [vmem:[%s165 + $0x198] sm:$0xff] %v268
                %v270 = vld [vmem:[%s164 + $0x1a0] sm:$0xff]
                %271 = vst [vmem:[%s165 + $0x1a0] sm:$0xff] %v270
                %v272 = vld [vmem:[%s164 + $0x1a8] sm:$0xff]
                %273 = vst [vmem:[%s165 + $0x1a8] sm:$0xff] %v272
                %v274 = vld [vmem:[%s164 + $0x1b0] sm:$0xff]
                %275 = vst [vmem:[%s165 + $0x1b0] sm:$0xff] %v274
                %v276 = vld [vmem:[%s164 + $0x1b8] sm:$0xff]
                %277 = vst [vmem:[%s165 + $0x1b8] sm:$0xff] %v276
                %v278 = vld [vmem:[%s164 + $0x1c0] sm:$0xff]
                %279 = vst [vmem:[%s165 + $0x1c0] sm:$0xff] %v278
                %v280 = vld [vmem:[%s164 + $0x1c8] sm:$0xff]
                %281 = vst [vmem:[%s165 + $0x1c8] sm:$0xff] %v280
                %v282 = vld [vmem:[%s164 + $0x1d0] sm:$0xff]
                %283 = vst [vmem:[%s165 + $0x1d0] sm:$0xff] %v282
                %v284 = vld [vmem:[%s164 + $0x1d8] sm:$0xff]
                %285 = vst [vmem:[%s165 + $0x1d8] sm:$0xff] %v284
                %v286 = vld [vmem:[%s164 + $0x1e0] sm:$0xff]
                %287 = vst [vmem:[%s165 + $0x1e0] sm:$0xff] %v286
                %v288 = vld [vmem:[%s164 + $0x1e8] sm:$0xff]
                %289 = vst [vmem:[%s165 + $0x1e8] sm:$0xff] %v288
                %v290 = vld [vmem:[%s164 + $0x1f0] sm:$0xff]
                %291 = vst [vmem:[%s165 + $0x1f0] sm:$0xff] %v290
                %v292 = vld [vmem:[%s164 + $0x1f8] sm:$0xff]
                %293 = vst [vmem:[%s165 + $0x1f8] sm:$0xff] %v292
                %v294 = vld [vmem:[%s164 + $0x800] sm:$0xff]
                %295 = vst [vmem:[%s165 + $0x200] sm:$0xff] %v294
                %v296 = vld [vmem:[%s164 + $0x808] sm:$0xff]
                %297 = vst [vmem:[%s165 + $0x208] sm:$0xff] %v296
                %v298 = vld [vmem:[%s164 + $0x810] sm:$0xff]
                %299 = vst [vmem:[%s165 + $0x210] sm:$0xff] %v298
                %v300 = vld [vmem:[%s164 + $0x818] sm:$0xff]
                %301 = vst [vmem:[%s165 + $0x218] sm:$0xff] %v300
                %v302 = vld [vmem:[%s164 + $0x820] sm:$0xff]
                %303 = vst [vmem:[%s165 + $0x220] sm:$0xff] %v302
                %v304 = vld [vmem:[%s164 + $0x828] sm:$0xff]
                %305 = vst [vmem:[%s165 + $0x228] sm:$0xff] %v304
                %v306 = vld [vmem:[%s164 + $0x830] sm:$0xff]
                %307 = vst [vmem:[%s165 + $0x230] sm:$0xff] %v306
                %v308 = vld [vmem:[%s164 + $0x838] sm:$0xff]
                %309 = vst [vmem:[%s165 + $0x238] sm:$0xff] %v308
                %v310 = vld [vmem:[%s164 + $0x840] sm:$0xff]
                %311 = vst [vmem:[%s165 + $0x240] sm:$0xff] %v310
                %v312 = vld [vmem:[%s164 + $0x848] sm:$0xff]
                %313 = vst [vmem:[%s165 + $0x248] sm:$0xff] %v312
                %v314 = vld [vmem:[%s164 + $0x850] sm:$0xff]
                %315 = vst [vmem:[%s165 + $0x250] sm:$0xff] %v314
                %v316 = vld [vmem:[%s164 + $0x858] sm:$0xff]
                %317 = vst [vmem:[%s165 + $0x258] sm:$0xff] %v316
                %v318 = vld [vmem:[%s164 + $0x860] sm:$0xff]
                %319 = vst [vmem:[%s165 + $0x260] sm:$0xff] %v318
                %v320 = vld [vmem:[%s164 + $0x868] sm:$0xff]
                %321 = vst [vmem:[%s165 + $0x268] sm:$0xff] %v320
                %v322 = vld [vmem:[%s164 + $0x870] sm:$0xff]
                %323 = vst [vmem:[%s165 + $0x270] sm:$0xff] %v322
                %v324 = vld [vmem:[%s164 + $0x878] sm:$0xff]
                %325 = vst [vmem:[%s165 + $0x278] sm:$0xff] %v324
                %v326 = vld [vmem:[%s164 + $0x880] sm:$0xff]
                %327 = vst [vmem:[%s165 + $0x280] sm:$0xff] %v326
                %v328 = vld [vmem:[%s164 + $0x888] sm:$0xff]
                %329 = vst [vmem:[%s165 + $0x288] sm:$0xff] %v328
                %v330 = vld [vmem:[%s164 + $0x890] sm:$0xff]
                %331 = vst [vmem:[%s165 + $0x290] sm:$0xff] %v330
                %v332 = vld [vmem:[%s164 + $0x898] sm:$0xff]
                %333 = vst [vmem:[%s165 + $0x298] sm:$0xff] %v332
                %v334 = vld [vmem:[%s164 + $0x8a0] sm:$0xff]
                %335 = vst [vmem:[%s165 + $0x2a0] sm:$0xff] %v334
                %v336 = vld [vmem:[%s164 + $0x8a8] sm:$0xff]
                %337 = vst [vmem:[%s165 + $0x2a8] sm:$0xff] %v336
                %v338 = vld [vmem:[%s164 + $0x8b0] sm:$0xff]
                %339 = vst [vmem:[%s165 + $0x2b0] sm:$0xff] %v338
                %v340 = vld [vmem:[%s164 + $0x8b8] sm:$0xff]
                %341 = vst [vmem:[%s165 + $0x2b8] sm:$0xff] %v340
                %v342 = vld [vmem:[%s164 + $0x8c0] sm:$0xff]
                %343 = vst [vmem:[%s165 + $0x2c0] sm:$0xff] %v342
                %v344 = vld [vmem:[%s164 + $0x8c8] sm:$0xff]
                %345 = vst [vmem:[%s165 + $0x2c8] sm:$0xff] %v344
                %v346 = vld [vmem:[%s164 + $0x8d0] sm:$0xff]
                %347 = vst [vmem:[%s165 + $0x2d0] sm:$0xff] %v346
                %v348 = vld [vmem:[%s164 + $0x8d8] sm:$0xff]
                %349 = vst [vmem:[%s165 + $0x2d8] sm:$0xff] %v348
                %v350 = vld [vmem:[%s164 + $0x8e0] sm:$0xff]
                %351 = vst [vmem:[%s165 + $0x2e0] sm:$0xff] %v350
                %v352 = vld [vmem:[%s164 + $0x8e8] sm:$0xff]
                %353 = vst [vmem:[%s165 + $0x2e8] sm:$0xff] %v352
                %v354 = vld [vmem:[%s164 + $0x8f0] sm:$0xff]
                %355 = vst [vmem:[%s165 + $0x2f0] sm:$0xff] %v354
                %v356 = vld [vmem:[%s164 + $0x8f8] sm:$0xff]
                %357 = vst [vmem:[%s165 + $0x2f8] sm:$0xff] %v356
                %v358 = vld [vmem:[%s164 + $0x900] sm:$0xff]
                %359 = vst [vmem:[%s165 + $0x300] sm:$0xff] %v358
                %v360 = vld [vmem:[%s164 + $0x908] sm:$0xff]
                %361 = vst [vmem:[%s165 + $0x308] sm:$0xff] %v360
                %v362 = vld [vmem:[%s164 + $0x910] sm:$0xff]
                %363 = vst [vmem:[%s165 + $0x310] sm:$0xff] %v362
                %v364 = vld [vmem:[%s164 + $0x918] sm:$0xff]
                %365 = vst [vmem:[%s165 + $0x318] sm:$0xff] %v364
                %v366 = vld [vmem:[%s164 + $0x920] sm:$0xff]
                %367 = vst [vmem:[%s165 + $0x320] sm:$0xff] %v366
                %v368 = vld [vmem:[%s164 + $0x928] sm:$0xff]
                %369 = vst [vmem:[%s165 + $0x328] sm:$0xff] %v368
                %v370 = vld [vmem:[%s164 + $0x930] sm:$0xff]
                %371 = vst [vmem:[%s165 + $0x330] sm:$0xff] %v370
                %v372 = vld [vmem:[%s164 + $0x938] sm:$0xff]
                %373 = vst [vmem:[%s165 + $0x338] sm:$0xff] %v372
                %v374 = vld [vmem:[%s164 + $0x940] sm:$0xff]
                %375 = vst [vmem:[%s165 + $0x340] sm:$0xff] %v374
                %v376 = vld [vmem:[%s164 + $0x948] sm:$0xff]
                %377 = vst [vmem:[%s165 + $0x348] sm:$0xff] %v376
                %v378 = vld [vmem:[%s164 + $0x950] sm:$0xff]
                %379 = vst [vmem:[%s165 + $0x350] sm:$0xff] %v378
                %v380 = vld [vmem:[%s164 + $0x958] sm:$0xff]
                %381 = vst [vmem:[%s165 + $0x358] sm:$0xff] %v380
                %v382 = vld [vmem:[%s164 + $0x960] sm:$0xff]
                %383 = vst [vmem:[%s165 + $0x360] sm:$0xff] %v382
                %v384 = vld [vmem:[%s164 + $0x968] sm:$0xff]
                %385 = vst [vmem:[%s165 + $0x368] sm:$0xff] %v384
                %v386 = vld [vmem:[%s164 + $0x970] sm:$0xff]
                %387 = vst [vmem:[%s165 + $0x370] sm:$0xff] %v386
                %v388 = vld [vmem:[%s164 + $0x978] sm:$0xff]
                %389 = vst [vmem:[%s165 + $0x378] sm:$0xff] %v388
                %v390 = vld [vmem:[%s164 + $0x980] sm:$0xff]
                %391 = vst [vmem:[%s165 + $0x380] sm:$0xff] %v390
                %v392 = vld [vmem:[%s164 + $0x988] sm:$0xff]
                %393 = vst [vmem:[%s165 + $0x388] sm:$0xff] %v392
                %v394 = vld [vmem:[%s164 + $0x990] sm:$0xff]
                %395 = vst [vmem:[%s165 + $0x390] sm:$0xff] %v394
                %v396 = vld [vmem:[%s164 + $0x998] sm:$0xff]
                %397 = vst [vmem:[%s165 + $0x398] sm:$0xff] %v396
                %v398 = vld [vmem:[%s164 + $0x9a0] sm:$0xff]
                %399 = vst [vmem:[%s165 + $0x3a0] sm:$0xff] %v398
                %v400 = vld [vmem:[%s164 + $0x9a8] sm:$0xff]
                %401 = vst [vmem:[%s165 + $0x3a8] sm:$0xff] %v400
                %v402 = vld [vmem:[%s164 + $0x9b0] sm:$0xff]
                %403 = vst [vmem:[%s165 + $0x3b0] sm:$0xff] %v402
                %v404 = vld [vmem:[%s164 + $0x9b8] sm:$0xff]
                %405 = vst [vmem:[%s165 + $0x3b8] sm:$0xff] %v404
                %v406 = vld [vmem:[%s164 + $0x9c0] sm:$0xff]
                %407 = vst [vmem:[%s165 + $0x3c0] sm:$0xff] %v406
                %v408 = vld [vmem:[%s164 + $0x9c8] sm:$0xff]
                %409 = vst [vmem:[%s165 + $0x3c8] sm:$0xff] %v408
                %v410 = vld [vmem:[%s164 + $0x9d0] sm:$0xff]
                %411 = vst [vmem:[%s165 + $0x3d0] sm:$0xff] %v410
                %v412 = vld [vmem:[%s164 + $0x9d8] sm:$0xff]
                %413 = vst [vmem:[%s165 + $0x3d8] sm:$0xff] %v412
                %v414 = vld [vmem:[%s164 + $0x9e0] sm:$0xff]
                %415 = vst [vmem:[%s165 + $0x3e0] sm:$0xff] %v414
                %v416 = vld [vmem:[%s164 + $0x9e8] sm:$0xff]
                %417 = vst [vmem:[%s165 + $0x3e8] sm:$0xff] %v416
                %v418 = vld [vmem:[%s164 + $0x9f0] sm:$0xff]
                %419 = vst [vmem:[%s165 + $0x3f0] sm:$0xff] %v418
                %v420 = vld [vmem:[%s164 + $0x9f8] sm:$0xff]
                %421 = vst [vmem:[%s165 + $0x3f8] sm:$0xff] %v420
              $region45: #{_lambda_.4} parent=39 // loop_footer
                %s163 = sadd.s32 1, %s159
              $region46: #{_lambda_.4} parent=39 // loop_footer_branch
                %158 = sbr.rel target = $region42
              $region47: #{_lambda_.4} parent=39 // loop_exit
                _
            $region40: #{_lambda_.4} parent=31 // pred_fallthru
              _
          $region32: #{_lambda_.4} parent=27 // pred_fallthru
            _
          %690 = vnop
        $region28: #{_lambda_.4} parent=19 // pred_fallthru
          _
      $region20: #{_lambda_.4} parent=5 // pred_fallthru
        _
      %p691 = scmp.le.s32.totalorder 1, %s9
      %p692 = scmp.lt.s32.totalorder %s9, 5
      %p693 = pnand %p691, %p692
      %p694 = pneg %p693
      // Predicated region
      $region63: #{_lambda_.4} parent=5 // pred_check
        _
      $region64: #{_lambda_.4} parent=5 // pred_check_branch
        %696 = sbr.rel (%p693) target = $region66
      $region65: #{_lambda_.4} parent=5 // pred_region
        %s697 = ssub.s32 %s9, 1
        %s698 = sand.u32 %s48, 1
        %s699 = sand.u32 %s48, 1
        %s700 = smul.addr %s699, 1024
        %s701 = scalar_lea.vmem [#allocation2], %s700
        // Predicated region
        $region67: #{_lambda_.4} parent=65 // pred_check
          %p702 = pneg %p61
        $region68: #{_lambda_.4} parent=65 // pred_check_branch
          %704 = sbr.rel (%p702) target = $region70
        $region69: #{_lambda_.4} parent=65 // pred_region
          _
        $region70: #{_lambda_.4} parent=65 // pred_fallthru
          _
        %s705 = smul.u32 2, %s14
        %p706 = scmp.lt.s32.totalorder %s705, 7
        %s707 = scalar_select %p706, %s705, 7
        %s708 = smul.addr %s707, 4
        %s709 = smul.addr %s708, 8
        %s710 = scalar_lea.vmem %s0, %s709
        %p711 = pneg %p35
        %p712 = pneg %p32
        %s713 = sand.u32 %s48, 1
        %s714 = sand.u32 %s48, 1
        %s715 = smul.addr %s714, 1024
        %s716 = scalar_lea.vmem [#allocation2], %s715
        %p717 = pneg %p61
        %p718 = pneg %p58
        %p719 = pneg %p82
        %p720 = pneg %p79
        %p721 = pneg %p108
        %p722 = pneg %p105
        %s723 = smul.u32 2, %s14
        %p724 = scmp.lt.s32.totalorder %s723, 7
        %s725 = scalar_select %p724, %s723, 7
        %s726 = smul.addr %s725, 4
        %s727 = smul.addr %s726, 8
        %s728 = scalar_lea.vmem %s3, %s727
        %s729 = smul.u32 2, %s14
        %p730 = scmp.lt.s32.totalorder %s729, 7
        %s731 = scalar_select %p730, %s729, 7
        %s732 = smul.addr %s731, 4
        %s733 = smul.addr %s732, 8
        %s734 = scalar_lea.vmem %s0, %s733
        %s735 = smul.u32 2, %s14
        %s736 = smul.u32 2, %s14
        %s737 = smul.u32 2, %s14
        %p738 = scmp.lt.s32.totalorder %s737, 7
        %s739 = scalar_select %p738, %s737, 7
        %s740 = smul.addr %s739, 4
        %s741 = smul.addr %s740, 8
        %s742 = scalar_lea.vmem %s3, %s741
        %s743 = smul.u32 2, %s14
        %v744 = vld [vmem:[%s2] sm:$0xff]
        %v745 = vld [vmem:[%s2 + $0x8] sm:$0xff]
        %v746 = vld [vmem:[%s2 + $0x10] sm:$0xff]
        %v747 = vld [vmem:[%s2 + $0x18] sm:$0xff]
        %v748 = vld [vmem:[%s734] sm:$0xff]
        %v749 = vld [vmem:[%s734 + $0x8] sm:$0xff]
        %v750 = vld [vmem:[%s734 + $0x10] sm:$0xff]
        %v751 = vld [vmem:[%s734 + $0x18] sm:$0xff]
        %v752 = vld [vmem:[%s701] sm:$0xff]
        %v753 = vld [vmem:[%s701 + $0x8] sm:$0xff]
        %v754 = vld [vmem:[%s701 + $0x10] sm:$0xff]
        %v755 = vld [vmem:[%s701 + $0x18] sm:$0xff]
        %v756 = vld [vmem:[%s701 + $0x20] sm:$0xff]
        %v757 = vld [vmem:[%s701 + $0x28] sm:$0xff]
        %v758 = vld [vmem:[%s701 + $0x30] sm:$0xff]
        %v759 = vld [vmem:[%s701 + $0x38] sm:$0xff]
        %v760 = vld [vmem:[%s701 + $0x40] sm:$0xff]
        %v761 = vld [vmem:[%s701 + $0x48] sm:$0xff]
        %v762 = vld [vmem:[%s701 + $0x50] sm:$0xff]
        %v763 = vld [vmem:[%s701 + $0x58] sm:$0xff]
        %v764 = vld [vmem:[%s701 + $0x60] sm:$0xff]
        %v765 = vld [vmem:[%s701 + $0x68] sm:$0xff]
        %v766 = vld [vmem:[%s701 + $0x70] sm:$0xff]
        %v767 = vld [vmem:[%s701 + $0x78] sm:$0xff]
        %v768 = vld [vmem:[%s701 + $0x80] sm:$0xff]
        %v769 = vld [vmem:[%s701 + $0x88] sm:$0xff]
        %v770 = vld [vmem:[%s701 + $0x90] sm:$0xff]
        %v771 = vld [vmem:[%s701 + $0x98] sm:$0xff]
        %v772 = vld [vmem:[%s701 + $0xa0] sm:$0xff]
        %v773 = vld [vmem:[%s701 + $0xa8] sm:$0xff]
        %v774 = vld [vmem:[%s701 + $0xb0] sm:$0xff]
        %v775 = vld [vmem:[%s701 + $0xb8] sm:$0xff]
        %v776 = vld [vmem:[%s701 + $0xc0] sm:$0xff]
        %v777 = vld [vmem:[%s701 + $0xc8] sm:$0xff]
        %v778 = vld [vmem:[%s701 + $0xd0] sm:$0xff]
        %v779 = vld [vmem:[%s701 + $0xd8] sm:$0xff]
        %v780 = vld [vmem:[%s701 + $0xe0] sm:$0xff]
        %v781 = vld [vmem:[%s701 + $0xe8] sm:$0xff]
        %v782 = vld [vmem:[%s701 + $0xf0] sm:$0xff]
        %v783 = vld [vmem:[%s701 + $0xf8] sm:$0xff]
        %s784 = scalar_lea.vmem %s701, 512 [#allocation2]
        %v785 = vld [vmem:[%s784] sm:$0xff]
        %v786 = vld [vmem:[%s784 + $0x8] sm:$0xff]
        %v787 = vld [vmem:[%s784 + $0x10] sm:$0xff]
        %v788 = vld [vmem:[%s784 + $0x18] sm:$0xff]
        %v789 = vld [vmem:[%s784 + $0x20] sm:$0xff]
        %v790 = vld [vmem:[%s784 + $0x28] sm:$0xff]
        %v791 = vld [vmem:[%s784 + $0x30] sm:$0xff]
        %v792 = vld [vmem:[%s784 + $0x38] sm:$0xff]
        %v793 = vld [vmem:[%s784 + $0x40] sm:$0xff]
        %v794 = vld [vmem:[%s784 + $0x48] sm:$0xff]
        %v795 = vld [vmem:[%s784 + $0x50] sm:$0xff]
        %v796 = vld [vmem:[%s784 + $0x58] sm:$0xff]
        %v797 = vld [vmem:[%s784 + $0x60] sm:$0xff]
        %v798 = vld [vmem:[%s784 + $0x68] sm:$0xff]
        %v799 = vld [vmem:[%s784 + $0x70] sm:$0xff]
        %v800 = vld [vmem:[%s784 + $0x78] sm:$0xff]
        %v801 = vld [vmem:[%s784 + $0x80] sm:$0xff]
        %v802 = vld [vmem:[%s784 + $0x88] sm:$0xff]
        %v803 = vld [vmem:[%s784 + $0x90] sm:$0xff]
        %v804 = vld [vmem:[%s784 + $0x98] sm:$0xff]
        %v805 = vld [vmem:[%s784 + $0xa0] sm:$0xff]
        %v806 = vld [vmem:[%s784 + $0xa8] sm:$0xff]
        %v807 = vld [vmem:[%s784 + $0xb0] sm:$0xff]
        %v808 = vld [vmem:[%s784 + $0xb8] sm:$0xff]
        %v809 = vld [vmem:[%s784 + $0xc0] sm:$0xff]
        %v810 = vld [vmem:[%s784 + $0xc8] sm:$0xff]
        %v811 = vld [vmem:[%s784 + $0xd0] sm:$0xff]
        %v812 = vld [vmem:[%s784 + $0xd8] sm:$0xff]
        %v813 = vld [vmem:[%s784 + $0xe0] sm:$0xff]
        %v814 = vld [vmem:[%s784 + $0xe8] sm:$0xff]
        %v815 = vld [vmem:[%s784 + $0xf0] sm:$0xff]
        %v816 = vld [vmem:[%s784 + $0xf8] sm:$0xff]
        %vm817 = vcmask 64512
        %v819 = vsel %vm817, %v748, 0
        %v822 = vsel %vm817, %v749, 0
        %v825 = vsel %vm817, %v752, 0
        %v828 = vsel %vm817, %v753, 0
        %v831 = vsel %vm817, %v754, 0
        %v834 = vsel %vm817, %v755, 0
        %v837 = vsel %vm817, %v756, 0
        %v840 = vsel %vm817, %v757, 0
        %v843 = vsel %vm817, %v758, 0
        %v846 = vsel %vm817, %v759, 0
        %v849 = vsel %vm817, %v760, 0
        %v852 = vsel %vm817, %v761, 0
        %v855 = vsel %vm817, %v762, 0
        %v858 = vsel %vm817, %v763, 0
        %v861 = vsel %vm817, %v764, 0
        %v864 = vsel %vm817, %v765, 0
        %v867 = vsel %vm817, %v766, 0
        %v870 = vsel %vm817, %v767, 0
        %872 = vmatprep.subr.mxu0 0.0
        %873 = vmatpush1.xpose.msra.mxu0 %v825
        %874 = vmatprep.subr.mxu0 0.0
        %875 = vmatpush1.xpose.msra.mxu0 %v828
        %876 = vmatprep.subr.mxu0 0.0
        %877 = vmatpush1.xpose.msra.mxu0 %v831
        %878 = vmatprep.subr.mxu0 0.0
        %879 = vmatpush1.xpose.msra.mxu0 %v834
        %880 = vmatprep.subr.mxu0 0.0
        %881 = vmatpush1.xpose.msra.mxu0 %v837
        %882 = vmatprep.subr.mxu0 0.0
        %883 = vmatpush1.xpose.msra.mxu0 %v840
        %884 = vmatprep.subr.mxu0 0.0
        %885 = vmatpush1.xpose.msra.mxu0 %v843
        %886 = vmatprep.subr.mxu0 0.0
        %887 = vmatpush1.xpose.msra.mxu0 %v846
        %888 = vmatprep.subr.mxu0 0.0
        %889 = vmatpush1.xpose.msra.mxu0 %v849
        %890 = vmatprep.subr.mxu0 0.0
        %891 = vmatpush1.xpose.msra.mxu0 %v852
        %892 = vmatprep.subr.mxu0 0.0
        %893 = vmatpush1.xpose.msra.mxu0 %v855
        %894 = vmatprep.subr.mxu0 0.0
        %895 = vmatpush1.xpose.msra.mxu0 %v858
        %896 = vmatprep.subr.mxu0 0.0
        %897 = vmatpush1.xpose.msra.mxu0 %v861
        %898 = vmatprep.subr.mxu0 0.0
        %899 = vmatpush1.xpose.msra.mxu0 %v864
        %900 = vmatprep.subr.mxu0 0.0
        %901 = vmatpush1.xpose.msra.mxu0 %v867
        %902 = vmatprep.subr.mxu0 0.0
        %903 = vmatpush1.xpose.msra.mxu0 %v870
        %904 = vmatprep.subr.mxu0 0.0
        %905 = vmatpush1.xpose.msra.mxu0 0.0
        %906 = vmatprep.subr.mxu0 0.0
        %907 = vmatpush1.xpose.msra.mxu0 0.0
        %908 = vmatprep.subr.mxu0 0.0
        %909 = vmatpush1.xpose.msra.mxu0 0.0
        %910 = vmatprep.subr.mxu0 0.0
        %911 = vmatpush1.xpose.msra.mxu0 0.0
        %912 = vmatprep.subr.mxu0 0.0
        %913 = vmatpush1.xpose.msra.mxu0 0.0
        %914 = vmatprep.subr.mxu0 0.0
        %915 = vmatpush1.xpose.msra.mxu0 0.0
        %916 = vmatprep.subr.mxu0 0.0
        %917 = vmatpush1.xpose.msra.mxu0 0.0
        %918 = vmatprep.subr.mxu0 0.0
        %919 = vmatpush1.xpose.msra.mxu0 0.0
        %920 = vmatprep.subr.mxu0 0.0
        %921 = vmatpush1.xpose.msra.mxu0 0.0
        %922 = vmatprep.subr.mxu0 0.0
        %923 = vmatpush1.xpose.msra.mxu0 0.0
        %924 = vmatprep.subr.mxu0 0.0
        %925 = vmatpush1.xpose.msra.mxu0 0.0
        %926 = vmatprep.subr.mxu0 0.0
        %927 = vmatpush1.xpose.msra.mxu0 0.0
        %928 = vmatprep.subr.mxu0 0.0
        %929 = vmatpush1.xpose.msra.mxu0 0.0
        %930 = vmatprep.subr.mxu0 0.0
        %931 = vmatpush1.xpose.msra.mxu0 0.0
        %932 = vmatprep.subr.mxu0 0.0
        %933 = vmatpush1.xpose.msra.mxu0 0.0
        %934 = vmatprep.subr.mxu0 0.0
        %935 = vmatpush1.xpose.msra.mxu0 0.0
        %936 = vmatprep.mubr.f32.mxu0 0.0
        %937 = vmatmul.mubr.f32.gmra.mrb[0].mxu0 %v819
        %v938 = vpop.f32.mrb[0].mxu0
        %v939 = vadd.f32 0.0, %v938
        %v940 = vpop.f32.mrb[0].mxu0
        %941 = vmatprep.mubr.f32.mxu0 0.0
        %942 = vmatmul.mubr.f32.gmra.mrb[0].mxu0 %v822
        %v943 = vpop.f32.mrb[0].mxu0
        %v944 = vadd.f32 0.0, %v943
        %v945 = vpop.f32.mrb[0].mxu0
        %946 = vdwg.mxu0
        %v948 = vsel %vm817, %v750, 0
        %v951 = vsel %vm817, %v751, 0
        %v954 = vsel %vm817, %v768, 0
        %v957 = vsel %vm817, %v769, 0
        %v960 = vsel %vm817, %v770, 0
        %v963 = vsel %vm817, %v771, 0
        %v966 = vsel %vm817, %v772, 0
        %v969 = vsel %vm817, %v773, 0
        %v972 = vsel %vm817, %v774, 0
        %v975 = vsel %vm817, %v775, 0
        %v978 = vsel %vm817, %v776, 0
        %v981 = vsel %vm817, %v777, 0
        %v984 = vsel %vm817, %v778, 0
        %v987 = vsel %vm817, %v779, 0
        %v990 = vsel %vm817, %v780, 0
        %v993 = vsel %vm817, %v781, 0
        %v996 = vsel %vm817, %v782, 0
        %v999 = vsel %vm817, %v783, 0
        %1001 = vmatprep.subr.mxu0 0.0
        %1002 = vmatpush1.xpose.msra.mxu0 %v954
        %1003 = vmatprep.subr.mxu0 0.0
        %1004 = vmatpush1.xpose.msra.mxu0 %v957
        %1005 = vmatprep.subr.mxu0 0.0
        %1006 = vmatpush1.xpose.msra.mxu0 %v960
        %1007 = vmatprep.subr.mxu0 0.0
        %1008 = vmatpush1.xpose.msra.mxu0 %v963
        %1009 = vmatprep.subr.mxu0 0.0
        %1010 = vmatpush1.xpose.msra.mxu0 %v966
        %1011 = vmatprep.subr.mxu0 0.0
        %1012 = vmatpush1.xpose.msra.mxu0 %v969
        %1013 = vmatprep.subr.mxu0 0.0
        %1014 = vmatpush1.xpose.msra.mxu0 %v972
        %1015 = vmatprep.subr.mxu0 0.0
        %1016 = vmatpush1.xpose.msra.mxu0 %v975
        %1017 = vmatprep.subr.mxu0 0.0
        %1018 = vmatpush1.xpose.msra.mxu0 %v978
        %1019 = vmatprep.subr.mxu0 0.0
        %1020 = vmatpush1.xpose.msra.mxu0 %v981
        %1021 = vmatprep.subr.mxu0 0.0
        %1022 = vmatpush1.xpose.msra.mxu0 %v984
        %1023 = vmatprep.subr.mxu0 0.0
        %1024 = vmatpush1.xpose.msra.mxu0 %v987
        %1025 = vmatprep.subr.mxu0 0.0
        %1026 = vmatpush1.xpose.msra.mxu0 %v990
        %1027 = vmatprep.subr.mxu0 0.0
        %1028 = vmatpush1.xpose.msra.mxu0 %v993
        %1029 = vmatprep.subr.mxu0 0.0
        %1030 = vmatpush1.xpose.msra.mxu0 %v996
        %1031 = vmatprep.subr.mxu0 0.0
        %1032 = vmatpush1.xpose.msra.mxu0 %v999
        %1033 = vmatprep.subr.mxu0 0.0
        %1034 = vmatpush1.xpose.msra.mxu0 0.0
        %1035 = vmatprep.subr.mxu0 0.0
        %1036 = vmatpush1.xpose.msra.mxu0 0.0
        %1037 = vmatprep.subr.mxu0 0.0
        %1038 = vmatpush1.xpose.msra.mxu0 0.0
        %1039 = vmatprep.subr.mxu0 0.0
        %1040 = vmatpush1.xpose.msra.mxu0 0.0
        %1041 = vmatprep.subr.mxu0 0.0
        %1042 = vmatpush1.xpose.msra.mxu0 0.0
        %1043 = vmatprep.subr.mxu0 0.0
        %1044 = vmatpush1.xpose.msra.mxu0 0.0
        %1045 = vmatprep.subr.mxu0 0.0
        %1046 = vmatpush1.xpose.msra.mxu0 0.0
        %1047 = vmatprep.subr.mxu0 0.0
        %1048 = vmatpush1.xpose.msra.mxu0 0.0
        %1049 = vmatprep.subr.mxu0 0.0
        %1050 = vmatpush1.xpose.msra.mxu0 0.0
        %1051 = vmatprep.subr.mxu0 0.0
        %1052 = vmatpush1.xpose.msra.mxu0 0.0
        %1053 = vmatprep.subr.mxu0 0.0
        %1054 = vmatpush1.xpose.msra.mxu0 0.0
        %1055 = vmatprep.subr.mxu0 0.0
        %1056 = vmatpush1.xpose.msra.mxu0 0.0
        %1057 = vmatprep.subr.mxu0 0.0
        %1058 = vmatpush1.xpose.msra.mxu0 0.0
        %1059 = vmatprep.subr.mxu0 0.0
        %1060 = vmatpush1.xpose.msra.mxu0 0.0
        %1061 = vmatprep.subr.mxu0 0.0
        %1062 = vmatpush1.xpose.msra.mxu0 0.0
        %1063 = vmatprep.subr.mxu0 0.0
        %1064 = vmatpush1.xpose.msra.mxu0 0.0
        %1065 = vmatprep.mubr.f32.mxu0 0.0
        %1066 = vmatmul.mubr.f32.gmra.mrb[0].mxu0 %v948
        %v1067 = vpop.f32.mrb[0].mxu0
        %v1068 = vadd.f32 0.0, %v1067
        %v1069 = vpop.f32.mrb[0].mxu0
        %1070 = vmatprep.mubr.f32.mxu0 0.0
        %1071 = vmatmul.mubr.f32.gmra.mrb[0].mxu0 %v951
        %v1072 = vpop.f32.mrb[0].mxu0
        %v1073 = vadd.f32 0.0, %v1072
        %v1074 = vpop.f32.mrb[0].mxu0
        %1075 = vdwg.mxu0
        %v1076 = vmul.f32 %v939, 0.35355338
        %v1077 = vmul.f32 %v944, 0.35355338
        %v1078 = vmul.f32 %v1068, 0.35355338
        %v1079 = vmul.f32 %v1073, 0.35355338
        %v1080 = vadd.f32 %v1076, %v744
        %v1081 = vadd.f32 %v1077, %v745
        %v1082 = vadd.f32 %v1078, %v746
        %v1083 = vadd.f32 %v1079, %v747
        %1084 = vmax.xlane.f32.xlu0 %v1080
        %v1085 = vpop.xlane.xlu0 %1084
        %1086 = vmax.xlane.f32.xlu0 %v1081
        %v1087 = vpop.xlane.xlu0 %1086
        %1088 = vmax.xlane.f32.xlu0 %v1082
        %v1089 = vpop.xlane.xlu0 %1088
        %1090 = vmax.xlane.f32.xlu0 %v1083
        %v1091 = vpop.xlane.xlu0 %1090
        %v1092 = vsub.f32 %v1080, %v1085
        %v1093 = vsub.f32 %v1081, %v1087
        %v1094 = vsub.f32 %v1082, %v1089
        %v1095 = vsub.f32 %v1083, %v1091
        %v1096 = vmul.f32 %v1092, 1.442695
        %v1097 = vpow.pop %v1096
        %v1098 = vmul.f32 %v1093, 1.442695
        %v1099 = vpow.pop %v1098
        %v1100 = vmul.f32 %v1094, 1.442695
        %v1101 = vpow.pop %v1100
        %v1102 = vmul.f32 %v1095, 1.442695
        %v1103 = vpow.pop %v1102
        %1104 = vadd.xlane.f32.xlu0 %v1097
        %v1105 = vpop.xlane.xlu0 %1104
        %1106 = vadd.xlane.f32.xlu0 %v1099
        %v1107 = vpop.xlane.xlu0 %1106
        %1108 = vadd.xlane.f32.xlu0 %v1101
        %v1109 = vpop.xlane.xlu0 %1108
        %1110 = vadd.xlane.f32.xlu0 %v1103
        %v1111 = vpop.xlane.xlu0 %1110
        %v1112 = vrcp.pop %v1105
        %v1113 = vrcp.pop %v1107
        %v1114 = vrcp.pop %v1109
        %v1115 = vrcp.pop %v1111
        %v1116 = vmul.f32 %v1097, %v1112
        %v1117 = vmul.f32 %v1099, %v1113
        %v1118 = vmul.f32 %v1101, %v1114
        %v1119 = vmul.f32 %v1103, %v1115
        %1120 = vmatprep.subr.mxu0 0.0
        %1121 = vmatpush1.msra.mxu0 %v785
        %1122 = vmatprep.subr.mxu0 0.0
        %1123 = vmatpush1.msra.mxu0 %v786
        %1124 = vmatprep.subr.mxu0 0.0
        %1125 = vmatpush1.msra.mxu0 %v787
        %1126 = vmatprep.subr.mxu0 0.0
        %1127 = vmatpush1.msra.mxu0 %v788
        %1128 = vmatprep.subr.mxu0 0.0
        %1129 = vmatpush1.msra.mxu0 %v789
        %1130 = vmatprep.subr.mxu0 0.0
        %1131 = vmatpush1.msra.mxu0 %v790
        %1132 = vmatprep.subr.mxu0 0.0
        %1133 = vmatpush1.msra.mxu0 %v791
        %1134 = vmatprep.subr.mxu0 0.0
        %1135 = vmatpush1.msra.mxu0 %v792
        %1136 = vmatprep.subr.mxu0 0.0
        %1137 = vmatpush1.msra.mxu0 %v793
        %1138 = vmatprep.subr.mxu0 0.0
        %1139 = vmatpush1.msra.mxu0 %v794
        %1140 = vmatprep.subr.mxu0 0.0
        %1141 = vmatpush1.msra.mxu0 %v795
        %1142 = vmatprep.subr.mxu0 0.0
        %1143 = vmatpush1.msra.mxu0 %v796
        %1144 = vmatprep.subr.mxu0 0.0
        %1145 = vmatpush1.msra.mxu0 %v797
        %1146 = vmatprep.subr.mxu0 0.0
        %1147 = vmatpush1.msra.mxu0 %v798
        %1148 = vmatprep.subr.mxu0 0.0
        %1149 = vmatpush1.msra.mxu0 %v799
        %1150 = vmatprep.subr.mxu0 0.0
        %1151 = vmatpush1.msra.mxu0 %v800
        %1152 = vmatprep.subr.mxu0 0.0
        %1153 = vmatpush1.msra.mxu0 0.0
        %1154 = vmatprep.subr.mxu0 0.0
        %1155 = vmatpush1.msra.mxu0 0.0
        %1156 = vmatprep.subr.mxu0 0.0
        %1157 = vmatpush1.msra.mxu0 0.0
        %1158 = vmatprep.subr.mxu0 0.0
        %1159 = vmatpush1.msra.mxu0 0.0
        %1160 = vmatprep.subr.mxu0 0.0
        %1161 = vmatpush1.msra.mxu0 0.0
        %1162 = vmatprep.subr.mxu0 0.0
        %1163 = vmatpush1.msra.mxu0 0.0
        %1164 = vmatprep.subr.mxu0 0.0
        %1165 = vmatpush1.msra.mxu0 0.0
        %1166 = vmatprep.subr.mxu0 0.0
        %1167 = vmatpush1.msra.mxu0 0.0
        %1168 = vmatprep.subr.mxu0 0.0
        %1169 = vmatpush1.msra.mxu0 0.0
        %1170 = vmatprep.subr.mxu0 0.0
        %1171 = vmatpush1.msra.mxu0 0.0
        %1172 = vmatprep.subr.mxu0 0.0
        %1173 = vmatpush1.msra.mxu0 0.0
        %1174 = vmatprep.subr.mxu0 0.0
        %1175 = vmatpush1.msra.mxu0 0.0
        %1176 = vmatprep.subr.mxu0 0.0
        %1177 = vmatpush1.msra.mxu0 0.0
        %1178 = vmatprep.subr.mxu0 0.0
        %1179 = vmatpush1.msra.mxu0 0.0
        %1180 = vmatprep.subr.mxu0 0.0
        %1181 = vmatpush1.msra.mxu0 0.0
        %1182 = vmatprep.subr.mxu0 0.0
        %1183 = vmatpush1.msra.mxu0 0.0
        %1184 = vmatprep.mubr.f32.mxu0 0.0
        %1185 = vmatmul.mubr.f32.gmra.mrb[0].mxu0 %v1116
        %v1186 = vpop.f32.mrb[0].mxu0
        %v1187 = vadd.f32 0.0, %v1186
        %v1188 = vpop.f32.mrb[0].mxu0
        %1189 = vmatprep.mubr.f32.mxu0 0.0
        %1190 = vmatmul.mubr.f32.gmra.mrb[0].mxu0 %v1117
        %v1191 = vpop.f32.mrb[0].mxu0
        %v1192 = vadd.f32 0.0, %v1191
        %v1193 = vpop.f32.mrb[0].mxu0
        %1194 = vdwg.mxu0
        %1195 = vmatprep.subr.mxu0 0.0
        %1196 = vmatpush1.msra.mxu0 %v801
        %1197 = vmatprep.subr.mxu0 0.0
        %1198 = vmatpush1.msra.mxu0 %v802
        %1199 = vmatprep.subr.mxu0 0.0
        %1200 = vmatpush1.msra.mxu0 %v803
        %1201 = vmatprep.subr.mxu0 0.0
        %1202 = vmatpush1.msra.mxu0 %v804
        %1203 = vmatprep.subr.mxu0 0.0
        %1204 = vmatpush1.msra.mxu0 %v805
        %1205 = vmatprep.subr.mxu0 0.0
        %1206 = vmatpush1.msra.mxu0 %v806
        %1207 = vmatprep.subr.mxu0 0.0
        %1208 = vmatpush1.msra.mxu0 %v807
        %1209 = vmatprep.subr.mxu0 0.0
        %1210 = vmatpush1.msra.mxu0 %v808
        %1211 = vmatprep.subr.mxu0 0.0
        %1212 = vmatpush1.msra.mxu0 %v809
        %1213 = vmatprep.subr.mxu0 0.0
        %1214 = vmatpush1.msra.mxu0 %v810
        %1215 = vmatprep.subr.mxu0 0.0
        %1216 = vmatpush1.msra.mxu0 %v811
        %1217 = vmatprep.subr.mxu0 0.0
        %1218 = vmatpush1.msra.mxu0 %v812
        %1219 = vmatprep.subr.mxu0 0.0
        %1220 = vmatpush1.msra.mxu0 %v813
        %1221 = vmatprep.subr.mxu0 0.0
        %1222 = vmatpush1.msra.mxu0 %v814
        %1223 = vmatprep.subr.mxu0 0.0
        %1224 = vmatpush1.msra.mxu0 %v815
        %1225 = vmatprep.subr.mxu0 0.0
        %1226 = vmatpush1.msra.mxu0 %v816
        %1227 = vmatprep.subr.mxu0 0.0
        %1228 = vmatpush1.msra.mxu0 0.0
        %1229 = vmatprep.subr.mxu0 0.0
        %1230 = vmatpush1.msra.mxu0 0.0
        %1231 = vmatprep.subr.mxu0 0.0
        %1232 = vmatpush1.msra.mxu0 0.0
        %1233 = vmatprep.subr.mxu0 0.0
        %1234 = vmatpush1.msra.mxu0 0.0
        %1235 = vmatprep.subr.mxu0 0.0
        %1236 = vmatpush1.msra.mxu0 0.0
        %1237 = vmatprep.subr.mxu0 0.0
        %1238 = vmatpush1.msra.mxu0 0.0
        %1239 = vmatprep.subr.mxu0 0.0
        %1240 = vmatpush1.msra.mxu0 0.0
        %1241 = vmatprep.subr.mxu0 0.0
        %1242 = vmatpush1.msra.mxu0 0.0
        %1243 = vmatprep.subr.mxu0 0.0
        %1244 = vmatpush1.msra.mxu0 0.0
        %1245 = vmatprep.subr.mxu0 0.0
        %1246 = vmatpush1.msra.mxu0 0.0
        %1247 = vmatprep.subr.mxu0 0.0
        %1248 = vmatpush1.msra.mxu0 0.0
        %1249 = vmatprep.subr.mxu0 0.0
        %1250 = vmatpush1.msra.mxu0 0.0
        %1251 = vmatprep.subr.mxu0 0.0
        %1252 = vmatpush1.msra.mxu0 0.0
        %1253 = vmatprep.subr.mxu0 0.0
        %1254 = vmatpush1.msra.mxu0 0.0
        %1255 = vmatprep.subr.mxu0 0.0
        %1256 = vmatpush1.msra.mxu0 0.0
        %1257 = vmatprep.subr.mxu0 0.0
        %1258 = vmatpush1.msra.mxu0 0.0
        %1259 = vmatprep.mubr.f32.mxu0 0.0
        %1260 = vmatmul.mubr.f32.gmra.mrb[0].mxu0 %v1118
        %v1261 = vpop.f32.mrb[0].mxu0
        %v1262 = vadd.f32 0.0, %v1261
        %v1263 = vpop.f32.mrb[0].mxu0
        %1264 = vmatprep.mubr.f32.mxu0 0.0
        %1265 = vmatmul.mubr.f32.gmra.mrb[0].mxu0 %v1119
        %v1266 = vpop.f32.mrb[0].mxu0
        %v1267 = vadd.f32 0.0, %v1266
        %v1268 = vpop.f32.mrb[0].mxu0
        %1269 = vdwg.mxu0
        %1270 = vst.msk [vmem:[%s742] sm:$0xff] %vm817, %v1187
        %1271 = vst.msk [vmem:[%s742 + $0x8] sm:$0xff] %vm817, %v1192
        %1272 = vst.msk [vmem:[%s742 + $0x10] sm:$0xff] %vm817, %v1262
        %1273 = vst.msk [vmem:[%s742 + $0x18] sm:$0xff] %vm817, %v1267
        %s1274 = scalar_lea.vmem %s734, 32
        %v1275 = vld [vmem:[%s1274] sm:$0xff]
        %v1276 = vld [vmem:[%s1274 + $0x8] sm:$0xff]
        %v1277 = vld [vmem:[%s1274 + $0x10] sm:$0xff]
        %v1278 = vld [vmem:[%s1274 + $0x18] sm:$0xff]
        %s1279 = scalar_lea.vmem %s701, 256 [#allocation2]
        %v1280 = vld [vmem:[%s1279] sm:$0xff]
        %v1281 = vld [vmem:[%s1279 + $0x8] sm:$0xff]
        %v1282 = vld [vmem:[%s1279 + $0x10] sm:$0xff]
        %v1283 = vld [vmem:[%s1279 + $0x18] sm:$0xff]
        %v1284 = vld [vmem:[%s1279 + $0x20] sm:$0xff]
        %v1285 = vld [vmem:[%s1279 + $0x28] sm:$0xff]
        %v1286 = vld [vmem:[%s1279 + $0x30] sm:$0xff]
        %v1287 = vld [vmem:[%s1279 + $0x38] sm:$0xff]
        %v1288 = vld [vmem:[%s1279 + $0x40] sm:$0xff]
        %v1289 = vld [vmem:[%s1279 + $0x48] sm:$0xff]
        %v1290 = vld [vmem:[%s1279 + $0x50] sm:$0xff]
        %v1291 = vld [vmem:[%s1279 + $0x58] sm:$0xff]
        %v1292 = vld [vmem:[%s1279 + $0x60] sm:$0xff]
        %v1293 = vld [vmem:[%s1279 + $0x68] sm:$0xff]
        %v1294 = vld [vmem:[%s1279 + $0x70] sm:$0xff]
        %v1295 = vld [vmem:[%s1279 + $0x78] sm:$0xff]
        %v1296 = vld [vmem:[%s1279 + $0x80] sm:$0xff]
        %v1297 = vld [vmem:[%s1279 + $0x88] sm:$0xff]
        %v1298 = vld [vmem:[%s1279 + $0x90] sm:$0xff]
        %v1299 = vld [vmem:[%s1279 + $0x98] sm:$0xff]
        %v1300 = vld [vmem:[%s1279 + $0xa0] sm:$0xff]
        %v1301 = vld [vmem:[%s1279 + $0xa8] sm:$0xff]
        %v1302 = vld [vmem:[%s1279 + $0xb0] sm:$0xff]
        %v1303 = vld [vmem:[%s1279 + $0xb8] sm:$0xff]
        %v1304 = vld [vmem:[%s1279 + $0xc0] sm:$0xff]
        %v1305 = vld [vmem:[%s1279 + $0xc8] sm:$0xff]
        %v1306 = vld [vmem:[%s1279 + $0xd0] sm:$0xff]
        %v1307 = vld [vmem:[%s1279 + $0xd8] sm:$0xff]
        %v1308 = vld [vmem:[%s1279 + $0xe0] sm:$0xff]
        %v1309 = vld [vmem:[%s1279 + $0xe8] sm:$0xff]
        %v1310 = vld [vmem:[%s1279 + $0xf0] sm:$0xff]
        %v1311 = vld [vmem:[%s1279 + $0xf8] sm:$0xff]
        %s1312 = scalar_lea.vmem %s701, 768 [#allocation2]
        %v1313 = vld [vmem:[%s1312] sm:$0xff]
        %v1314 = vld [vmem:[%s1312 + $0x8] sm:$0xff]
        %v1315 = vld [vmem:[%s1312 + $0x10] sm:$0xff]
        %v1316 = vld [vmem:[%s1312 + $0x18] sm:$0xff]
        %v1317 = vld [vmem:[%s1312 + $0x20] sm:$0xff]
        %v1318 = vld [vmem:[%s1312 + $0x28] sm:$0xff]
        %v1319 = vld [vmem:[%s1312 + $0x30] sm:$0xff]
        %v1320 = vld [vmem:[%s1312 + $0x38] sm:$0xff]
        %v1321 = vld [vmem:[%s1312 + $0x40] sm:$0xff]
        %v1322 = vld [vmem:[%s1312 + $0x48] sm:$0xff]
        %v1323 = vld [vmem:[%s1312 + $0x50] sm:$0xff]
        %v1324 = vld [vmem:[%s1312 + $0x58] sm:$0xff]
        %v1325 = vld [vmem:[%s1312 + $0x60] sm:$0xff]
        %v1326 = vld [vmem:[%s1312 + $0x68] sm:$0xff]
        %v1327 = vld [vmem:[%s1312 + $0x70] sm:$0xff]
        %v1328 = vld [vmem:[%s1312 + $0x78] sm:$0xff]
        %v1329 = vld [vmem:[%s1312 + $0x80] sm:$0xff]
        %v1330 = vld [vmem:[%s1312 + $0x88] sm:$0xff]
        %v1331 = vld [vmem:[%s1312 + $0x90] sm:$0xff]
        %v1332 = vld [vmem:[%s1312 + $0x98] sm:$0xff]
        %v1333 = vld [vmem:[%s1312 + $0xa0] sm:$0xff]
        %v1334 = vld [vmem:[%s1312 + $0xa8] sm:$0xff]
        %v1335 = vld [vmem:[%s1312 + $0xb0] sm:$0xff]
        %v1336 = vld [vmem:[%s1312 + $0xb8] sm:$0xff]
        %v1337 = vld [vmem:[%s1312 + $0xc0] sm:$0xff]
        %v1338 = vld [vmem:[%s1312 + $0xc8] sm:$0xff]
        %v1339 = vld [vmem:[%s1312 + $0xd0] sm:$0xff]
        %v1340 = vld [vmem:[%s1312 + $0xd8] sm:$0xff]
        %v1341 = vld [vmem:[%s1312 + $0xe0] sm:$0xff]
        %v1342 = vld [vmem:[%s1312 + $0xe8] sm:$0xff]
        %v1343 = vld [vmem:[%s1312 + $0xf0] sm:$0xff]
        %v1344 = vld [vmem:[%s1312 + $0xf8] sm:$0xff]
        %v1346 = vsel %vm817, %v1275, 0
        %v1349 = vsel %vm817, %v1276, 0
        %v1352 = vsel %vm817, %v1280, 0
        %v1355 = vsel %vm817, %v1281, 0
        %v1358 = vsel %vm817, %v1282, 0
        %v1361 = vsel %vm817, %v1283, 0
        %v1364 = vsel %vm817, %v1284, 0
        %v1367 = vsel %vm817, %v1285, 0
        %v1370 = vsel %vm817, %v1286, 0
        %v1373 = vsel %vm817, %v1287, 0
        %v1376 = vsel %vm817, %v1288, 0
        %v1379 = vsel %vm817, %v1289, 0
        %v1382 = vsel %vm817, %v1290, 0
        %v1385 = vsel %vm817, %v1291, 0
        %v1388 = vsel %vm817, %v1292, 0
        %v1391 = vsel %vm817, %v1293, 0
        %v1394 = vsel %vm817, %v1294, 0
        %v1397 = vsel %vm817, %v1295, 0
        %1399 = vmatprep.subr.mxu0 0.0
        %1400 = vmatpush1.xpose.msra.mxu0 %v1352
        %1401 = vmatprep.subr.mxu0 0.0
        %1402 = vmatpush1.xpose.msra.mxu0 %v1355
        %1403 = vmatprep.subr.mxu0 0.0
        %1404 = vmatpush1.xpose.msra.mxu0 %v1358
        %1405 = vmatprep.subr.mxu0 0.0
        %1406 = vmatpush1.xpose.msra.mxu0 %v1361
        %1407 = vmatprep.subr.mxu0 0.0
        %1408 = vmatpush1.xpose.msra.mxu0 %v1364
        %1409 = vmatprep.subr.mxu0 0.0
        %1410 = vmatpush1.xpose.msra.mxu0 %v1367
        %1411 = vmatprep.subr.mxu0 0.0
        %1412 = vmatpush1.xpose.msra.mxu0 %v1370
        %1413 = vmatprep.subr.mxu0 0.0
        %1414 = vmatpush1.xpose.msra.mxu0 %v1373
        %1415 = vmatprep.subr.mxu0 0.0
        %1416 = vmatpush1.xpose.msra.mxu0 %v1376
        %1417 = vmatprep.subr.mxu0 0.0
        %1418 = vmatpush1.xpose.msra.mxu0 %v1379
        %1419 = vmatprep.subr.mxu0 0.0
        %1420 = vmatpush1.xpose.msra.mxu0 %v1382
        %1421 = vmatprep.subr.mxu0 0.0
        %1422 = vmatpush1.xpose.msra.mxu0 %v1385
        %1423 = vmatprep.subr.mxu0 0.0
        %1424 = vmatpush1.xpose.msra.mxu0 %v1388
        %1425 = vmatprep.subr.mxu0 0.0
        %1426 = vmatpush1.xpose.msra.mxu0 %v1391
        %1427 = vmatprep.subr.mxu0 0.0
        %1428 = vmatpush1.xpose.msra.mxu0 %v1394
        %1429 = vmatprep.subr.mxu0 0.0
        %1430 = vmatpush1.xpose.msra.mxu0 %v1397
        %1431 = vmatprep.subr.mxu0 0.0
        %1432 = vmatpush1.xpose.msra.mxu0 0.0
        %1433 = vmatprep.subr.mxu0 0.0
        %1434 = vmatpush1.xpose.msra.mxu0 0.0
        %1435 = vmatprep.subr.mxu0 0.0
        %1436 = vmatpush1.xpose.msra.mxu0 0.0
        %1437 = vmatprep.subr.mxu0 0.0
        %1438 = vmatpush1.xpose.msra.mxu0 0.0
        %1439 = vmatprep.subr.mxu0 0.0
        %1440 = vmatpush1.xpose.msra.mxu0 0.0
        %1441 = vmatprep.subr.mxu0 0.0
        %1442 = vmatpush1.xpose.msra.mxu0 0.0
        %1443 = vmatprep.subr.mxu0 0.0
        %1444 = vmatpush1.xpose.msra.mxu0 0.0
        %1445 = vmatprep.subr.mxu0 0.0
        %1446 = vmatpush1.xpose.msra.mxu0 0.0
        %1447 = vmatprep.subr.mxu0 0.0
        %1448 = vmatpush1.xpose.msra.mxu0 0.0
        %1449 = vmatprep.subr.mxu0 0.0
        %1450 = vmatpush1.xpose.msra.mxu0 0.0
        %1451 = vmatprep.subr.mxu0 0.0
        %1452 = vmatpush1.xpose.msra.mxu0 0.0
        %1453 = vmatprep.subr.mxu0 0.0
        %1454 = vmatpush1.xpose.msra.mxu0 0.0
        %1455 = vmatprep.subr.mxu0 0.0
        %1456 = vmatpush1.xpose.msra.mxu0 0.0
        %1457 = vmatprep.subr.mxu0 0.0
        %1458 = vmatpush1.xpose.msra.mxu0 0.0
        %1459 = vmatprep.subr.mxu0 0.0
        %1460 = vmatpush1.xpose.msra.mxu0 0.0
        %1461 = vmatprep.subr.mxu0 0.0
        %1462 = vmatpush1.xpose.msra.mxu0 0.0
        %1463 = vmatprep.mubr.f32.mxu0 0.0
        %1464 = vmatmul.mubr.f32.gmra.mrb[0].mxu0 %v1346
        %v1465 = vpop.f32.mrb[0].mxu0
        %v1466 = vadd.f32 0.0, %v1465
        %v1467 = vpop.f32.mrb[0].mxu0
        %1468 = vmatprep.mubr.f32.mxu0 0.0
        %1469 = vmatmul.mubr.f32.gmra.mrb[0].mxu0 %v1349
        %v1470 = vpop.f32.mrb[0].mxu0
        %v1471 = vadd.f32 0.0, %v1470
        %v1472 = vpop.f32.mrb[0].mxu0
        %1473 = vdwg.mxu0
        %v1475 = vsel %vm817, %v1277, 0
        %v1478 = vsel %vm817, %v1278, 0
        %v1481 = vsel %vm817, %v1296, 0
        %v1484 = vsel %vm817, %v1297, 0
        %v1487 = vsel %vm817, %v1298, 0
        %v1490 = vsel %vm817, %v1299, 0
        %v1493 = vsel %vm817, %v1300, 0
        %v1496 = vsel %vm817, %v1301, 0
        %v1499 = vsel %vm817, %v1302, 0
        %v1502 = vsel %vm817, %v1303, 0
        %v1505 = vsel %vm817, %v1304, 0
        %v1508 = vsel %vm817, %v1305, 0
        %v1511 = vsel %vm817, %v1306, 0
        %v1514 = vsel %vm817, %v1307, 0
        %v1517 = vsel %vm817, %v1308, 0
        %v1520 = vsel %vm817, %v1309, 0
        %v1523 = vsel %vm817, %v1310, 0
        %v1526 = vsel %vm817, %v1311, 0
        %1528 = vmatprep.subr.mxu0 0.0
        %1529 = vmatpush1.xpose.msra.mxu0 %v1481
        %1530 = vmatprep.subr.mxu0 0.0
        %1531 = vmatpush1.xpose.msra.mxu0 %v1484
        %1532 = vmatprep.subr.mxu0 0.0
        %1533 = vmatpush1.xpose.msra.mxu0 %v1487
        %1534 = vmatprep.subr.mxu0 0.0
        %1535 = vmatpush1.xpose.msra.mxu0 %v1490
        %1536 = vmatprep.subr.mxu0 0.0
        %1537 = vmatpush1.xpose.msra.mxu0 %v1493
        %1538 = vmatprep.subr.mxu0 0.0
        %1539 = vmatpush1.xpose.msra.mxu0 %v1496
        %1540 = vmatprep.subr.mxu0 0.0
        %1541 = vmatpush1.xpose.msra.mxu0 %v1499
        %1542 = vmatprep.subr.mxu0 0.0
        %1543 = vmatpush1.xpose.msra.mxu0 %v1502
        %1544 = vmatprep.subr.mxu0 0.0
        %1545 = vmatpush1.xpose.msra.mxu0 %v1505
        %1546 = vmatprep.subr.mxu0 0.0
        %1547 = vmatpush1.xpose.msra.mxu0 %v1508
        %1548 = vmatprep.subr.mxu0 0.0
        %1549 = vmatpush1.xpose.msra.mxu0 %v1511
        %1550 = vmatprep.subr.mxu0 0.0
        %1551 = vmatpush1.xpose.msra.mxu0 %v1514
        %1552 = vmatprep.subr.mxu0 0.0
        %1553 = vmatpush1.xpose.msra.mxu0 %v1517
        %1554 = vmatprep.subr.mxu0 0.0
        %1555 = vmatpush1.xpose.msra.mxu0 %v1520
        %1556 = vmatprep.subr.mxu0 0.0
        %1557 = vmatpush1.xpose.msra.mxu0 %v1523
        %1558 = vmatprep.subr.mxu0 0.0
        %1559 = vmatpush1.xpose.msra.mxu0 %v1526
        %1560 = vmatprep.subr.mxu0 0.0
        %1561 = vmatpush1.xpose.msra.mxu0 0.0
        %1562 = vmatprep.subr.mxu0 0.0
        %1563 = vmatpush1.xpose.msra.mxu0 0.0
        %1564 = vmatprep.subr.mxu0 0.0
        %1565 = vmatpush1.xpose.msra.mxu0 0.0
        %1566 = vmatprep.subr.mxu0 0.0
        %1567 = vmatpush1.xpose.msra.mxu0 0.0
        %1568 = vmatprep.subr.mxu0 0.0
        %1569 = vmatpush1.xpose.msra.mxu0 0.0
        %1570 = vmatprep.subr.mxu0 0.0
        %1571 = vmatpush1.xpose.msra.mxu0 0.0
        %1572 = vmatprep.subr.mxu0 0.0
        %1573 = vmatpush1.xpose.msra.mxu0 0.0
        %1574 = vmatprep.subr.mxu0 0.0
        %1575 = vmatpush1.xpose.msra.mxu0 0.0
        %1576 = vmatprep.subr.mxu0 0.0
        %1577 = vmatpush1.xpose.msra.mxu0 0.0
        %1578 = vmatprep.subr.mxu0 0.0
        %1579 = vmatpush1.xpose.msra.mxu0 0.0
        %1580 = vmatprep.subr.mxu0 0.0
        %1581 = vmatpush1.xpose.msra.mxu0 0.0
        %1582 = vmatprep.subr.mxu0 0.0
        %1583 = vmatpush1.xpose.msra.mxu0 0.0
        %1584 = vmatprep.subr.mxu0 0.0
        %1585 = vmatpush1.xpose.msra.mxu0 0.0
        %1586 = vmatprep.subr.mxu0 0.0
        %1587 = vmatpush1.xpose.msra.mxu0 0.0
        %1588 = vmatprep.subr.mxu0 0.0
        %1589 = vmatpush1.xpose.msra.mxu0 0.0
        %1590 = vmatprep.subr.mxu0 0.0
        %1591 = vmatpush1.xpose.msra.mxu0 0.0
        %1592 = vmatprep.mubr.f32.mxu0 0.0
        %1593 = vmatmul.mubr.f32.gmra.mrb[0].mxu0 %v1475
        %v1594 = vpop.f32.mrb[0].mxu0
        %v1595 = vadd.f32 0.0, %v1594
        %v1596 = vpop.f32.mrb[0].mxu0
        %1597 = vmatprep.mubr.f32.mxu0 0.0
        %1598 = vmatmul.mubr.f32.gmra.mrb[0].mxu0 %v1478
        %v1599 = vpop.f32.mrb[0].mxu0
        %v1600 = vadd.f32 0.0, %v1599
        %v1601 = vpop.f32.mrb[0].mxu0
        %1602 = vdwg.mxu0
        %v1603 = vmul.f32 %v1466, 0.35355338
        %v1604 = vmul.f32 %v1471, 0.35355338
        %v1605 = vmul.f32 %v1595, 0.35355338
        %v1606 = vmul.f32 %v1600, 0.35355338
        %v1607 = vadd.f32 %v1603, %v744
        %v1608 = vadd.f32 %v1604, %v745
        %v1609 = vadd.f32 %v1605, %v746
        %v1610 = vadd.f32 %v1606, %v747
        %1611 = vmax.xlane.f32.xlu0 %v1607
        %v1612 = vpop.xlane.xlu0 %1611
        %1613 = vmax.xlane.f32.xlu0 %v1608
        %v1614 = vpop.xlane.xlu0 %1613
        %1615 = vmax.xlane.f32.xlu0 %v1609
        %v1616 = vpop.xlane.xlu0 %1615
        %1617 = vmax.xlane.f32.xlu0 %v1610
        %v1618 = vpop.xlane.xlu0 %1617
        %v1619 = vsub.f32 %v1607, %v1612
        %v1620 = vsub.f32 %v1608, %v1614
        %v1621 = vsub.f32 %v1609, %v1616
        %v1622 = vsub.f32 %v1610, %v1618
        %v1623 = vmul.f32 %v1619, 1.442695
        %v1624 = vpow.pop %v1623
        %v1625 = vmul.f32 %v1620, 1.442695
        %v1626 = vpow.pop %v1625
        %v1627 = vmul.f32 %v1621, 1.442695
        %v1628 = vpow.pop %v1627
        %v1629 = vmul.f32 %v1622, 1.442695
        %v1630 = vpow.pop %v1629
        %1631 = vadd.xlane.f32.xlu0 %v1624
        %v1632 = vpop.xlane.xlu0 %1631
        %1633 = vadd.xlane.f32.xlu0 %v1626
        %v1634 = vpop.xlane.xlu0 %1633
        %1635 = vadd.xlane.f32.xlu0 %v1628
        %v1636 = vpop.xlane.xlu0 %1635
        %1637 = vadd.xlane.f32.xlu0 %v1630
        %v1638 = vpop.xlane.xlu0 %1637
        %v1639 = vrcp.pop %v1632
        %v1640 = vrcp.pop %v1634
        %v1641 = vrcp.pop %v1636
        %v1642 = vrcp.pop %v1638
        %v1643 = vmul.f32 %v1624, %v1639
        %v1644 = vmul.f32 %v1626, %v1640
        %v1645 = vmul.f32 %v1628, %v1641
        %v1646 = vmul.f32 %v1630, %v1642
        %1647 = vmatprep.subr.mxu0 0.0
        %1648 = vmatpush1.msra.mxu0 %v1313
        %1649 = vmatprep.subr.mxu0 0.0
        %1650 = vmatpush1.msra.mxu0 %v1314
        %1651 = vmatprep.subr.mxu0 0.0
        %1652 = vmatpush1.msra.mxu0 %v1315
        %1653 = vmatprep.subr.mxu0 0.0
        %1654 = vmatpush1.msra.mxu0 %v1316
        %1655 = vmatprep.subr.mxu0 0.0
        %1656 = vmatpush1.msra.mxu0 %v1317
        %1657 = vmatprep.subr.mxu0 0.0
        %1658 = vmatpush1.msra.mxu0 %v1318
        %1659 = vmatprep.subr.mxu0 0.0
        %1660 = vmatpush1.msra.mxu0 %v1319
        %1661 = vmatprep.subr.mxu0 0.0
        %1662 = vmatpush1.msra.mxu0 %v1320
        %1663 = vmatprep.subr.mxu0 0.0
        %1664 = vmatpush1.msra.mxu0 %v1321
        %1665 = vmatprep.subr.mxu0 0.0
        %1666 = vmatpush1.msra.mxu0 %v1322
        %1667 = vmatprep.subr.mxu0 0.0
        %1668 = vmatpush1.msra.mxu0 %v1323
        %1669 = vmatprep.subr.mxu0 0.0
        %1670 = vmatpush1.msra.mxu0 %v1324
        %1671 = vmatprep.subr.mxu0 0.0
        %1672 = vmatpush1.msra.mxu0 %v1325
        %1673 = vmatprep.subr.mxu0 0.0
        %1674 = vmatpush1.msra.mxu0 %v1326
        %1675 = vmatprep.subr.mxu0 0.0
        %1676 = vmatpush1.msra.mxu0 %v1327
        %1677 = vmatprep.subr.mxu0 0.0
        %1678 = vmatpush1.msra.mxu0 %v1328
        %1679 = vmatprep.subr.mxu0 0.0
        %1680 = vmatpush1.msra.mxu0 0.0
        %1681 = vmatprep.subr.mxu0 0.0
        %1682 = vmatpush1.msra.mxu0 0.0
        %1683 = vmatprep.subr.mxu0 0.0
        %1684 = vmatpush1.msra.mxu0 0.0
        %1685 = vmatprep.subr.mxu0 0.0
        %1686 = vmatpush1.msra.mxu0 0.0
        %1687 = vmatprep.subr.mxu0 0.0
        %1688 = vmatpush1.msra.mxu0 0.0
        %1689 = vmatprep.subr.mxu0 0.0
        %1690 = vmatpush1.msra.mxu0 0.0
        %1691 = vmatprep.subr.mxu0 0.0
        %1692 = vmatpush1.msra.mxu0 0.0
        %1693 = vmatprep.subr.mxu0 0.0
        %1694 = vmatpush1.msra.mxu0 0.0
        %1695 = vmatprep.subr.mxu0 0.0
        %1696 = vmatpush1.msra.mxu0 0.0
        %1697 = vmatprep.subr.mxu0 0.0
        %1698 = vmatpush1.msra.mxu0 0.0
        %1699 = vmatprep.subr.mxu0 0.0
        %1700 = vmatpush1.msra.mxu0 0.0
        %1701 = vmatprep.subr.mxu0 0.0
        %1702 = vmatpush1.msra.mxu0 0.0
        %1703 = vmatprep.subr.mxu0 0.0
        %1704 = vmatpush1.msra.mxu0 0.0
        %1705 = vmatprep.subr.mxu0 0.0
        %1706 = vmatpush1.msra.mxu0 0.0
        %1707 = vmatprep.subr.mxu0 0.0
        %1708 = vmatpush1.msra.mxu0 0.0
        %1709 = vmatprep.subr.mxu0 0.0
        %1710 = vmatpush1.msra.mxu0 0.0
        %1711 = vmatprep.mubr.f32.mxu0 0.0
        %1712 = vmatmul.mubr.f32.gmra.mrb[0].mxu0 %v1643
        %v1713 = vpop.f32.mrb[0].mxu0
        %v1714 = vadd.f32 0.0, %v1713
        %v1715 = vpop.f32.mrb[0].mxu0
        %1716 = vmatprep.mubr.f32.mxu0 0.0
        %1717 = vmatmul.mubr.f32.gmra.mrb[0].mxu0 %v1644
        %v1718 = vpop.f32.mrb[0].mxu0
        %v1719 = vadd.f32 0.0, %v1718
        %v1720 = vpop.f32.mrb[0].mxu0
        %1721 = vdwg.mxu0
        %1722 = vmatprep.subr.mxu0 0.0
        %1723 = vmatpush1.msra.mxu0 %v1329
        %1724 = vmatprep.subr.mxu0 0.0
        %1725 = vmatpush1.msra.mxu0 %v1330
        %1726 = vmatprep.subr.mxu0 0.0
        %1727 = vmatpush1.msra.mxu0 %v1331
        %1728 = vmatprep.subr.mxu0 0.0
        %1729 = vmatpush1.msra.mxu0 %v1332
        %1730 = vmatprep.subr.mxu0 0.0
        %1731 = vmatpush1.msra.mxu0 %v1333
        %1732 = vmatprep.subr.mxu0 0.0
        %1733 = vmatpush1.msra.mxu0 %v1334
        %1734 = vmatprep.subr.mxu0 0.0
        %1735 = vmatpush1.msra.mxu0 %v1335
        %1736 = vmatprep.subr.mxu0 0.0
        %1737 = vmatpush1.msra.mxu0 %v1336
        %1738 = vmatprep.subr.mxu0 0.0
        %1739 = vmatpush1.msra.mxu0 %v1337
        %1740 = vmatprep.subr.mxu0 0.0
        %1741 = vmatpush1.msra.mxu0 %v1338
        %1742 = vmatprep.subr.mxu0 0.0
        %1743 = vmatpush1.msra.mxu0 %v1339
        %1744 = vmatprep.subr.mxu0 0.0
        %1745 = vmatpush1.msra.mxu0 %v1340
        %1746 = vmatprep.subr.mxu0 0.0
        %1747 = vmatpush1.msra.mxu0 %v1341
        %1748 = vmatprep.subr.mxu0 0.0
        %1749 = vmatpush1.msra.mxu0 %v1342
        %1750 = vmatprep.subr.mxu0 0.0
        %1751 = vmatpush1.msra.mxu0 %v1343
        %1752 = vmatprep.subr.mxu0 0.0
        %1753 = vmatpush1.msra.mxu0 %v1344
        %1754 = vmatprep.subr.mxu0 0.0
        %1755 = vmatpush1.msra.mxu0 0.0
        %1756 = vmatprep.subr.mxu0 0.0
        %1757 = vmatpush1.msra.mxu0 0.0
        %1758 = vmatprep.subr.mxu0 0.0
        %1759 = vmatpush1.msra.mxu0 0.0
        %1760 = vmatprep.subr.mxu0 0.0
        %1761 = vmatpush1.msra.mxu0 0.0
        %1762 = vmatprep.subr.mxu0 0.0
        %1763 = vmatpush1.msra.mxu0 0.0
        %1764 = vmatprep.subr.mxu0 0.0
        %1765 = vmatpush1.msra.mxu0 0.0
        %1766 = vmatprep.subr.mxu0 0.0
        %1767 = vmatpush1.msra.mxu0 0.0
        %1768 = vmatprep.subr.mxu0 0.0
        %1769 = vmatpush1.msra.mxu0 0.0
        %1770 = vmatprep.subr.mxu0 0.0
        %1771 = vmatpush1.msra.mxu0 0.0
        %1772 = vmatprep.subr.mxu0 0.0
        %1773 = vmatpush1.msra.mxu0 0.0
        %1774 = vmatprep.subr.mxu0 0.0
        %1775 = vmatpush1.msra.mxu0 0.0
        %1776 = vmatprep.subr.mxu0 0.0
        %1777 = vmatpush1.msra.mxu0 0.0
        %1778 = vmatprep.subr.mxu0 0.0
        %1779 = vmatpush1.msra.mxu0 0.0
        %1780 = vmatprep.subr.mxu0 0.0
        %1781 = vmatpush1.msra.mxu0 0.0
        %1782 = vmatprep.subr.mxu0 0.0
        %1783 = vmatpush1.msra.mxu0 0.0
        %1784 = vmatprep.subr.mxu0 0.0
        %1785 = vmatpush1.msra.mxu0 0.0
        %1786 = vmatprep.mubr.f32.mxu0 0.0
        %1787 = vmatmul.mubr.f32.gmra.mrb[0].mxu0 %v1645
        %v1788 = vpop.f32.mrb[0].mxu0
        %v1789 = vadd.f32 0.0, %v1788
        %v1790 = vpop.f32.mrb[0].mxu0
        %1791 = vmatprep.mubr.f32.mxu0 0.0
        %1792 = vmatmul.mubr.f32.gmra.mrb[0].mxu0 %v1646
        %v1793 = vpop.f32.mrb[0].mxu0
        %v1794 = vadd.f32 0.0, %v1793
        %v1795 = vpop.f32.mrb[0].mxu0
        %1796 = vdwg.mxu0
        %s1797 = scalar_lea.vmem %s742, 32
        %1798 = vst.msk [vmem:[%s1797] sm:$0xff] %vm817, %v1714
        %1799 = vst.msk [vmem:[%s1797 + $0x8] sm:$0xff] %vm817, %v1719
        %1800 = vst.msk [vmem:[%s1797 + $0x10] sm:$0xff] %vm817, %v1789
        %1801 = vst.msk [vmem:[%s1797 + $0x18] sm:$0xff] %vm817, %v1794
        %s1802 = smul.u32 2, %s14
        %p1803 = scmp.lt.s32.totalorder %s1802, 7
        %s1804 = scalar_select %p1803, %s1802, 7
        %s1805 = smul.addr %s1804, 4
        %s1806 = smul.addr %s1805, 8
        %s1807 = scalar_lea.vmem %s3, %s1806
        // Predicated region
        $region71: #{_lambda_.4} parent=65 // pred_check
          %p1808 = pneg %p105
        $region72: #{_lambda_.4} parent=65 // pred_check_branch
          %1810 = sbr.rel (%p1808) target = $region74
        $region73: #{_lambda_.4} parent=65 // pred_region
          %s1811 = smul.u32 2, %s14
        $region74: #{_lambda_.4} parent=65 // pred_fallthru
          _
      $region66: #{_lambda_.4} parent=5 // pred_fallthru
        _
      %p1812 = scmp.le.s32.totalorder 2, %s9
      // Predicated region
      $region75: #{_lambda_.4} parent=5 // pred_check
        %p1813 = pneg %p1812
      $region76: #{_lambda_.4} parent=5 // pred_check_branch
        %1815 = sbr.rel (%p1813) target = $region78
      $region77: #{_lambda_.4} parent=5 // pred_region
        %s1816 = ssub.s32 %s9, 2
        // Predicated region
        $region79: #{_lambda_.4} parent=77 // pred_check
          %p1817 = pneg %p111
        $region80: #{_lambda_.4} parent=77 // pred_check_branch
          %1819 = sbr.rel (%p1817) target = $region82
        $region81: #{_lambda_.4} parent=77 // pred_region
          %s1820 = smul.u32 2, %s15
          %p1821 = scmp.lt.s32.totalorder %s1820, 7
          %s1822 = scalar_select %p1821, %s1820, 7
          %s1823 = smul.addr %s1822, 4
          %s1824 = smul.addr %s1823, 8
          %s1825 = scalar_lea.vmem %s3, %s1824
        $region82: #{_lambda_.4} parent=77 // pred_fallthru
          _
      $region78: #{_lambda_.4} parent=5 // pred_fallthru
        _
    $region6: #{_lambda_.4} parent=1 // loop_footer
      %s13 = sadd.s32 1, %s9
    $region7: #{_lambda_.4} parent=1 // loop_footer_branch
      %8 = sbr.rel target = $region3
    $region8: #{_lambda_.4} parent=1 // loop_exit
      _

</llo_original>
